<compile_context>
chip_gen: v7x
topology: tpu7x:2x2x1
jax: 0.10.0
libtpu: 0.0.40
codegen_flags: <defaults>
</compile_context>

<pallas_src>
import math
from functools import partial

import jax
import jax.numpy as jnp
from jax import lax
from jax.experimental import pallas as pl
from jax.experimental.pallas import tpu as pltpu


# ----------------------------------------------------------------------------
# helpers
# ----------------------------------------------------------------------------

def _round_up(x, m):
    return (x + m - 1) // m * m


def _ln(x, g, b, eps=1e-5):
    # LayerNorm statistics in f32 (older VPU/EUP have no native bf16 math).
    mu = jnp.mean(x, axis=-1, keepdims=True)
    var = jnp.mean(jnp.square(x - mu), axis=-1, keepdims=True)
    return (x - mu) * lax.rsqrt(var + eps) * g + b


def _bf16(x):
    return x.astype(jnp.bfloat16)


# Megacore sharding over the (parallel) batch grid axis; modest scoped-VMEM
# limit (all weights resident is ~1 MiB at this config, well under it).
_CP = pltpu.CompilerParams(
    dimension_semantics=("parallel",),
    vmem_limit_bytes=48 * 1024 * 1024,
)


def _const_spec(shape):
    # Resident operand: same (zero) block for every grid step -> DMA'd once.
    nd = len(shape)
    return pl.BlockSpec(shape, lambda *_: (0,) * nd)


# ----------------------------------------------------------------------------
# The fused ViT kernel (one batch element per grid step)
# ----------------------------------------------------------------------------

def vit_kernel(depth, num_heads,
               p_ref,                                   # (1, N, C*P*P) f32
               wp_ref, bp_ref,                          # (C*P*P, E) bf16, (1, E)
               pe_ref,                                  # (T, E) f32
               ln1g_ref, ln1b_ref,                      # (depth, 1, E)
               wqkv_ref, bqkv_ref,                      # (depth, E, 3E), (depth, 1, 3E)
               wproj_ref, bproj_ref,                    # (depth, E, E),  (depth, 1, E)
               ln2g_ref, ln2b_ref,                      # (depth, 1, E)
               w1_ref, b1_ref,                          # (depth, E, F),  (depth, 1, F)
               w2_ref, b2_ref,                          # (depth, F, E),  (depth, 1, E)
               lnfg_ref, lnfb_ref,                      # (1, E)
               wfc_ref, bfc_ref,                        # (E, NCp) bf16, (1, NCp)
               o_ref):                                  # (1, 1, NCp) f32
    # --- patch embedding + cls-token prepend ---
    p = p_ref[0]                                        # (N, C*P*P)
    emb = (jnp.dot(_bf16(p), wp_ref[...], preferred_element_type=jnp.float32)
           + bp_ref[...])                               # (N, E)
    E = emb.shape[-1]
    x = jnp.concatenate([jnp.zeros((1, E), jnp.float32), emb], axis=0)  # (T, E)
    T = x.shape[0]

    hd = E // num_heads
    scale = 1.0 / math.sqrt(hd)
    pe = pe_ref[...]                                    # (T, E)

    # Additive causal mask built in-kernel (cheap VPU work, no HBM operand).
    row = lax.broadcasted_iota(jnp.int32, (T, T), 0)
    col = lax.broadcasted_iota(jnp.int32, (T, T), 1)
    bias = jnp.where(col <= row, 0.0, -1e30).astype(jnp.float32)

    # --- encoder layers, residual stream stays in registers/VMEM ---
    for l in range(depth):
        # LN1 + fused qkv projection
        xn = _ln(x, ln1g_ref[l], ln1b_ref[l])
        qkv = (jnp.dot(_bf16(xn), wqkv_ref[l],
                       preferred_element_type=jnp.float32) + bqkv_ref[l])
        q = qkv[:, 0:E] + pe        # per-MHA sinusoidal pe added to q and k
        k = qkv[:, E:2 * E] + pe
        v = qkv[:, 2 * E:3 * E]

        # causal attention, static unroll over heads
        # TODO(synk): pack multiple heads per score matmul so the MXU
        #             contraction dim reaches 128 when head_dim is small.
        y_heads = []
        for h in range(num_heads):
            sl = slice(h * hd, (h + 1) * hd)
            qh, kh, vh = _bf16(q[:, sl]), _bf16(k[:, sl]), _bf16(v[:, sl])
            s = lax.dot_general(qh, kh, (((1,), (1,)), ((), ())),
                                preferred_element_type=jnp.float32) * scale + bias
            m = jnp.max(s, axis=-1, keepdims=True)
            pr = jnp.exp(s - m)
            pr = pr * pl.reciprocal(jnp.sum(pr, axis=-1, keepdims=True),
                                    approx=True)
            y_heads.append(jnp.dot(_bf16(pr), vh,
                                   preferred_element_type=jnp.float32))
        y = jnp.concatenate(y_heads, axis=-1)           # (T, E), heads re-fused

        # output projection + residual
        x = x + (jnp.dot(_bf16(y), wproj_ref[l],
                         preferred_element_type=jnp.float32) + bproj_ref[l])

        # LN2 + MLP + residual
        sn = _ln(x, ln2g_ref[l], ln2b_ref[l])
        h1 = jnp.maximum(
            jnp.dot(_bf16(sn), w1_ref[l], preferred_element_type=jnp.float32)
            + b1_ref[l], 0.0)
        x = x + (jnp.dot(_bf16(h1), w2_ref[l],
                         preferred_element_type=jnp.float32) + b2_ref[l])

    # --- final LayerNorm + classifier on the cls token only ---
    cls = x[0:1, :]                                     # (1, E)
    cn = _ln(cls, lnfg_ref[...], lnfb_ref[...])
    o_ref[0] = (jnp.dot(_bf16(cn), wfc_ref[...],
                        preferred_element_type=jnp.float32) + bfc_ref[...])


# ----------------------------------------------------------------------------
# Parameters & positional encoding
# ----------------------------------------------------------------------------

def init_params(key, *, patch_size, in_channels, embed_dim, depth,
                mlp_ratio, num_classes):
    F = int(embed_dim * mlp_ratio)
    E = embed_dim
    nc_pad = _round_up(num_classes, 128)
    keys = jax.random.split(key, 2 + depth * 4)
    ki = iter(keys)

    def w(k, shape, scale=0.02):
        # MXU matmul weights stored in bf16 (f32 accumulation inside kernel).
        return (scale * jax.random.normal(k, shape, dtype=jnp.float32)
                ).astype(jnp.bfloat16)

    w_fc = jnp.zeros((E, nc_pad), jnp.bfloat16)
    w_fc = w_fc.at[:, :num_classes].set(w(next(ki), (E, num_classes)))

    def stack(fn):
        return jnp.stack([fn(d) for d in range(depth)], axis=0)

    wqkv_keys = [next(ki) for _ in range(depth)]
    wproj_keys = [next(ki) for _ in range(depth)]
    w1_keys = [next(ki) for _ in range(depth)]
    w2_keys = [next(ki) for _ in range(depth)]

    params = {
        # Conv2d(in_channels, E, k=p, s=p) reshaped to (C*P*P, E)
        "w_patch": w(next(ki), (in_channels * patch_size * patch_size, E)),
        "b_patch": jnp.zeros((1, E), jnp.float32),
        # per-layer params stacked along a leading depth axis (VMEM resident)
        "ln1_g": jnp.ones((depth, 1, E), jnp.float32),
        "ln1_b": jnp.zeros((depth, 1, E), jnp.float32),
        "w_qkv": stack(lambda d: w(wqkv_keys[d], (E, 3 * E))),
        "b_qkv": jnp.zeros((depth, 1, 3 * E), jnp.float32),
        "w_proj": stack(lambda d: w(wproj_keys[d], (E, E))),
        "b_proj": jnp.zeros((depth, 1, E), jnp.float32),
        "ln2_g": jnp.ones((depth, 1, E), jnp.float32),
        "ln2_b": jnp.zeros((depth, 1, E), jnp.float32),
        "w1": stack(lambda d: w(w1_keys[d], (E, F))),
        "b1": jnp.zeros((depth, 1, F), jnp.float32),
        "w2": stack(lambda d: w(w2_keys[d], (F, E))),
        "b2": jnp.zeros((depth, 1, E), jnp.float32),
        # head
        "ln_f_g": jnp.ones((1, E), jnp.float32),
        "ln_f_b": jnp.zeros((1, E), jnp.float32),
        "w_fc": w_fc,                                   # lane-padded classifier
        "b_fc": jnp.zeros((1, nc_pad), jnp.float32),
    }
    return params


def sinusoidal_pos_enc(T, E):
    # pe[:T] from the MultiHeadAttention module.  In flat (T, E) layout the
    # view(T,H,hd).permute(1,0,2) per-head add is element-identical to adding
    # pe[:T] directly to the (T, H*hd) q/k slabs.
    position = jnp.arange(T, dtype=jnp.float32)[:, None]
    div_term = jnp.exp(jnp.arange(0, E, 2, dtype=jnp.float32)
                       * (-math.log(10000.0) / E))
    pe = jnp.zeros((T, E), jnp.float32)
    pe = pe.at[:, 0::2].set(jnp.sin(position * div_term))
    pe = pe.at[:, 1::2].set(jnp.cos(position * div_term))
    return pe


# ----------------------------------------------------------------------------
# Forward pass (single fused pallas_call)
# ----------------------------------------------------------------------------

@partial(jax.jit, static_argnames=("patch_size", "num_heads", "num_classes"))
def vit_forward(params, x, *, patch_size, num_heads, num_classes):
    B, C, H, W = x.shape
    P = patch_size
    nH, nW = H // P, W // P
    N = nH * nW
    E = params["w_patch"].shape[1]
    T = N + 1
    depth = params["w_qkv"].shape[0]
    nc_pad = params["w_fc"].shape[1]

    # TODO(synk): the 6-D patch-extraction transpose stays in XLA (one pass over
    # the small image); it is not expressible as a rectangular BlockSpec window.
    patches = (x.reshape(B, C, nH, P, nW, P)
               .transpose(0, 2, 4, 1, 3, 5)
               .reshape(B, N, C * P * P))

    # Module-level PositionalEncoding is constructed but never applied in the
    # reference forward; only the per-MHA sinusoidal pe (added to q, k) is used.
    pe = sinusoidal_pos_enc(T, E)

    consts = (params["w_patch"], params["b_patch"], pe,
              params["ln1_g"], params["ln1_b"],
              params["w_qkv"], params["b_qkv"],
              params["w_proj"], params["b_proj"],
              params["ln2_g"], params["ln2_b"],
              params["w1"], params["b1"], params["w2"], params["b2"],
              params["ln_f_g"], params["ln_f_b"],
              params["w_fc"], params["b_fc"])

    in_specs = [pl.BlockSpec((1, N, C * P * P), lambda i: (i, 0, 0))]
    in_specs += [_const_spec(c.shape) for c in consts]

    logits = pl.pallas_call(
        partial(vit_kernel, depth, num_heads),
        grid=(B,),
        in_specs=in_specs,
        out_specs=pl.BlockSpec((1, 1, nc_pad), lambda i: (i, 0, 0)),
        out_shape=jax.ShapeDtypeStruct((B, 1, nc_pad), jnp.float32),
        compiler_params=_CP,
    )(patches, *consts)

    return logits[:, 0, :num_classes]


# ----------------------------------------------------------------------------
# Main
# ----------------------------------------------------------------------------

if __name__ == "__main__":
    # Small config consistent with the module's structure.  embed_dim=128 keeps
    # every matmul operand / output lane-dense (128-wide lane axis).
    IMG, PATCH, CIN = 16, 8, 4
    EMBED, DEPTH, HEADS = 128, 2, 4
    MLP_RATIO, CLASSES = 4.0, 10
    BATCH = 2

    key = jax.random.PRNGKey(0)
    pkey, xkey = jax.random.split(key)

    params = init_params(
        pkey, patch_size=PATCH, in_channels=CIN, embed_dim=EMBED,
        depth=DEPTH, mlp_ratio=MLP_RATIO, num_classes=CLASSES,
    )
    x = jax.random.normal(xkey, (BATCH, CIN, IMG, IMG), dtype=jnp.float32)

    logits = vit_forward(params, x, patch_size=PATCH, num_heads=HEADS,
                         num_classes=CLASSES)
    logits = jax.block_until_ready(logits)
    assert logits.shape == (BATCH, CLASSES)
    assert bool(jnp.all(jnp.isfinite(logits)))
    print("KERNEL_OK")
</pallas_src>

<mosaic_0001>
module attributes {stable_mosaic.version = 11 : i64} {
  func.func @vit_kernel(%arg0: i32, %arg1: memref<1x4x256xf32, #tpu.memory_space<vmem>>, %arg2: memref<256x128xbf16, #tpu.memory_space<vmem>>, %arg3: memref<1x128xf32, #tpu.memory_space<vmem>>, %arg4: memref<5x128xf32, #tpu.memory_space<vmem>>, %arg5: memref<2x1x128xf32, #tpu.memory_space<vmem>>, %arg6: memref<2x1x128xf32, #tpu.memory_space<vmem>>, %arg7: memref<2x128x384xbf16, #tpu.memory_space<vmem>>, %arg8: memref<2x1x384xf32, #tpu.memory_space<vmem>>, %arg9: memref<2x128x128xbf16, #tpu.memory_space<vmem>>, %arg10: memref<2x1x128xf32, #tpu.memory_space<vmem>>, %arg11: memref<2x1x128xf32, #tpu.memory_space<vmem>>, %arg12: memref<2x1x128xf32, #tpu.memory_space<vmem>>, %arg13: memref<2x128x512xbf16, #tpu.memory_space<vmem>>, %arg14: memref<2x1x512xf32, #tpu.memory_space<vmem>>, %arg15: memref<2x512x128xbf16, #tpu.memory_space<vmem>>, %arg16: memref<2x1x128xf32, #tpu.memory_space<vmem>>, %arg17: memref<1x128xf32, #tpu.memory_space<vmem>>, %arg18: memref<1x128xf32, #tpu.memory_space<vmem>>, %arg19: memref<128x128xbf16, #tpu.memory_space<vmem>>, %arg20: memref<1x128xf32, #tpu.memory_space<vmem>>, %arg21: memref<1x1x128xf32, #tpu.memory_space<vmem>>) attributes {dimension_semantics = [#tpu.dimension_semantics<parallel>], iteration_bounds = array<i64: 2>, scalar_prefetch = 0 : i64, scratch_operands = 0 : i64, tpu.core_type = #tpu.core_type<tc>, window_params = [{transform_indices = @transform_0, window_bounds = array<i64: 1, 4, 256>}, {pipeline_mode = #tpu.pipeline_mode<synchronous>, transform_indices = @transform_1, window_bounds = array<i64: 256, 128>}, {pipeline_mode = #tpu.pipeline_mode<synchronous>, transform_indices = @transform_2, window_bounds = array<i64: 1, 128>}, {pipeline_mode = #tpu.pipeline_mode<synchronous>, transform_indices = @transform_3, window_bounds = array<i64: 5, 128>}, {pipeline_mode = #tpu.pipeline_mode<synchronous>, transform_indices = @transform_4, window_bounds = array<i64: 2, 1, 128>}, {pipeline_mode = #tpu.pipeline_mode<synchronous>, transform_indices = @transform_5, window_bounds = array<i64: 2, 1, 128>}, {pipeline_mode = #tpu.pipeline_mode<synchronous>, transform_indices = @transform_6, window_bounds = array<i64: 2, 128, 384>}, {pipeline_mode = #tpu.pipeline_mode<synchronous>, transform_indices = @transform_7, window_bounds = array<i64: 2, 1, 384>}, {pipeline_mode = #tpu.pipeline_mode<synchronous>, transform_indices = @transform_8, window_bounds = array<i64: 2, 128, 128>}, {pipeline_mode = #tpu.pipeline_mode<synchronous>, transform_indices = @transform_9, window_bounds = array<i64: 2, 1, 128>}, {pipeline_mode = #tpu.pipeline_mode<synchronous>, transform_indices = @transform_10, window_bounds = array<i64: 2, 1, 128>}, {pipeline_mode = #tpu.pipeline_mode<synchronous>, transform_indices = @transform_11, window_bounds = array<i64: 2, 1, 128>}, {pipeline_mode = #tpu.pipeline_mode<synchronous>, transform_indices = @transform_12, window_bounds = array<i64: 2, 128, 512>}, {pipeline_mode = #tpu.pipeline_mode<synchronous>, transform_indices = @transform_13, window_bounds = array<i64: 2, 1, 512>}, {pipeline_mode = #tpu.pipeline_mode<synchronous>, transform_indices = @transform_14, window_bounds = array<i64: 2, 512, 128>}, {pipeline_mode = #tpu.pipeline_mode<synchronous>, transform_indices = @transform_15, window_bounds = array<i64: 2, 1, 128>}, {pipeline_mode = #tpu.pipeline_mode<synchronous>, transform_indices = @transform_16, window_bounds = array<i64: 1, 128>}, {pipeline_mode = #tpu.pipeline_mode<synchronous>, transform_indices = @transform_17, window_bounds = array<i64: 1, 128>}, {pipeline_mode = #tpu.pipeline_mode<synchronous>, transform_indices = @transform_18, window_bounds = array<i64: 128, 128>}, {pipeline_mode = #tpu.pipeline_mode<synchronous>, transform_indices = @transform_19, window_bounds = array<i64: 1, 128>}, {transform_indices = @transform_20, window_bounds = array<i64: 1, 1, 128>}]} {
    %c0 = arith.constant 0 : index
    %c0_0 = arith.constant 0 : index
    %c0_1 = arith.constant 0 : index
    %0 = vector.load %arg1[%c0, %c0_0, %c0_1] : memref<1x4x256xf32, #tpu.memory_space<vmem>>, vector<1x4x256xf32>
    %1 = vector.shape_cast %0 : vector<1x4x256xf32> to vector<4x256xf32>
    %2 = arith.truncf %1 : vector<4x256xf32> to vector<4x256xbf16>
    %c0_2 = arith.constant 0 : index
    %c0_3 = arith.constant 0 : index
    %3 = vector.load %arg2[%c0_2, %c0_3] : memref<256x128xbf16, #tpu.memory_space<vmem>>, vector<256x128xbf16>
    %cst = arith.constant dense<0.000000e+00> : vector<4x128xf32>
    %4 = tpu.matmul %2, %3, %cst {dimension_numbers = #tpu.dot_dimension_numbers<[1], [0], [0], [1], [0, 0, 1, 1], [], []>} : vector<4x256xbf16>, vector<256x128xbf16>, vector<4x128xf32> -> vector<4x128xf32>
    %c0_4 = arith.constant 0 : index
    %c0_5 = arith.constant 0 : index
    %5 = vector.load %arg3[%c0_4, %c0_5] : memref<1x128xf32, #tpu.memory_space<vmem>>, vector<1x128xf32>
    %6 = vector.broadcast %5 : vector<1x128xf32> to vector<4x128xf32>
    %7 = arith.addf %4, %6 : vector<4x128xf32>
    %cst_6 = arith.constant 0.000000e+00 : f32
    %8 = vector.broadcast %cst_6 : f32 to vector<1x128xf32>
    %9 = tpu.concatenate %8, %7 in 0 : vector<1x128xf32>, vector<4x128xf32> -> vector<5x128xf32>
    %c0_7 = arith.constant 0 : index
    %c0_8 = arith.constant 0 : index
    %10 = vector.load %arg4[%c0_7, %c0_8] : memref<5x128xf32, #tpu.memory_space<vmem>>, vector<5x128xf32>
    %11 = tpu.iota {dimensions = array<i32: 0>} : vector<5x5xi32>
    %12 = tpu.iota {dimensions = array<i32: 1>} : vector<5x5xi32>
    %13 = arith.cmpi sle, %12, %11 : vector<5x5xi32>
    %cst_9 = arith.constant 0.000000e+00 : f32
    %cst_10 = arith.constant -1.000000e+30 : f32
    %14 = vector.broadcast %cst_9 : f32 to vector<5x5xf32>
    %15 = vector.broadcast %cst_10 : f32 to vector<5x5xf32>
    %16 = arith.select %13, %14, %15 : vector<5x5xi1>, vector<5x5xf32>
    %c0_11 = arith.constant 0 : index
    %c0_12 = arith.constant 0 : index
    %c0_13 = arith.constant 0 : index
    %17 = vector.load %arg5[%c0_11, %c0_12, %c0_13] : memref<2x1x128xf32, #tpu.memory_space<vmem>>, vector<1x1x128xf32>
    %18 = vector.shape_cast %17 : vector<1x1x128xf32> to vector<1x128xf32>
    %c0_14 = arith.constant 0 : index
    %c0_15 = arith.constant 0 : index
    %c0_16 = arith.constant 0 : index
    %19 = vector.load %arg6[%c0_14, %c0_15, %c0_16] : memref<2x1x128xf32, #tpu.memory_space<vmem>>, vector<1x1x128xf32>
    %20 = vector.shape_cast %19 : vector<1x1x128xf32> to vector<1x128xf32>
    %cst_17 = arith.constant dense<0.000000e+00> : vector<5xf32>
    %21 = vector.multi_reduction <add>, %9, %cst_17 [1] : vector<5x128xf32> to vector<5xf32>
    %22 = vector.shape_cast %21 : vector<5xf32> to vector<5x1xf32>
    %cst_18 = arith.constant 1.280000e+02 : f32
    %23 = vector.broadcast %cst_18 : f32 to vector<5x1xf32>
    %24 = arith.divf %22, %23 : vector<5x1xf32>
    %25 = vector.broadcast %24 : vector<5x1xf32> to vector<5x128xf32>
    %26 = arith.subf %9, %25 : vector<5x128xf32>
    %27 = arith.mulf %26, %26 : vector<5x128xf32>
    %cst_19 = arith.constant dense<0.000000e+00> : vector<5xf32>
    %28 = vector.multi_reduction <add>, %27, %cst_19 [1] : vector<5x128xf32> to vector<5xf32>
    %29 = vector.shape_cast %28 : vector<5xf32> to vector<5x1xf32>
    %cst_20 = arith.constant 1.280000e+02 : f32
    %30 = vector.broadcast %cst_20 : f32 to vector<5x1xf32>
    %31 = arith.divf %29, %30 : vector<5x1xf32>
    %32 = vector.broadcast %24 : vector<5x1xf32> to vector<5x128xf32>
    %33 = arith.subf %9, %32 : vector<5x128xf32>
    %cst_21 = arith.constant 9.99999974E-6 : f32
    %34 = vector.broadcast %cst_21 : f32 to vector<5x1xf32>
    %35 = arith.addf %31, %34 : vector<5x1xf32>
    %36 = math.rsqrt %35 : vector<5x1xf32>
    %37 = vector.broadcast %36 : vector<5x1xf32> to vector<5x128xf32>
    %38 = arith.mulf %33, %37 : vector<5x128xf32>
    %39 = vector.broadcast %18 : vector<1x128xf32> to vector<5x128xf32>
    %40 = arith.mulf %38, %39 : vector<5x128xf32>
    %41 = vector.broadcast %20 : vector<1x128xf32> to vector<5x128xf32>
    %42 = arith.addf %40, %41 : vector<5x128xf32>
    %43 = arith.truncf %42 : vector<5x128xf32> to vector<5x128xbf16>
    %c0_22 = arith.constant 0 : index
    %c0_23 = arith.constant 0 : index
    %c0_24 = arith.constant 0 : index
    %44 = vector.load %arg7[%c0_22, %c0_23, %c0_24] : memref<2x128x384xbf16, #tpu.memory_space<vmem>>, vector<1x128x384xbf16>
    %45 = vector.shape_cast %44 : vector<1x128x384xbf16> to vector<128x384xbf16>
    %cst_25 = arith.constant dense<0.000000e+00> : vector<5x384xf32>
    %46 = tpu.matmul %43, %45, %cst_25 {dimension_numbers = #tpu.dot_dimension_numbers<[1], [0], [0], [1], [0, 0, 1, 1], [], []>} : vector<5x128xbf16>, vector<128x384xbf16>, vector<5x384xf32> -> vector<5x384xf32>
    %c0_26 = arith.constant 0 : index
    %c0_27 = arith.constant 0 : index
    %c0_28 = arith.constant 0 : index
    %47 = vector.load %arg8[%c0_26, %c0_27, %c0_28] : memref<2x1x384xf32, #tpu.memory_space<vmem>>, vector<1x1x384xf32>
    %48 = vector.shape_cast %47 : vector<1x1x384xf32> to vector<1x384xf32>
    %49 = vector.broadcast %48 : vector<1x384xf32> to vector<5x384xf32>
    %50 = arith.addf %46, %49 : vector<5x384xf32>
    %51 = vector.extract_strided_slice %50 {offsets = [0, 0], sizes = [5, 128], strides = [1, 1]} : vector<5x384xf32> to vector<5x128xf32>
    %52 = arith.addf %51, %10 : vector<5x128xf32>
    %53 = vector.extract_strided_slice %50 {offsets = [0, 128], sizes = [5, 128], strides = [1, 1]} : vector<5x384xf32> to vector<5x128xf32>
    %54 = arith.addf %53, %10 : vector<5x128xf32>
    %55 = vector.extract_strided_slice %50 {offsets = [0, 256], sizes = [5, 128], strides = [1, 1]} : vector<5x384xf32> to vector<5x128xf32>
    %56 = vector.extract_strided_slice %52 {offsets = [0, 0], sizes = [5, 32], strides = [1, 1]} : vector<5x128xf32> to vector<5x32xf32>
    %57 = arith.truncf %56 : vector<5x32xf32> to vector<5x32xbf16>
    %58 = vector.extract_strided_slice %54 {offsets = [0, 0], sizes = [5, 32], strides = [1, 1]} : vector<5x128xf32> to vector<5x32xf32>
    %59 = arith.truncf %58 : vector<5x32xf32> to vector<5x32xbf16>
    %60 = vector.extract_strided_slice %55 {offsets = [0, 0], sizes = [5, 32], strides = [1, 1]} : vector<5x128xf32> to vector<5x32xf32>
    %61 = arith.truncf %60 : vector<5x32xf32> to vector<5x32xbf16>
    %cst_29 = arith.constant dense<0.000000e+00> : vector<5x5xf32>
    %62 = tpu.matmul %57, %59, %cst_29 {dimension_numbers = #tpu.dot_dimension_numbers<[1], [1], [0], [0], [0, 0, 1, 0], [], []>} : vector<5x32xbf16>, vector<5x32xbf16>, vector<5x5xf32> -> vector<5x5xf32>
    %cst_30 = arith.constant 0.176776692 : f32
    %63 = vector.broadcast %cst_30 : f32 to vector<5x5xf32>
    %64 = arith.mulf %62, %63 : vector<5x5xf32>
    %65 = arith.addf %64, %16 : vector<5x5xf32>
    %cst_31 = arith.constant dense<0xFF800000> : vector<5xf32>
    %66 = vector.multi_reduction <maximumf>, %65, %cst_31 [1] : vector<5x5xf32> to vector<5xf32>
    %67 = vector.shape_cast %66 : vector<5xf32> to vector<5x1xf32>
    %68 = vector.broadcast %67 : vector<5x1xf32> to vector<5x5xf32>
    %69 = arith.subf %65, %68 : vector<5x5xf32>
    %70 = math.exp %69 : vector<5x5xf32>
    %cst_32 = arith.constant dense<0.000000e+00> : vector<5xf32>
    %71 = vector.multi_reduction <add>, %70, %cst_32 [1] : vector<5x5xf32> to vector<5xf32>
    %72 = vector.shape_cast %71 : vector<5xf32> to vector<5x1xf32>
    %73 = tpu.reciprocal %72 {approx = true} : vector<5x1xf32> -> vector<5x1xf32>
    %74 = vector.broadcast %73 : vector<5x1xf32> to vector<5x5xf32>
    %75 = arith.mulf %70, %74 : vector<5x5xf32>
    %76 = arith.truncf %75 : vector<5x5xf32> to vector<5x5xbf16>
    %cst_33 = arith.constant dense<0.000000e+00> : vector<5x32xf32>
    %77 = tpu.matmul %76, %61, %cst_33 {dimension_numbers = #tpu.dot_dimension_numbers<[1], [0], [0], [1], [0, 0, 1, 1], [], []>} : vector<5x5xbf16>, vector<5x32xbf16>, vector<5x32xf32> -> vector<5x32xf32>
    %78 = vector.extract_strided_slice %52 {offsets = [0, 32], sizes = [5, 32], strides = [1, 1]} : vector<5x128xf32> to vector<5x32xf32>
    %79 = arith.truncf %78 : vector<5x32xf32> to vector<5x32xbf16>
    %80 = vector.extract_strided_slice %54 {offsets = [0, 32], sizes = [5, 32], strides = [1, 1]} : vector<5x128xf32> to vector<5x32xf32>
    %81 = arith.truncf %80 : vector<5x32xf32> to vector<5x32xbf16>
    %82 = vector.extract_strided_slice %55 {offsets = [0, 32], sizes = [5, 32], strides = [1, 1]} : vector<5x128xf32> to vector<5x32xf32>
    %83 = arith.truncf %82 : vector<5x32xf32> to vector<5x32xbf16>
    %cst_34 = arith.constant dense<0.000000e+00> : vector<5x5xf32>
    %84 = tpu.matmul %79, %81, %cst_34 {dimension_numbers = #tpu.dot_dimension_numbers<[1], [1], [0], [0], [0, 0, 1, 0], [], []>} : vector<5x32xbf16>, vector<5x32xbf16>, vector<5x5xf32> -> vector<5x5xf32>
    %cst_35 = arith.constant 0.176776692 : f32
    %85 = vector.broadcast %cst_35 : f32 to vector<5x5xf32>
    %86 = arith.mulf %84, %85 : vector<5x5xf32>
    %87 = arith.addf %86, %16 : vector<5x5xf32>
    %cst_36 = arith.constant dense<0xFF800000> : vector<5xf32>
    %88 = vector.multi_reduction <maximumf>, %87, %cst_36 [1] : vector<5x5xf32> to vector<5xf32>
    %89 = vector.shape_cast %88 : vector<5xf32> to vector<5x1xf32>
    %90 = vector.broadcast %89 : vector<5x1xf32> to vector<5x5xf32>
    %91 = arith.subf %87, %90 : vector<5x5xf32>
    %92 = math.exp %91 : vector<5x5xf32>
    %cst_37 = arith.constant dense<0.000000e+00> : vector<5xf32>
    %93 = vector.multi_reduction <add>, %92, %cst_37 [1] : vector<5x5xf32> to vector<5xf32>
    %94 = vector.shape_cast %93 : vector<5xf32> to vector<5x1xf32>
    %95 = tpu.reciprocal %94 {approx = true} : vector<5x1xf32> -> vector<5x1xf32>
    %96 = vector.broadcast %95 : vector<5x1xf32> to vector<5x5xf32>
    %97 = arith.mulf %92, %96 : vector<5x5xf32>
    %98 = arith.truncf %97 : vector<5x5xf32> to vector<5x5xbf16>
    %cst_38 = arith.constant dense<0.000000e+00> : vector<5x32xf32>
    %99 = tpu.matmul %98, %83, %cst_38 {dimension_numbers = #tpu.dot_dimension_numbers<[1], [0], [0], [1], [0, 0, 1, 1], [], []>} : vector<5x5xbf16>, vector<5x32xbf16>, vector<5x32xf32> -> vector<5x32xf32>
    %100 = vector.extract_strided_slice %52 {offsets = [0, 64], sizes = [5, 32], strides = [1, 1]} : vector<5x128xf32> to vector<5x32xf32>
    %101 = arith.truncf %100 : vector<5x32xf32> to vector<5x32xbf16>
    %102 = vector.extract_strided_slice %54 {offsets = [0, 64], sizes = [5, 32], strides = [1, 1]} : vector<5x128xf32> to vector<5x32xf32>
    %103 = arith.truncf %102 : vector<5x32xf32> to vector<5x32xbf16>
    %104 = vector.extract_strided_slice %55 {offsets = [0, 64], sizes = [5, 32], strides = [1, 1]} : vector<5x128xf32> to vector<5x32xf32>
    %105 = arith.truncf %104 : vector<5x32xf32> to vector<5x32xbf16>
    %cst_39 = arith.constant dense<0.000000e+00> : vector<5x5xf32>
    %106 = tpu.matmul %101, %103, %cst_39 {dimension_numbers = #tpu.dot_dimension_numbers<[1], [1], [0], [0], [0, 0, 1, 0], [], []>} : vector<5x32xbf16>, vector<5x32xbf16>, vector<5x5xf32> -> vector<5x5xf32>
    %cst_40 = arith.constant 0.176776692 : f32
    %107 = vector.broadcast %cst_40 : f32 to vector<5x5xf32>
    %108 = arith.mulf %106, %107 : vector<5x5xf32>
    %109 = arith.addf %108, %16 : vector<5x5xf32>
    %cst_41 = arith.constant dense<0xFF800000> : vector<5xf32>
    %110 = vector.multi_reduction <maximumf>, %109, %cst_41 [1] : vector<5x5xf32> to vector<5xf32>
    %111 = vector.shape_cast %110 : vector<5xf32> to vector<5x1xf32>
    %112 = vector.broadcast %111 : vector<5x1xf32> to vector<5x5xf32>
    %113 = arith.subf %109, %112 : vector<5x5xf32>
    %114 = math.exp %113 : vector<5x5xf32>
    %cst_42 = arith.constant dense<0.000000e+00> : vector<5xf32>
    %115 = vector.multi_reduction <add>, %114, %cst_42 [1] : vector<5x5xf32> to vector<5xf32>
    %116 = vector.shape_cast %115 : vector<5xf32> to vector<5x1xf32>
    %117 = tpu.reciprocal %116 {approx = true} : vector<5x1xf32> -> vector<5x1xf32>
    %118 = vector.broadcast %117 : vector<5x1xf32> to vector<5x5xf32>
    %119 = arith.mulf %114, %118 : vector<5x5xf32>
    %120 = arith.truncf %119 : vector<5x5xf32> to vector<5x5xbf16>
    %cst_43 = arith.constant dense<0.000000e+00> : vector<5x32xf32>
    %121 = tpu.matmul %120, %105, %cst_43 {dimension_numbers = #tpu.dot_dimension_numbers<[1], [0], [0], [1], [0, 0, 1, 1], [], []>} : vector<5x5xbf16>, vector<5x32xbf16>, vector<5x32xf32> -> vector<5x32xf32>
    %122 = vector.extract_strided_slice %52 {offsets = [0, 96], sizes = [5, 32], strides = [1, 1]} : vector<5x128xf32> to vector<5x32xf32>
    %123 = arith.truncf %122 : vector<5x32xf32> to vector<5x32xbf16>
    %124 = vector.extract_strided_slice %54 {offsets = [0, 96], sizes = [5, 32], strides = [1, 1]} : vector<5x128xf32> to vector<5x32xf32>
    %125 = arith.truncf %124 : vector<5x32xf32> to vector<5x32xbf16>
    %126 = vector.extract_strided_slice %55 {offsets = [0, 96], sizes = [5, 32], strides = [1, 1]} : vector<5x128xf32> to vector<5x32xf32>
    %127 = arith.truncf %126 : vector<5x32xf32> to vector<5x32xbf16>
    %cst_44 = arith.constant dense<0.000000e+00> : vector<5x5xf32>
    %128 = tpu.matmul %123, %125, %cst_44 {dimension_numbers = #tpu.dot_dimension_numbers<[1], [1], [0], [0], [0, 0, 1, 0], [], []>} : vector<5x32xbf16>, vector<5x32xbf16>, vector<5x5xf32> -> vector<5x5xf32>
    %cst_45 = arith.constant 0.176776692 : f32
    %129 = vector.broadcast %cst_45 : f32 to vector<5x5xf32>
    %130 = arith.mulf %128, %129 : vector<5x5xf32>
    %131 = arith.addf %130, %16 : vector<5x5xf32>
    %cst_46 = arith.constant dense<0xFF800000> : vector<5xf32>
    %132 = vector.multi_reduction <maximumf>, %131, %cst_46 [1] : vector<5x5xf32> to vector<5xf32>
    %133 = vector.shape_cast %132 : vector<5xf32> to vector<5x1xf32>
    %134 = vector.broadcast %133 : vector<5x1xf32> to vector<5x5xf32>
    %135 = arith.subf %131, %134 : vector<5x5xf32>
    %136 = math.exp %135 : vector<5x5xf32>
    %cst_47 = arith.constant dense<0.000000e+00> : vector<5xf32>
    %137 = vector.multi_reduction <add>, %136, %cst_47 [1] : vector<5x5xf32> to vector<5xf32>
    %138 = vector.shape_cast %137 : vector<5xf32> to vector<5x1xf32>
    %139 = tpu.reciprocal %138 {approx = true} : vector<5x1xf32> -> vector<5x1xf32>
    %140 = vector.broadcast %139 : vector<5x1xf32> to vector<5x5xf32>
    %141 = arith.mulf %136, %140 : vector<5x5xf32>
    %142 = arith.truncf %141 : vector<5x5xf32> to vector<5x5xbf16>
    %cst_48 = arith.constant dense<0.000000e+00> : vector<5x32xf32>
    %143 = tpu.matmul %142, %127, %cst_48 {dimension_numbers = #tpu.dot_dimension_numbers<[1], [0], [0], [1], [0, 0, 1, 1], [], []>} : vector<5x5xbf16>, vector<5x32xbf16>, vector<5x32xf32> -> vector<5x32xf32>
    %144 = tpu.concatenate %77, %99, %121, %143 in 1 : vector<5x32xf32>, vector<5x32xf32>, vector<5x32xf32>, vector<5x32xf32> -> vector<5x128xf32>
    %145 = arith.truncf %144 : vector<5x128xf32> to vector<5x128xbf16>
    %c0_49 = arith.constant 0 : index
    %c0_50 = arith.constant 0 : index
    %c0_51 = arith.constant 0 : index
    %146 = vector.load %arg9[%c0_49, %c0_50, %c0_51] : memref<2x128x128xbf16, #tpu.memory_space<vmem>>, vector<1x128x128xbf16>
    %147 = vector.shape_cast %146 : vector<1x128x128xbf16> to vector<128x128xbf16>
    %cst_52 = arith.constant dense<0.000000e+00> : vector<5x128xf32>
    %148 = tpu.matmul %145, %147, %cst_52 {dimension_numbers = #tpu.dot_dimension_numbers<[1], [0], [0], [1], [0, 0, 1, 1], [], []>} : vector<5x128xbf16>, vector<128x128xbf16>, vector<5x128xf32> -> vector<5x128xf32>
    %c0_53 = arith.constant 0 : index
    %c0_54 = arith.constant 0 : index
    %c0_55 = arith.constant 0 : index
    %149 = vector.load %arg10[%c0_53, %c0_54, %c0_55] : memref<2x1x128xf32, #tpu.memory_space<vmem>>, vector<1x1x128xf32>
    %150 = vector.shape_cast %149 : vector<1x1x128xf32> to vector<1x128xf32>
    %151 = vector.broadcast %150 : vector<1x128xf32> to vector<5x128xf32>
    %152 = arith.addf %148, %151 : vector<5x128xf32>
    %153 = arith.addf %9, %152 : vector<5x128xf32>
    %c0_56 = arith.constant 0 : index
    %c0_57 = arith.constant 0 : index
    %c0_58 = arith.constant 0 : index
    %154 = vector.load %arg11[%c0_56, %c0_57, %c0_58] : memref<2x1x128xf32, #tpu.memory_space<vmem>>, vector<1x1x128xf32>
    %155 = vector.shape_cast %154 : vector<1x1x128xf32> to vector<1x128xf32>
    %c0_59 = arith.constant 0 : index
    %c0_60 = arith.constant 0 : index
    %c0_61 = arith.constant 0 : index
    %156 = vector.load %arg12[%c0_59, %c0_60, %c0_61] : memref<2x1x128xf32, #tpu.memory_space<vmem>>, vector<1x1x128xf32>
    %157 = vector.shape_cast %156 : vector<1x1x128xf32> to vector<1x128xf32>
    %cst_62 = arith.constant dense<0.000000e+00> : vector<5xf32>
    %158 = vector.multi_reduction <add>, %153, %cst_62 [1] : vector<5x128xf32> to vector<5xf32>
    %159 = vector.shape_cast %158 : vector<5xf32> to vector<5x1xf32>
    %cst_63 = arith.constant 1.280000e+02 : f32
    %160 = vector.broadcast %cst_63 : f32 to vector<5x1xf32>
    %161 = arith.divf %159, %160 : vector<5x1xf32>
    %162 = vector.broadcast %161 : vector<5x1xf32> to vector<5x128xf32>
    %163 = arith.subf %153, %162 : vector<5x128xf32>
    %164 = arith.mulf %163, %163 : vector<5x128xf32>
    %cst_64 = arith.constant dense<0.000000e+00> : vector<5xf32>
    %165 = vector.multi_reduction <add>, %164, %cst_64 [1] : vector<5x128xf32> to vector<5xf32>
    %166 = vector.shape_cast %165 : vector<5xf32> to vector<5x1xf32>
    %cst_65 = arith.constant 1.280000e+02 : f32
    %167 = vector.broadcast %cst_65 : f32 to vector<5x1xf32>
    %168 = arith.divf %166, %167 : vector<5x1xf32>
    %169 = vector.broadcast %161 : vector<5x1xf32> to vector<5x128xf32>
    %170 = arith.subf %153, %169 : vector<5x128xf32>
    %cst_66 = arith.constant 9.99999974E-6 : f32
    %171 = vector.broadcast %cst_66 : f32 to vector<5x1xf32>
    %172 = arith.addf %168, %171 : vector<5x1xf32>
    %173 = math.rsqrt %172 : vector<5x1xf32>
    %174 = vector.broadcast %173 : vector<5x1xf32> to vector<5x128xf32>
    %175 = arith.mulf %170, %174 : vector<5x128xf32>
    %176 = vector.broadcast %155 : vector<1x128xf32> to vector<5x128xf32>
    %177 = arith.mulf %175, %176 : vector<5x128xf32>
    %178 = vector.broadcast %157 : vector<1x128xf32> to vector<5x128xf32>
    %179 = arith.addf %177, %178 : vector<5x128xf32>
    %180 = arith.truncf %179 : vector<5x128xf32> to vector<5x128xbf16>
    %c0_67 = arith.constant 0 : index
    %c0_68 = arith.constant 0 : index
    %c0_69 = arith.constant 0 : index
    %181 = vector.load %arg13[%c0_67, %c0_68, %c0_69] : memref<2x128x512xbf16, #tpu.memory_space<vmem>>, vector<1x128x512xbf16>
    %182 = vector.shape_cast %181 : vector<1x128x512xbf16> to vector<128x512xbf16>
    %cst_70 = arith.constant dense<0.000000e+00> : vector<5x512xf32>
    %183 = tpu.matmul %180, %182, %cst_70 {dimension_numbers = #tpu.dot_dimension_numbers<[1], [0], [0], [1], [0, 0, 1, 1], [], []>} : vector<5x128xbf16>, vector<128x512xbf16>, vector<5x512xf32> -> vector<5x512xf32>
    %c0_71 = arith.constant 0 : index
    %c0_72 = arith.constant 0 : index
    %c0_73 = arith.constant 0 : index
    %184 = vector.load %arg14[%c0_71, %c0_72, %c0_73] : memref<2x1x512xf32, #tpu.memory_space<vmem>>, vector<1x1x512xf32>
    %185 = vector.shape_cast %184 : vector<1x1x512xf32> to vector<1x512xf32>
    %186 = vector.broadcast %185 : vector<1x512xf32> to vector<5x512xf32>
    %187 = arith.addf %183, %186 : vector<5x512xf32>
    %cst_74 = arith.constant 0.000000e+00 : f32
    %188 = vector.broadcast %cst_74 : f32 to vector<5x512xf32>
    %189 = arith.maximumf %187, %188 : vector<5x512xf32>
    %190 = arith.truncf %189 : vector<5x512xf32> to vector<5x512xbf16>
    %c0_75 = arith.constant 0 : index
    %c0_76 = arith.constant 0 : index
    %c0_77 = arith.constant 0 : index
    %191 = vector.load %arg15[%c0_75, %c0_76, %c0_77] : memref<2x512x128xbf16, #tpu.memory_space<vmem>>, vector<1x512x128xbf16>
    %192 = vector.shape_cast %191 : vector<1x512x128xbf16> to vector<512x128xbf16>
    %cst_78 = arith.constant dense<0.000000e+00> : vector<5x128xf32>
    %193 = tpu.matmul %190, %192, %cst_78 {dimension_numbers = #tpu.dot_dimension_numbers<[1], [0], [0], [1], [0, 0, 1, 1], [], []>} : vector<5x512xbf16>, vector<512x128xbf16>, vector<5x128xf32> -> vector<5x128xf32>
    %c0_79 = arith.constant 0 : index
    %c0_80 = arith.constant 0 : index
    %c0_81 = arith.constant 0 : index
    %194 = vector.load %arg16[%c0_79, %c0_80, %c0_81] : memref<2x1x128xf32, #tpu.memory_space<vmem>>, vector<1x1x128xf32>
    %195 = vector.shape_cast %194 : vector<1x1x128xf32> to vector<1x128xf32>
    %196 = vector.broadcast %195 : vector<1x128xf32> to vector<5x128xf32>
    %197 = arith.addf %193, %196 : vector<5x128xf32>
    %198 = arith.addf %153, %197 : vector<5x128xf32>
    %c1 = arith.constant 1 : index
    %c0_82 = arith.constant 0 : index
    %c0_83 = arith.constant 0 : index
    %199 = vector.load %arg5[%c1, %c0_82, %c0_83] : memref<2x1x128xf32, #tpu.memory_space<vmem>>, vector<1x1x128xf32>
    %200 = vector.shape_cast %199 : vector<1x1x128xf32> to vector<1x128xf32>
    %c1_84 = arith.constant 1 : index
    %c0_85 = arith.constant 0 : index
    %c0_86 = arith.constant 0 : index
    %201 = vector.load %arg6[%c1_84, %c0_85, %c0_86] : memref<2x1x128xf32, #tpu.memory_space<vmem>>, vector<1x1x128xf32>
    %202 = vector.shape_cast %201 : vector<1x1x128xf32> to vector<1x128xf32>
    %cst_87 = arith.constant dense<0.000000e+00> : vector<5xf32>
    %203 = vector.multi_reduction <add>, %198, %cst_87 [1] : vector<5x128xf32> to vector<5xf32>
    %204 = vector.shape_cast %203 : vector<5xf32> to vector<5x1xf32>
    %cst_88 = arith.constant 1.280000e+02 : f32
    %205 = vector.broadcast %cst_88 : f32 to vector<5x1xf32>
    %206 = arith.divf %204, %205 : vector<5x1xf32>
    %207 = vector.broadcast %206 : vector<5x1xf32> to vector<5x128xf32>
    %208 = arith.subf %198, %207 : vector<5x128xf32>
    %209 = arith.mulf %208, %208 : vector<5x128xf32>
    %cst_89 = arith.constant dense<0.000000e+00> : vector<5xf32>
    %210 = vector.multi_reduction <add>, %209, %cst_89 [1] : vector<5x128xf32> to vector<5xf32>
    %211 = vector.shape_cast %210 : vector<5xf32> to vector<5x1xf32>
    %cst_90 = arith.constant 1.280000e+02 : f32
    %212 = vector.broadcast %cst_90 : f32 to vector<5x1xf32>
    %213 = arith.divf %211, %212 : vector<5x1xf32>
    %214 = vector.broadcast %206 : vector<5x1xf32> to vector<5x128xf32>
    %215 = arith.subf %198, %214 : vector<5x128xf32>
    %cst_91 = arith.constant 9.99999974E-6 : f32
    %216 = vector.broadcast %cst_91 : f32 to vector<5x1xf32>
    %217 = arith.addf %213, %216 : vector<5x1xf32>
    %218 = math.rsqrt %217 : vector<5x1xf32>
    %219 = vector.broadcast %218 : vector<5x1xf32> to vector<5x128xf32>
    %220 = arith.mulf %215, %219 : vector<5x128xf32>
    %221 = vector.broadcast %200 : vector<1x128xf32> to vector<5x128xf32>
    %222 = arith.mulf %220, %221 : vector<5x128xf32>
    %223 = vector.broadcast %202 : vector<1x128xf32> to vector<5x128xf32>
    %224 = arith.addf %222, %223 : vector<5x128xf32>
    %225 = arith.truncf %224 : vector<5x128xf32> to vector<5x128xbf16>
    %c1_92 = arith.constant 1 : index
    %c0_93 = arith.constant 0 : index
    %c0_94 = arith.constant 0 : index
    %226 = vector.load %arg7[%c1_92, %c0_93, %c0_94] : memref<2x128x384xbf16, #tpu.memory_space<vmem>>, vector<1x128x384xbf16>
    %227 = vector.shape_cast %226 : vector<1x128x384xbf16> to vector<128x384xbf16>
    %cst_95 = arith.constant dense<0.000000e+00> : vector<5x384xf32>
    %228 = tpu.matmul %225, %227, %cst_95 {dimension_numbers = #tpu.dot_dimension_numbers<[1], [0], [0], [1], [0, 0, 1, 1], [], []>} : vector<5x128xbf16>, vector<128x384xbf16>, vector<5x384xf32> -> vector<5x384xf32>
    %c1_96 = arith.constant 1 : index
    %c0_97 = arith.constant 0 : index
    %c0_98 = arith.constant 0 : index
    %229 = vector.load %arg8[%c1_96, %c0_97, %c0_98] : memref<2x1x384xf32, #tpu.memory_space<vmem>>, vector<1x1x384xf32>
    %230 = vector.shape_cast %229 : vector<1x1x384xf32> to vector<1x384xf32>
    %231 = vector.broadcast %230 : vector<1x384xf32> to vector<5x384xf32>
    %232 = arith.addf %228, %231 : vector<5x384xf32>
    %233 = vector.extract_strided_slice %232 {offsets = [0, 0], sizes = [5, 128], strides = [1, 1]} : vector<5x384xf32> to vector<5x128xf32>
    %234 = arith.addf %233, %10 : vector<5x128xf32>
    %235 = vector.extract_strided_slice %232 {offsets = [0, 128], sizes = [5, 128], strides = [1, 1]} : vector<5x384xf32> to vector<5x128xf32>
    %236 = arith.addf %235, %10 : vector<5x128xf32>
    %237 = vector.extract_strided_slice %232 {offsets = [0, 256], sizes = [5, 128], strides = [1, 1]} : vector<5x384xf32> to vector<5x128xf32>
    %238 = vector.extract_strided_slice %234 {offsets = [0, 0], sizes = [5, 32], strides = [1, 1]} : vector<5x128xf32> to vector<5x32xf32>
    %239 = arith.truncf %238 : vector<5x32xf32> to vector<5x32xbf16>
    %240 = vector.extract_strided_slice %236 {offsets = [0, 0], sizes = [5, 32], strides = [1, 1]} : vector<5x128xf32> to vector<5x32xf32>
    %241 = arith.truncf %240 : vector<5x32xf32> to vector<5x32xbf16>
    %242 = vector.extract_strided_slice %237 {offsets = [0, 0], sizes = [5, 32], strides = [1, 1]} : vector<5x128xf32> to vector<5x32xf32>
    %243 = arith.truncf %242 : vector<5x32xf32> to vector<5x32xbf16>
    %cst_99 = arith.constant dense<0.000000e+00> : vector<5x5xf32>
    %244 = tpu.matmul %239, %241, %cst_99 {dimension_numbers = #tpu.dot_dimension_numbers<[1], [1], [0], [0], [0, 0, 1, 0], [], []>} : vector<5x32xbf16>, vector<5x32xbf16>, vector<5x5xf32> -> vector<5x5xf32>
    %cst_100 = arith.constant 0.176776692 : f32
    %245 = vector.broadcast %cst_100 : f32 to vector<5x5xf32>
    %246 = arith.mulf %244, %245 : vector<5x5xf32>
    %247 = arith.addf %246, %16 : vector<5x5xf32>
    %cst_101 = arith.constant dense<0xFF800000> : vector<5xf32>
    %248 = vector.multi_reduction <maximumf>, %247, %cst_101 [1] : vector<5x5xf32> to vector<5xf32>
    %249 = vector.shape_cast %248 : vector<5xf32> to vector<5x1xf32>
    %250 = vector.broadcast %249 : vector<5x1xf32> to vector<5x5xf32>
    %251 = arith.subf %247, %250 : vector<5x5xf32>
    %252 = math.exp %251 : vector<5x5xf32>
    %cst_102 = arith.constant dense<0.000000e+00> : vector<5xf32>
    %253 = vector.multi_reduction <add>, %252, %cst_102 [1] : vector<5x5xf32> to vector<5xf32>
    %254 = vector.shape_cast %253 : vector<5xf32> to vector<5x1xf32>
    %255 = tpu.reciprocal %254 {approx = true} : vector<5x1xf32> -> vector<5x1xf32>
    %256 = vector.broadcast %255 : vector<5x1xf32> to vector<5x5xf32>
    %257 = arith.mulf %252, %256 : vector<5x5xf32>
    %258 = arith.truncf %257 : vector<5x5xf32> to vector<5x5xbf16>
    %cst_103 = arith.constant dense<0.000000e+00> : vector<5x32xf32>
    %259 = tpu.matmul %258, %243, %cst_103 {dimension_numbers = #tpu.dot_dimension_numbers<[1], [0], [0], [1], [0, 0, 1, 1], [], []>} : vector<5x5xbf16>, vector<5x32xbf16>, vector<5x32xf32> -> vector<5x32xf32>
    %260 = vector.extract_strided_slice %234 {offsets = [0, 32], sizes = [5, 32], strides = [1, 1]} : vector<5x128xf32> to vector<5x32xf32>
    %261 = arith.truncf %260 : vector<5x32xf32> to vector<5x32xbf16>
    %262 = vector.extract_strided_slice %236 {offsets = [0, 32], sizes = [5, 32], strides = [1, 1]} : vector<5x128xf32> to vector<5x32xf32>
    %263 = arith.truncf %262 : vector<5x32xf32> to vector<5x32xbf16>
    %264 = vector.extract_strided_slice %237 {offsets = [0, 32], sizes = [5, 32], strides = [1, 1]} : vector<5x128xf32> to vector<5x32xf32>
    %265 = arith.truncf %264 : vector<5x32xf32> to vector<5x32xbf16>
    %cst_104 = arith.constant dense<0.000000e+00> : vector<5x5xf32>
    %266 = tpu.matmul %261, %263, %cst_104 {dimension_numbers = #tpu.dot_dimension_numbers<[1], [1], [0], [0], [0, 0, 1, 0], [], []>} : vector<5x32xbf16>, vector<5x32xbf16>, vector<5x5xf32> -> vector<5x5xf32>
    %cst_105 = arith.constant 0.176776692 : f32
    %267 = vector.broadcast %cst_105 : f32 to vector<5x5xf32>
    %268 = arith.mulf %266, %267 : vector<5x5xf32>
    %269 = arith.addf %268, %16 : vector<5x5xf32>
    %cst_106 = arith.constant dense<0xFF800000> : vector<5xf32>
    %270 = vector.multi_reduction <maximumf>, %269, %cst_106 [1] : vector<5x5xf32> to vector<5xf32>
    %271 = vector.shape_cast %270 : vector<5xf32> to vector<5x1xf32>
    %272 = vector.broadcast %271 : vector<5x1xf32> to vector<5x5xf32>
    %273 = arith.subf %269, %272 : vector<5x5xf32>
    %274 = math.exp %273 : vector<5x5xf32>
    %cst_107 = arith.constant dense<0.000000e+00> : vector<5xf32>
    %275 = vector.multi_reduction <add>, %274, %cst_107 [1] : vector<5x5xf32> to vector<5xf32>
    %276 = vector.shape_cast %275 : vector<5xf32> to vector<5x1xf32>
    %277 = tpu.reciprocal %276 {approx = true} : vector<5x1xf32> -> vector<5x1xf32>
    %278 = vector.broadcast %277 : vector<5x1xf32> to vector<5x5xf32>
    %279 = arith.mulf %274, %278 : vector<5x5xf32>
    %280 = arith.truncf %279 : vector<5x5xf32> to vector<5x5xbf16>
    %cst_108 = arith.constant dense<0.000000e+00> : vector<5x32xf32>
    %281 = tpu.matmul %280, %265, %cst_108 {dimension_numbers = #tpu.dot_dimension_numbers<[1], [0], [0], [1], [0, 0, 1, 1], [], []>} : vector<5x5xbf16>, vector<5x32xbf16>, vector<5x32xf32> -> vector<5x32xf32>
    %282 = vector.extract_strided_slice %234 {offsets = [0, 64], sizes = [5, 32], strides = [1, 1]} : vector<5x128xf32> to vector<5x32xf32>
    %283 = arith.truncf %282 : vector<5x32xf32> to vector<5x32xbf16>
    %284 = vector.extract_strided_slice %236 {offsets = [0, 64], sizes = [5, 32], strides = [1, 1]} : vector<5x128xf32> to vector<5x32xf32>
    %285 = arith.truncf %284 : vector<5x32xf32> to vector<5x32xbf16>
    %286 = vector.extract_strided_slice %237 {offsets = [0, 64], sizes = [5, 32], strides = [1, 1]} : vector<5x128xf32> to vector<5x32xf32>
    %287 = arith.truncf %286 : vector<5x32xf32> to vector<5x32xbf16>
    %cst_109 = arith.constant dense<0.000000e+00> : vector<5x5xf32>
    %288 = tpu.matmul %283, %285, %cst_109 {dimension_numbers = #tpu.dot_dimension_numbers<[1], [1], [0], [0], [0, 0, 1, 0], [], []>} : vector<5x32xbf16>, vector<5x32xbf16>, vector<5x5xf32> -> vector<5x5xf32>
    %cst_110 = arith.constant 0.176776692 : f32
    %289 = vector.broadcast %cst_110 : f32 to vector<5x5xf32>
    %290 = arith.mulf %288, %289 : vector<5x5xf32>
    %291 = arith.addf %290, %16 : vector<5x5xf32>
    %cst_111 = arith.constant dense<0xFF800000> : vector<5xf32>
    %292 = vector.multi_reduction <maximumf>, %291, %cst_111 [1] : vector<5x5xf32> to vector<5xf32>
    %293 = vector.shape_cast %292 : vector<5xf32> to vector<5x1xf32>
    %294 = vector.broadcast %293 : vector<5x1xf32> to vector<5x5xf32>
    %295 = arith.subf %291, %294 : vector<5x5xf32>
    %296 = math.exp %295 : vector<5x5xf32>
    %cst_112 = arith.constant dense<0.000000e+00> : vector<5xf32>
    %297 = vector.multi_reduction <add>, %296, %cst_112 [1] : vector<5x5xf32> to vector<5xf32>
    %298 = vector.shape_cast %297 : vector<5xf32> to vector<5x1xf32>
    %299 = tpu.reciprocal %298 {approx = true} : vector<5x1xf32> -> vector<5x1xf32>
    %300 = vector.broadcast %299 : vector<5x1xf32> to vector<5x5xf32>
    %301 = arith.mulf %296, %300 : vector<5x5xf32>
    %302 = arith.truncf %301 : vector<5x5xf32> to vector<5x5xbf16>
    %cst_113 = arith.constant dense<0.000000e+00> : vector<5x32xf32>
    %303 = tpu.matmul %302, %287, %cst_113 {dimension_numbers = #tpu.dot_dimension_numbers<[1], [0], [0], [1], [0, 0, 1, 1], [], []>} : vector<5x5xbf16>, vector<5x32xbf16>, vector<5x32xf32> -> vector<5x32xf32>
    %304 = vector.extract_strided_slice %234 {offsets = [0, 96], sizes = [5, 32], strides = [1, 1]} : vector<5x128xf32> to vector<5x32xf32>
    %305 = arith.truncf %304 : vector<5x32xf32> to vector<5x32xbf16>
    %306 = vector.extract_strided_slice %236 {offsets = [0, 96], sizes = [5, 32], strides = [1, 1]} : vector<5x128xf32> to vector<5x32xf32>
    %307 = arith.truncf %306 : vector<5x32xf32> to vector<5x32xbf16>
    %308 = vector.extract_strided_slice %237 {offsets = [0, 96], sizes = [5, 32], strides = [1, 1]} : vector<5x128xf32> to vector<5x32xf32>
    %309 = arith.truncf %308 : vector<5x32xf32> to vector<5x32xbf16>
    %cst_114 = arith.constant dense<0.000000e+00> : vector<5x5xf32>
    %310 = tpu.matmul %305, %307, %cst_114 {dimension_numbers = #tpu.dot_dimension_numbers<[1], [1], [0], [0], [0, 0, 1, 0], [], []>} : vector<5x32xbf16>, vector<5x32xbf16>, vector<5x5xf32> -> vector<5x5xf32>
    %cst_115 = arith.constant 0.176776692 : f32
    %311 = vector.broadcast %cst_115 : f32 to vector<5x5xf32>
    %312 = arith.mulf %310, %311 : vector<5x5xf32>
    %313 = arith.addf %312, %16 : vector<5x5xf32>
    %cst_116 = arith.constant dense<0xFF800000> : vector<5xf32>
    %314 = vector.multi_reduction <maximumf>, %313, %cst_116 [1] : vector<5x5xf32> to vector<5xf32>
    %315 = vector.shape_cast %314 : vector<5xf32> to vector<5x1xf32>
    %316 = vector.broadcast %315 : vector<5x1xf32> to vector<5x5xf32>
    %317 = arith.subf %313, %316 : vector<5x5xf32>
    %318 = math.exp %317 : vector<5x5xf32>
    %cst_117 = arith.constant dense<0.000000e+00> : vector<5xf32>
    %319 = vector.multi_reduction <add>, %318, %cst_117 [1] : vector<5x5xf32> to vector<5xf32>
    %320 = vector.shape_cast %319 : vector<5xf32> to vector<5x1xf32>
    %321 = tpu.reciprocal %320 {approx = true} : vector<5x1xf32> -> vector<5x1xf32>
    %322 = vector.broadcast %321 : vector<5x1xf32> to vector<5x5xf32>
    %323 = arith.mulf %318, %322 : vector<5x5xf32>
    %324 = arith.truncf %323 : vector<5x5xf32> to vector<5x5xbf16>
    %cst_118 = arith.constant dense<0.000000e+00> : vector<5x32xf32>
    %325 = tpu.matmul %324, %309, %cst_118 {dimension_numbers = #tpu.dot_dimension_numbers<[1], [0], [0], [1], [0, 0, 1, 1], [], []>} : vector<5x5xbf16>, vector<5x32xbf16>, vector<5x32xf32> -> vector<5x32xf32>
    %326 = tpu.concatenate %259, %281, %303, %325 in 1 : vector<5x32xf32>, vector<5x32xf32>, vector<5x32xf32>, vector<5x32xf32> -> vector<5x128xf32>
    %327 = arith.truncf %326 : vector<5x128xf32> to vector<5x128xbf16>
    %c1_119 = arith.constant 1 : index
    %c0_120 = arith.constant 0 : index
    %c0_121 = arith.constant 0 : index
    %328 = vector.load %arg9[%c1_119, %c0_120, %c0_121] : memref<2x128x128xbf16, #tpu.memory_space<vmem>>, vector<1x128x128xbf16>
    %329 = vector.shape_cast %328 : vector<1x128x128xbf16> to vector<128x128xbf16>
    %cst_122 = arith.constant dense<0.000000e+00> : vector<5x128xf32>
    %330 = tpu.matmul %327, %329, %cst_122 {dimension_numbers = #tpu.dot_dimension_numbers<[1], [0], [0], [1], [0, 0, 1, 1], [], []>} : vector<5x128xbf16>, vector<128x128xbf16>, vector<5x128xf32> -> vector<5x128xf32>
    %c1_123 = arith.constant 1 : index
    %c0_124 = arith.constant 0 : index
    %c0_125 = arith.constant 0 : index
    %331 = vector.load %arg10[%c1_123, %c0_124, %c0_125] : memref<2x1x128xf32, #tpu.memory_space<vmem>>, vector<1x1x128xf32>
    %332 = vector.shape_cast %331 : vector<1x1x128xf32> to vector<1x128xf32>
    %333 = vector.broadcast %332 : vector<1x128xf32> to vector<5x128xf32>
    %334 = arith.addf %330, %333 : vector<5x128xf32>
    %335 = arith.addf %198, %334 : vector<5x128xf32>
    %c1_126 = arith.constant 1 : index
    %c0_127 = arith.constant 0 : index
    %c0_128 = arith.constant 0 : index
    %336 = vector.load %arg11[%c1_126, %c0_127, %c0_128] : memref<2x1x128xf32, #tpu.memory_space<vmem>>, vector<1x1x128xf32>
    %337 = vector.shape_cast %336 : vector<1x1x128xf32> to vector<1x128xf32>
    %c1_129 = arith.constant 1 : index
    %c0_130 = arith.constant 0 : index
    %c0_131 = arith.constant 0 : index
    %338 = vector.load %arg12[%c1_129, %c0_130, %c0_131] : memref<2x1x128xf32, #tpu.memory_space<vmem>>, vector<1x1x128xf32>
    %339 = vector.shape_cast %338 : vector<1x1x128xf32> to vector<1x128xf32>
    %cst_132 = arith.constant dense<0.000000e+00> : vector<5xf32>
    %340 = vector.multi_reduction <add>, %335, %cst_132 [1] : vector<5x128xf32> to vector<5xf32>
    %341 = vector.shape_cast %340 : vector<5xf32> to vector<5x1xf32>
    %cst_133 = arith.constant 1.280000e+02 : f32
    %342 = vector.broadcast %cst_133 : f32 to vector<5x1xf32>
    %343 = arith.divf %341, %342 : vector<5x1xf32>
    %344 = vector.broadcast %343 : vector<5x1xf32> to vector<5x128xf32>
    %345 = arith.subf %335, %344 : vector<5x128xf32>
    %346 = arith.mulf %345, %345 : vector<5x128xf32>
    %cst_134 = arith.constant dense<0.000000e+00> : vector<5xf32>
    %347 = vector.multi_reduction <add>, %346, %cst_134 [1] : vector<5x128xf32> to vector<5xf32>
    %348 = vector.shape_cast %347 : vector<5xf32> to vector<5x1xf32>
    %cst_135 = arith.constant 1.280000e+02 : f32
    %349 = vector.broadcast %cst_135 : f32 to vector<5x1xf32>
    %350 = arith.divf %348, %349 : vector<5x1xf32>
    %351 = vector.broadcast %343 : vector<5x1xf32> to vector<5x128xf32>
    %352 = arith.subf %335, %351 : vector<5x128xf32>
    %cst_136 = arith.constant 9.99999974E-6 : f32
    %353 = vector.broadcast %cst_136 : f32 to vector<5x1xf32>
    %354 = arith.addf %350, %353 : vector<5x1xf32>
    %355 = math.rsqrt %354 : vector<5x1xf32>
    %356 = vector.broadcast %355 : vector<5x1xf32> to vector<5x128xf32>
    %357 = arith.mulf %352, %356 : vector<5x128xf32>
    %358 = vector.broadcast %337 : vector<1x128xf32> to vector<5x128xf32>
    %359 = arith.mulf %357, %358 : vector<5x128xf32>
    %360 = vector.broadcast %339 : vector<1x128xf32> to vector<5x128xf32>
    %361 = arith.addf %359, %360 : vector<5x128xf32>
    %362 = arith.truncf %361 : vector<5x128xf32> to vector<5x128xbf16>
    %c1_137 = arith.constant 1 : index
    %c0_138 = arith.constant 0 : index
    %c0_139 = arith.constant 0 : index
    %363 = vector.load %arg13[%c1_137, %c0_138, %c0_139] : memref<2x128x512xbf16, #tpu.memory_space<vmem>>, vector<1x128x512xbf16>
    %364 = vector.shape_cast %363 : vector<1x128x512xbf16> to vector<128x512xbf16>
    %cst_140 = arith.constant dense<0.000000e+00> : vector<5x512xf32>
    %365 = tpu.matmul %362, %364, %cst_140 {dimension_numbers = #tpu.dot_dimension_numbers<[1], [0], [0], [1], [0, 0, 1, 1], [], []>} : vector<5x128xbf16>, vector<128x512xbf16>, vector<5x512xf32> -> vector<5x512xf32>
    %c1_141 = arith.constant 1 : index
    %c0_142 = arith.constant 0 : index
    %c0_143 = arith.constant 0 : index
    %366 = vector.load %arg14[%c1_141, %c0_142, %c0_143] : memref<2x1x512xf32, #tpu.memory_space<vmem>>, vector<1x1x512xf32>
    %367 = vector.shape_cast %366 : vector<1x1x512xf32> to vector<1x512xf32>
    %368 = vector.broadcast %367 : vector<1x512xf32> to vector<5x512xf32>
    %369 = arith.addf %365, %368 : vector<5x512xf32>
    %cst_144 = arith.constant 0.000000e+00 : f32
    %370 = vector.broadcast %cst_144 : f32 to vector<5x512xf32>
    %371 = arith.maximumf %369, %370 : vector<5x512xf32>
    %372 = arith.truncf %371 : vector<5x512xf32> to vector<5x512xbf16>
    %c1_145 = arith.constant 1 : index
    %c0_146 = arith.constant 0 : index
    %c0_147 = arith.constant 0 : index
    %373 = vector.load %arg15[%c1_145, %c0_146, %c0_147] : memref<2x512x128xbf16, #tpu.memory_space<vmem>>, vector<1x512x128xbf16>
    %374 = vector.shape_cast %373 : vector<1x512x128xbf16> to vector<512x128xbf16>
    %cst_148 = arith.constant dense<0.000000e+00> : vector<5x128xf32>
    %375 = tpu.matmul %372, %374, %cst_148 {dimension_numbers = #tpu.dot_dimension_numbers<[1], [0], [0], [1], [0, 0, 1, 1], [], []>} : vector<5x512xbf16>, vector<512x128xbf16>, vector<5x128xf32> -> vector<5x128xf32>
    %c1_149 = arith.constant 1 : index
    %c0_150 = arith.constant 0 : index
    %c0_151 = arith.constant 0 : index
    %376 = vector.load %arg16[%c1_149, %c0_150, %c0_151] : memref<2x1x128xf32, #tpu.memory_space<vmem>>, vector<1x1x128xf32>
    %377 = vector.shape_cast %376 : vector<1x1x128xf32> to vector<1x128xf32>
    %378 = vector.broadcast %377 : vector<1x128xf32> to vector<5x128xf32>
    %379 = arith.addf %375, %378 : vector<5x128xf32>
    %380 = arith.addf %335, %379 : vector<5x128xf32>
    %381 = vector.extract_strided_slice %380 {offsets = [0, 0], sizes = [1, 128], strides = [1, 1]} : vector<5x128xf32> to vector<1x128xf32>
    %c0_152 = arith.constant 0 : index
    %c0_153 = arith.constant 0 : index
    %382 = vector.load %arg17[%c0_152, %c0_153] : memref<1x128xf32, #tpu.memory_space<vmem>>, vector<1x128xf32>
    %c0_154 = arith.constant 0 : index
    %c0_155 = arith.constant 0 : index
    %383 = vector.load %arg18[%c0_154, %c0_155] : memref<1x128xf32, #tpu.memory_space<vmem>>, vector<1x128xf32>
    %cst_156 = arith.constant dense<0.000000e+00> : vector<1xf32>
    %384 = vector.multi_reduction <add>, %381, %cst_156 [1] : vector<1x128xf32> to vector<1xf32>
    %385 = vector.shape_cast %384 : vector<1xf32> to vector<1x1xf32>
    %cst_157 = arith.constant 1.280000e+02 : f32
    %386 = vector.broadcast %cst_157 : f32 to vector<1x1xf32>
    %387 = arith.divf %385, %386 : vector<1x1xf32>
    %388 = vector.broadcast %387 : vector<1x1xf32> to vector<1x128xf32>
    %389 = arith.subf %381, %388 : vector<1x128xf32>
    %390 = arith.mulf %389, %389 : vector<1x128xf32>
    %cst_158 = arith.constant dense<0.000000e+00> : vector<1xf32>
    %391 = vector.multi_reduction <add>, %390, %cst_158 [1] : vector<1x128xf32> to vector<1xf32>
    %392 = vector.shape_cast %391 : vector<1xf32> to vector<1x1xf32>
    %cst_159 = arith.constant 1.280000e+02 : f32
    %393 = vector.broadcast %cst_159 : f32 to vector<1x1xf32>
    %394 = arith.divf %392, %393 : vector<1x1xf32>
    %395 = vector.broadcast %387 : vector<1x1xf32> to vector<1x128xf32>
    %396 = arith.subf %381, %395 : vector<1x128xf32>
    %cst_160 = arith.constant 9.99999974E-6 : f32
    %397 = vector.broadcast %cst_160 : f32 to vector<1x1xf32>
    %398 = arith.addf %394, %397 : vector<1x1xf32>
    %399 = math.rsqrt %398 : vector<1x1xf32>
    %400 = vector.broadcast %399 : vector<1x1xf32> to vector<1x128xf32>
    %401 = arith.mulf %396, %400 : vector<1x128xf32>
    %402 = arith.mulf %401, %382 : vector<1x128xf32>
    %403 = arith.addf %402, %383 : vector<1x128xf32>
    %404 = arith.truncf %403 : vector<1x128xf32> to vector<1x128xbf16>
    %c0_161 = arith.constant 0 : index
    %c0_162 = arith.constant 0 : index
    %405 = vector.load %arg19[%c0_161, %c0_162] : memref<128x128xbf16, #tpu.memory_space<vmem>>, vector<128x128xbf16>
    %cst_163 = arith.constant dense<0.000000e+00> : vector<1x128xf32>
    %406 = tpu.matmul %404, %405, %cst_163 {dimension_numbers = #tpu.dot_dimension_numbers<[1], [0], [0], [1], [0, 0, 1, 1], [], []>} : vector<1x128xbf16>, vector<128x128xbf16>, vector<1x128xf32> -> vector<1x128xf32>
    %c0_164 = arith.constant 0 : index
    %c0_165 = arith.constant 0 : index
    %407 = vector.load %arg20[%c0_164, %c0_165] : memref<1x128xf32, #tpu.memory_space<vmem>>, vector<1x128xf32>
    %408 = arith.addf %406, %407 : vector<1x128xf32>
    %c0_166 = arith.constant 0 : index
    %c0_167 = arith.constant 0 : index
    %c0_168 = arith.constant 0 : index
    %409 = vector.load %arg21[%c0_166, %c0_167, %c0_168] : memref<1x1x128xf32, #tpu.memory_space<vmem>>, vector<1x1x128xf32>
    %410 = vector.shape_cast %409 : vector<1x1x128xf32> to vector<1x128xf32>
    %411 = vector.shape_cast %408 : vector<1x128xf32> to vector<1x1x128xf32>
    tpu.vector_store %arg21[%c0_166, %c0_167, %c0_168], %411 {strides = array<i32>} : memref<1x1x128xf32, #tpu.memory_space<vmem>>, vector<1x1x128xf32>,
    return
  }
  func.func @transform_0(%arg0: i32) -> (i32, i32, i32) {
    %c0_i32 = arith.constant 0 : i32
    %c0_i32_0 = arith.constant 0 : i32
    %c0_i32_1 = arith.constant 0 : i32
    return %arg0, %c0_i32, %c0_i32_0 : i32, i32, i32
  }
  func.func @transform_1(%arg0: i32) -> (i32, i32) {
    %c0_i32 = arith.constant 0 : i32
    %c0_i32_0 = arith.constant 0 : i32
    %c0_i32_1 = arith.constant 0 : i32
    return %c0_i32, %c0_i32_0 : i32, i32
  }
  func.func @transform_2(%arg0: i32) -> (i32, i32) {
    %c0_i32 = arith.constant 0 : i32
    %c0_i32_0 = arith.constant 0 : i32
    %c0_i32_1 = arith.constant 0 : i32
    return %c0_i32, %c0_i32_0 : i32, i32
  }
  func.func @transform_3(%arg0: i32) -> (i32, i32) {
    %c0_i32 = arith.constant 0 : i32
    %c0_i32_0 = arith.constant 0 : i32
    %c0_i32_1 = arith.constant 0 : i32
    return %c0_i32, %c0_i32_0 : i32, i32
  }
  func.func @transform_4(%arg0: i32) -> (i32, i32, i32) {
    %c0_i32 = arith.constant 0 : i32
    %c0_i32_0 = arith.constant 0 : i32
    %c0_i32_1 = arith.constant 0 : i32
    %c0_i32_2 = arith.constant 0 : i32
    return %c0_i32, %c0_i32_0, %c0_i32_1 : i32, i32, i32
  }
  func.func @transform_5(%arg0: i32) -> (i32, i32, i32) {
    %c0_i32 = arith.constant 0 : i32
    %c0_i32_0 = arith.constant 0 : i32
    %c0_i32_1 = arith.constant 0 : i32
    %c0_i32_2 = arith.constant 0 : i32
    return %c0_i32, %c0_i32_0, %c0_i32_1 : i32, i32, i32
  }
  func.func @transform_6(%arg0: i32) -> (i32, i32, i32) {
    %c0_i32 = arith.constant 0 : i32
    %c0_i32_0 = arith.constant 0 : i32
    %c0_i32_1 = arith.constant 0 : i32
    %c0_i32_2 = arith.constant 0 : i32
    return %c0_i32, %c0_i32_0, %c0_i32_1 : i32, i32, i32
  }
  func.func @transform_7(%arg0: i32) -> (i32, i32, i32) {
    %c0_i32 = arith.constant 0 : i32
    %c0_i32_0 = arith.constant 0 : i32
    %c0_i32_1 = arith.constant 0 : i32
    %c0_i32_2 = arith.constant 0 : i32
    return %c0_i32, %c0_i32_0, %c0_i32_1 : i32, i32, i32
  }
  func.func @transform_8(%arg0: i32) -> (i32, i32, i32) {
    %c0_i32 = arith.constant 0 : i32
    %c0_i32_0 = arith.constant 0 : i32
    %c0_i32_1 = arith.constant 0 : i32
    %c0_i32_2 = arith.constant 0 : i32
    return %c0_i32, %c0_i32_0, %c0_i32_1 : i32, i32, i32
  }
  func.func @transform_9(%arg0: i32) -> (i32, i32, i32) {
    %c0_i32 = arith.constant 0 : i32
    %c0_i32_0 = arith.constant 0 : i32
    %c0_i32_1 = arith.constant 0 : i32
    %c0_i32_2 = arith.constant 0 : i32
    return %c0_i32, %c0_i32_0, %c0_i32_1 : i32, i32, i32
  }
  func.func @transform_10(%arg0: i32) -> (i32, i32, i32) {
    %c0_i32 = arith.constant 0 : i32
    %c0_i32_0 = arith.constant 0 : i32
    %c0_i32_1 = arith.constant 0 : i32
    %c0_i32_2 = arith.constant 0 : i32
    return %c0_i32, %c0_i32_0, %c0_i32_1 : i32, i32, i32
  }
  func.func @transform_11(%arg0: i32) -> (i32, i32, i32) {
    %c0_i32 = arith.constant 0 : i32
    %c0_i32_0 = arith.constant 0 : i32
    %c0_i32_1 = arith.constant 0 : i32
    %c0_i32_2 = arith.constant 0 : i32
    return %c0_i32, %c0_i32_0, %c0_i32_1 : i32, i32, i32
  }
  func.func @transform_12(%arg0: i32) -> (i32, i32, i32) {
    %c0_i32 = arith.constant 0 : i32
    %c0_i32_0 = arith.constant 0 : i32
    %c0_i32_1 = arith.constant 0 : i32
    %c0_i32_2 = arith.constant 0 : i32
    return %c0_i32, %c0_i32_0, %c0_i32_1 : i32, i32, i32
  }
  func.func @transform_13(%arg0: i32) -> (i32, i32, i32) {
    %c0_i32 = arith.constant 0 : i32
    %c0_i32_0 = arith.constant 0 : i32
    %c0_i32_1 = arith.constant 0 : i32
    %c0_i32_2 = arith.constant 0 : i32
    return %c0_i32, %c0_i32_0, %c0_i32_1 : i32, i32, i32
  }
  func.func @transform_14(%arg0: i32) -> (i32, i32, i32) {
    %c0_i32 = arith.constant 0 : i32
    %c0_i32_0 = arith.constant 0 : i32
    %c0_i32_1 = arith.constant 0 : i32
    %c0_i32_2 = arith.constant 0 : i32
    return %c0_i32, %c0_i32_0, %c0_i32_1 : i32, i32, i32
  }
  func.func @transform_15(%arg0: i32) -> (i32, i32, i32) {
    %c0_i32 = arith.constant 0 : i32
    %c0_i32_0 = arith.constant 0 : i32
    %c0_i32_1 = arith.constant 0 : i32
    %c0_i32_2 = arith.constant 0 : i32
    return %c0_i32, %c0_i32_0, %c0_i32_1 : i32, i32, i32
  }
  func.func @transform_16(%arg0: i32) -> (i32, i32) {
    %c0_i32 = arith.constant 0 : i32
    %c0_i32_0 = arith.constant 0 : i32
    %c0_i32_1 = arith.constant 0 : i32
    return %c0_i32, %c0_i32_0 : i32, i32
  }
  func.func @transform_17(%arg0: i32) -> (i32, i32) {
    %c0_i32 = arith.constant 0 : i32
    %c0_i32_0 = arith.constant 0 : i32
    %c0_i32_1 = arith.constant 0 : i32
    return %c0_i32, %c0_i32_0 : i32, i32
  }
  func.func @transform_18(%arg0: i32) -> (i32, i32) {
    %c0_i32 = arith.constant 0 : i32
    %c0_i32_0 = arith.constant 0 : i32
    %c0_i32_1 = arith.constant 0 : i32
    return %c0_i32, %c0_i32_0 : i32, i32
  }
  func.func @transform_19(%arg0: i32) -> (i32, i32) {
    %c0_i32 = arith.constant 0 : i32
    %c0_i32_0 = arith.constant 0 : i32
    %c0_i32_1 = arith.constant 0 : i32
    return %c0_i32, %c0_i32_0 : i32, i32
  }
  func.func @transform_20(%arg0: i32) -> (i32, i32, i32) {
    %c0_i32 = arith.constant 0 : i32
    %c0_i32_0 = arith.constant 0 : i32
    %c0_i32_1 = arith.constant 0 : i32
    return %arg0, %c0_i32, %c0_i32_0 : i32, i32, i32
  }
}

</mosaic_0001>

<llo_original>
// kernel: vit_forward.1
$region0: #{vit_forward.1}
  #allocation0 [shape = 'u32[]', space=smem, size = 0x4, offset = 0x4, fixed_abs, tag = 'smem constant byte address 0x4 - core index']
  #allocation1 [shape = 'u32[144,128]{1,0:T(1,128)}', space=vmem, size = 0x12000, scoped, tag = 'internal scratch']
  %s0 = inlined_call_operand.vmem [shape: f32[2,4,256], index: 0, kind: input, shape index: {}]
  %s1 = inlined_call_operand.vmem [shape: bf16[256,128], index: 1, kind: input, shape index: {}]
  %s2 = inlined_call_operand.vmem [shape: f32[1,128], index: 2, kind: input, shape index: {}]
  %s3 = inlined_call_operand.vmem [shape: f32[5,128], index: 3, kind: input, shape index: {}]
  %s4 = inlined_call_operand.vmem [shape: f32[2,1,128], index: 4, kind: input, shape index: {}]
  %s5 = inlined_call_operand.vmem [shape: f32[2,1,128], index: 5, kind: input, shape index: {}]
  %s6 = inlined_call_operand.vmem [shape: bf16[2,128,384], index: 6, kind: input, shape index: {}]
  %s7 = inlined_call_operand.vmem [shape: f32[2,1,384], index: 7, kind: input, shape index: {}]
  %s8 = inlined_call_operand.hbm [shape: bf16[2,128,128], index: 8, kind: input, shape index: {}]
  %s9 = inlined_call_operand.vmem [shape: f32[2,1,128], index: 9, kind: input, shape index: {}]
  %s10 = inlined_call_operand.vmem [shape: f32[2,1,128], index: 10, kind: input, shape index: {}]
  %s11 = inlined_call_operand.vmem [shape: f32[2,1,128], index: 11, kind: input, shape index: {}]
  %s12 = inlined_call_operand.vmem [shape: bf16[2,128,512], index: 12, kind: input, shape index: {}]
  %s13 = inlined_call_operand.vmem [shape: f32[2,1,512], index: 13, kind: input, shape index: {}]
  %s14 = inlined_call_operand.vmem [shape: bf16[2,512,128], index: 14, kind: input, shape index: {}]
  %s15 = inlined_call_operand.vmem [shape: f32[2,1,128], index: 15, kind: input, shape index: {}]
  %s16 = inlined_call_operand.vmem [shape: f32[1,128], index: 16, kind: input, shape index: {}]
  %s17 = inlined_call_operand.vmem [shape: f32[1,128], index: 17, kind: input, shape index: {}]
  %s18 = inlined_call_operand.hbm [shape: bf16[128,128], index: 18, kind: input, shape index: {}]
  %s19 = inlined_call_operand.vmem [shape: f32[1,128], index: 19, kind: input, shape index: {}]
  %s20 = inlined_call_operand.hbm [shape: f32[2,1,128], index: 20, kind: output, shape index: {}]
  %s21 = sld [smem:[#allocation0]]
  $region121: #{vit_forward.1} parent=0
    _
  %s23 = ssub.s32 1, %s21
  %s24 = scalar_select 0, %s23, %s21
  $region1: #{vit_forward.1} parent=0
    #allocation2 [shape = 'u8[65536]{0}', space=vmem, size = 0x10000, scoped, tag = 'input window, operand 8, single buffered']
    #allocation3 [shape = 's32[2]{0}', space=sflag, size = 0x8, scoped, tag = 'scoped memory for vit_forward.1']
    #allocation4 [shape = 's32[2]{0}', space=sflag, size = 0x8, scoped, tag = 'scoped memory for vit_forward.1']
    #allocation5 [shape = 'u8[32768]{0}', space=vmem, size = 0x8000, scoped, tag = 'input window, operand 18, single buffered']
    #allocation6 [shape = 's32[1]{0}', space=sflag, size = 0x4, scoped, tag = 'scoped memory for vit_forward.1']
    #allocation7 [shape = 'u8[1024]{0}', space=vmem, size = 0x400, scoped, tag = 'output window, operand 0']
    %25 = vsyncpa [#allocation3], 0
    %26 = vsyncpa [#allocation6], 0
    %27 = vsyncpa [#allocation4], 0
    %s28 = scalar_lea.sflag [#allocation4], 1
    %29 = vsyncpa %s28, 0
    loop: start=0, step=1, limit=4
    $region2: #{vit_forward.1} parent=1 // loop_pre_header
      _
    $region3: #{vit_forward.1} parent=1 // loop_header
      %s31 = sphi 0, %s35
      %p32 = scmp.ge.s32.totalorder %s31, 4
      %s41 = sphi 0, %s43
      %s44 = sphi 0, %s41
      %s45 = sphi 0, %s44
      %s61 = sphi 0, %s45
      %s65 = sphi 0, %s65
      %s67 = sphi 0, %s65
      %s68 = sphi 0, %s67
      %s82 = sphi 0, %s68
      %s86 = sphi 0, %s86
      %s88 = sphi 0, %s86
      %s89 = sphi 0, %s88
      %s103 = sphi 0, %s89
      %s107 = sphi 0, %s107
      %s109 = sphi 0, %s107
      %s110 = sphi 0, %s109
      %s124 = sphi 0, %s110
      %s128 = sphi 0, %s128
      %s130 = sphi 0, %s128
      %s131 = sphi 0, %s130
      %s145 = sphi 0, %s131
      %s149 = sphi 0, %s149
      %s151 = sphi 0, %s149
      %s152 = sphi 0, %s151
      %s166 = sphi 0, %s152
      %s170 = sphi 0, %s170
      %s172 = sphi 0, %s170
      %s173 = sphi 0, %s172
      %s187 = sphi 0, %s173
      %s191 = sphi 0, %s191
      %s193 = sphi 0, %s191
      %s194 = sphi 0, %s193
      %s208 = sphi 0, %s194
      %s212 = sphi 0, %s212
      %s214 = sphi 0, %s212
      %s215 = sphi 0, %s214
      %s229 = sphi 0, %s215
      %s233 = sphi 0, %s233
      %s235 = sphi 0, %s233
      %s236 = sphi 0, %s235
      %s250 = sphi 0, %s236
      %s254 = sphi 0, %s254
      %s256 = sphi 0, %s254
      %s257 = sphi 0, %s256
      %s271 = sphi 0, %s257
      %s275 = sphi 0, %s275
      %s277 = sphi 0, %s275
      %s278 = sphi 0, %s277
      %s292 = sphi 0, %s278
      %s296 = sphi 0, %s296
      %s298 = sphi 0, %s296
      %s299 = sphi 0, %s298
      %s313 = sphi 0, %s299
      %s317 = sphi 0, %s317
      %s319 = sphi 0, %s317
      %s320 = sphi 0, %s319
      %s334 = sphi 0, %s320
      %s338 = sphi 0, %s338
      %s340 = sphi 0, %s338
      %s341 = sphi 0, %s340
      %s355 = sphi 0, %s341
      %s359 = sphi 0, %s359
      %s361 = sphi 0, %s359
      %s362 = sphi 0, %s361
      %s376 = sphi 0, %s362
      %s380 = sphi 0, %s380
      %s382 = sphi 0, %s380
      %s383 = sphi 0, %s382
      %s397 = sphi 0, %s383
      %s401 = sphi 0, %s401
      %s403 = sphi 0, %s401
      %s404 = sphi 0, %s403
      %s418 = sphi 0, %s404
      %s422 = sphi 0, %s422
      %s424 = sphi 0, %s422
      %s425 = sphi 0, %s424
      %s439 = sphi 0, %s425
      %s443 = sphi 0, %s443
      %s445 = sphi 0, %s443
      %s446 = sphi 0, %s445
      %s460 = sphi 0, %s446
      %s466 = sphi 0, %s468
      %s469 = sphi 0, %s466
      %s470 = sphi 0, %s469
      %s486 = sphi 0, %s470
    $region4: #{vit_forward.1} parent=1 // loop_header_branch
      %34 = sbr.rel (%p32) target = $region8
    $region5: #{vit_forward.1} parent=1 // loop_body
      %s36 = ssub.s32 %s31, 1
      %s37 = ssub.s32 %s31, 2
      %s38 = sadd.s32 %s31, 1
      %s39 = ssub.s32 %s31, %s38
      %p40 = scmp.eq.s32.totalorder %s39, 0
      %s42 = sadd.s32 %s41, 1
      %s43 = scalar_select %p40, %s41, %s42
      %p46 = pneg %p40
      %p47 = scmp.eq.s32.totalorder %s31, 1
      %p48 = por %p46, %p47
      %p49 = scmp.ne.s32.totalorder %s41, %s44
      %p50 = scmp.eq.s32.totalorder %s31, 0
      %p51 = por %p49, %p50
      %p52 = scmp.ne.s32.totalorder %s41, %s44
      %p53 = scmp.eq.s32.totalorder %s36, 1
      %p54 = por %p52, %p53
      %p55 = scmp.ne.s32.totalorder %s44, %s45
      %p56 = scmp.eq.s32.totalorder %s36, 0
      %p57 = por %p55, %p56
      %p58 = scmp.ne.s32.totalorder %s44, %s45
      %p59 = scmp.eq.s32.totalorder %s37, 1
      %p60 = por %p58, %p59
      %p62 = scmp.ne.s32.totalorder %s45, %s61
      %p63 = scmp.eq.s32.totalorder %s37, 0
      %p64 = por %p62, %p63
      %s66 = sadd.s32 %s65, 1
      %p69 = scmp.eq.s32.totalorder %s31, 1
      %p70 = scmp.ne.s32.totalorder %s65, %s67
      %p71 = scmp.eq.s32.totalorder %s31, 0
      %p72 = por %p70, %p71
      %p73 = scmp.ne.s32.totalorder %s65, %s67
      %p74 = scmp.eq.s32.totalorder %s36, 1
      %p75 = por %p73, %p74
      %p76 = scmp.ne.s32.totalorder %s67, %s68
      %p77 = scmp.eq.s32.totalorder %s36, 0
      %p78 = por %p76, %p77
      %p79 = scmp.ne.s32.totalorder %s67, %s68
      %p80 = scmp.eq.s32.totalorder %s37, 1
      %p81 = por %p79, %p80
      %p83 = scmp.ne.s32.totalorder %s68, %s82
      %p84 = scmp.eq.s32.totalorder %s37, 0
      %p85 = por %p83, %p84
      %s87 = sadd.s32 %s86, 1
      %p90 = scmp.eq.s32.totalorder %s31, 1
      %p91 = scmp.ne.s32.totalorder %s86, %s88
      %p92 = scmp.eq.s32.totalorder %s31, 0
      %p93 = por %p91, %p92
      %p94 = scmp.ne.s32.totalorder %s86, %s88
      %p95 = scmp.eq.s32.totalorder %s36, 1
      %p96 = por %p94, %p95
      %p97 = scmp.ne.s32.totalorder %s88, %s89
      %p98 = scmp.eq.s32.totalorder %s36, 0
      %p99 = por %p97, %p98
      %p100 = scmp.ne.s32.totalorder %s88, %s89
      %p101 = scmp.eq.s32.totalorder %s37, 1
      %p102 = por %p100, %p101
      %p104 = scmp.ne.s32.totalorder %s89, %s103
      %p105 = scmp.eq.s32.totalorder %s37, 0
      %p106 = por %p104, %p105
      %s108 = sadd.s32 %s107, 1
      %p111 = scmp.eq.s32.totalorder %s31, 1
      %p112 = scmp.ne.s32.totalorder %s107, %s109
      %p113 = scmp.eq.s32.totalorder %s31, 0
      %p114 = por %p112, %p113
      %p115 = scmp.ne.s32.totalorder %s107, %s109
      %p116 = scmp.eq.s32.totalorder %s36, 1
      %p117 = por %p115, %p116
      %p118 = scmp.ne.s32.totalorder %s109, %s110
      %p119 = scmp.eq.s32.totalorder %s36, 0
      %p120 = por %p118, %p119
      %p121 = scmp.ne.s32.totalorder %s109, %s110
      %p122 = scmp.eq.s32.totalorder %s37, 1
      %p123 = por %p121, %p122
      %p125 = scmp.ne.s32.totalorder %s110, %s124
      %p126 = scmp.eq.s32.totalorder %s37, 0
      %p127 = por %p125, %p126
      %s129 = sadd.s32 %s128, 1
      %p132 = scmp.eq.s32.totalorder %s31, 1
      %p133 = scmp.ne.s32.totalorder %s128, %s130
      %p134 = scmp.eq.s32.totalorder %s31, 0
      %p135 = por %p133, %p134
      %p136 = scmp.ne.s32.totalorder %s128, %s130
      %p137 = scmp.eq.s32.totalorder %s36, 1
      %p138 = por %p136, %p137
      %p139 = scmp.ne.s32.totalorder %s130, %s131
      %p140 = scmp.eq.s32.totalorder %s36, 0
      %p141 = por %p139, %p140
      %p142 = scmp.ne.s32.totalorder %s130, %s131
      %p143 = scmp.eq.s32.totalorder %s37, 1
      %p144 = por %p142, %p143
      %p146 = scmp.ne.s32.totalorder %s131, %s145
      %p147 = scmp.eq.s32.totalorder %s37, 0
      %p148 = por %p146, %p147
      %s150 = sadd.s32 %s149, 1
      %p153 = scmp.eq.s32.totalorder %s31, 1
      %p154 = scmp.ne.s32.totalorder %s149, %s151
      %p155 = scmp.eq.s32.totalorder %s31, 0
      %p156 = por %p154, %p155
      %p157 = scmp.ne.s32.totalorder %s149, %s151
      %p158 = scmp.eq.s32.totalorder %s36, 1
      %p159 = por %p157, %p158
      %p160 = scmp.ne.s32.totalorder %s151, %s152
      %p161 = scmp.eq.s32.totalorder %s36, 0
      %p162 = por %p160, %p161
      %p163 = scmp.ne.s32.totalorder %s151, %s152
      %p164 = scmp.eq.s32.totalorder %s37, 1
      %p165 = por %p163, %p164
      %p167 = scmp.ne.s32.totalorder %s152, %s166
      %p168 = scmp.eq.s32.totalorder %s37, 0
      %p169 = por %p167, %p168
      %s171 = sadd.s32 %s170, 1
      %p174 = scmp.eq.s32.totalorder %s31, 1
      %p175 = scmp.ne.s32.totalorder %s170, %s172
      %p176 = scmp.eq.s32.totalorder %s31, 0
      %p177 = por %p175, %p176
      %p178 = scmp.ne.s32.totalorder %s170, %s172
      %p179 = scmp.eq.s32.totalorder %s36, 1
      %p180 = por %p178, %p179
      %p181 = scmp.ne.s32.totalorder %s172, %s173
      %p182 = scmp.eq.s32.totalorder %s36, 0
      %p183 = por %p181, %p182
      %p184 = scmp.ne.s32.totalorder %s172, %s173
      %p185 = scmp.eq.s32.totalorder %s37, 1
      %p186 = por %p184, %p185
      %p188 = scmp.ne.s32.totalorder %s173, %s187
      %p189 = scmp.eq.s32.totalorder %s37, 0
      %p190 = por %p188, %p189
      %s192 = sadd.s32 %s191, 1
      %p195 = scmp.eq.s32.totalorder %s31, 1
      %p196 = scmp.ne.s32.totalorder %s191, %s193
      %p197 = scmp.eq.s32.totalorder %s31, 0
      %p198 = por %p196, %p197
      %p199 = scmp.ne.s32.totalorder %s191, %s193
      %p200 = scmp.eq.s32.totalorder %s36, 1
      %p201 = por %p199, %p200
      %p202 = scmp.ne.s32.totalorder %s193, %s194
      %p203 = scmp.eq.s32.totalorder %s36, 0
      %p204 = por %p202, %p203
      %p205 = scmp.ne.s32.totalorder %s193, %s194
      %p206 = scmp.eq.s32.totalorder %s37, 1
      %p207 = por %p205, %p206
      %p209 = scmp.ne.s32.totalorder %s194, %s208
      %p210 = scmp.eq.s32.totalorder %s37, 0
      %p211 = por %p209, %p210
      %s213 = sadd.s32 %s212, 1
      %p216 = scmp.eq.s32.totalorder %s31, 1
      %p217 = scmp.ne.s32.totalorder %s212, %s214
      %p218 = scmp.eq.s32.totalorder %s31, 0
      %p219 = por %p217, %p218
      %p220 = scmp.ne.s32.totalorder %s212, %s214
      %p221 = scmp.eq.s32.totalorder %s36, 1
      %p222 = por %p220, %p221
      %p223 = scmp.ne.s32.totalorder %s214, %s215
      %p224 = scmp.eq.s32.totalorder %s36, 0
      %p225 = por %p223, %p224
      %p226 = scmp.ne.s32.totalorder %s214, %s215
      %p227 = scmp.eq.s32.totalorder %s37, 1
      %p228 = por %p226, %p227
      %p230 = scmp.ne.s32.totalorder %s215, %s229
      %p231 = scmp.eq.s32.totalorder %s37, 0
      %p232 = por %p230, %p231
      %s234 = sadd.s32 %s233, 1
      %p237 = scmp.eq.s32.totalorder %s31, 1
      %p238 = scmp.ne.s32.totalorder %s233, %s235
      %p239 = scmp.eq.s32.totalorder %s31, 0
      %p240 = por %p238, %p239
      %p241 = scmp.ne.s32.totalorder %s233, %s235
      %p242 = scmp.eq.s32.totalorder %s36, 1
      %p243 = por %p241, %p242
      %p244 = scmp.ne.s32.totalorder %s235, %s236
      %p245 = scmp.eq.s32.totalorder %s36, 0
      %p246 = por %p244, %p245
      %p247 = scmp.ne.s32.totalorder %s235, %s236
      %p248 = scmp.eq.s32.totalorder %s37, 1
      %p249 = por %p247, %p248
      %p251 = scmp.ne.s32.totalorder %s236, %s250
      %p252 = scmp.eq.s32.totalorder %s37, 0
      %p253 = por %p251, %p252
      %s255 = sadd.s32 %s254, 1
      %p258 = scmp.eq.s32.totalorder %s31, 1
      %p259 = scmp.ne.s32.totalorder %s254, %s256
      %p260 = scmp.eq.s32.totalorder %s31, 0
      %p261 = por %p259, %p260
      %p262 = scmp.ne.s32.totalorder %s254, %s256
      %p263 = scmp.eq.s32.totalorder %s36, 1
      %p264 = por %p262, %p263
      %p265 = scmp.ne.s32.totalorder %s256, %s257
      %p266 = scmp.eq.s32.totalorder %s36, 0
      %p267 = por %p265, %p266
      %p268 = scmp.ne.s32.totalorder %s256, %s257
      %p269 = scmp.eq.s32.totalorder %s37, 1
      %p270 = por %p268, %p269
      %p272 = scmp.ne.s32.totalorder %s257, %s271
      %p273 = scmp.eq.s32.totalorder %s37, 0
      %p274 = por %p272, %p273
      %s276 = sadd.s32 %s275, 1
      %p279 = scmp.eq.s32.totalorder %s31, 1
      %p280 = scmp.ne.s32.totalorder %s275, %s277
      %p281 = scmp.eq.s32.totalorder %s31, 0
      %p282 = por %p280, %p281
      %p283 = scmp.ne.s32.totalorder %s275, %s277
      %p284 = scmp.eq.s32.totalorder %s36, 1
      %p285 = por %p283, %p284
      %p286 = scmp.ne.s32.totalorder %s277, %s278
      %p287 = scmp.eq.s32.totalorder %s36, 0
      %p288 = por %p286, %p287
      %p289 = scmp.ne.s32.totalorder %s277, %s278
      %p290 = scmp.eq.s32.totalorder %s37, 1
      %p291 = por %p289, %p290
      %p293 = scmp.ne.s32.totalorder %s278, %s292
      %p294 = scmp.eq.s32.totalorder %s37, 0
      %p295 = por %p293, %p294
      %s297 = sadd.s32 %s296, 1
      %p300 = scmp.eq.s32.totalorder %s31, 1
      %p301 = scmp.ne.s32.totalorder %s296, %s298
      %p302 = scmp.eq.s32.totalorder %s31, 0
      %p303 = por %p301, %p302
      %p304 = scmp.ne.s32.totalorder %s296, %s298
      %p305 = scmp.eq.s32.totalorder %s36, 1
      %p306 = por %p304, %p305
      %p307 = scmp.ne.s32.totalorder %s298, %s299
      %p308 = scmp.eq.s32.totalorder %s36, 0
      %p309 = por %p307, %p308
      %p310 = scmp.ne.s32.totalorder %s298, %s299
      %p311 = scmp.eq.s32.totalorder %s37, 1
      %p312 = por %p310, %p311
      %p314 = scmp.ne.s32.totalorder %s299, %s313
      %p315 = scmp.eq.s32.totalorder %s37, 0
      %p316 = por %p314, %p315
      %s318 = sadd.s32 %s317, 1
      %p321 = scmp.eq.s32.totalorder %s31, 1
      %p322 = scmp.ne.s32.totalorder %s317, %s319
      %p323 = scmp.eq.s32.totalorder %s31, 0
      %p324 = por %p322, %p323
      %p325 = scmp.ne.s32.totalorder %s317, %s319
      %p326 = scmp.eq.s32.totalorder %s36, 1
      %p327 = por %p325, %p326
      %p328 = scmp.ne.s32.totalorder %s319, %s320
      %p329 = scmp.eq.s32.totalorder %s36, 0
      %p330 = por %p328, %p329
      %p331 = scmp.ne.s32.totalorder %s319, %s320
      %p332 = scmp.eq.s32.totalorder %s37, 1
      %p333 = por %p331, %p332
      %p335 = scmp.ne.s32.totalorder %s320, %s334
      %p336 = scmp.eq.s32.totalorder %s37, 0
      %p337 = por %p335, %p336
      %s339 = sadd.s32 %s338, 1
      %p342 = scmp.eq.s32.totalorder %s31, 1
      %p343 = scmp.ne.s32.totalorder %s338, %s340
      %p344 = scmp.eq.s32.totalorder %s31, 0
      %p345 = por %p343, %p344
      %p346 = scmp.ne.s32.totalorder %s338, %s340
      %p347 = scmp.eq.s32.totalorder %s36, 1
      %p348 = por %p346, %p347
      %p349 = scmp.ne.s32.totalorder %s340, %s341
      %p350 = scmp.eq.s32.totalorder %s36, 0
      %p351 = por %p349, %p350
      %p352 = scmp.ne.s32.totalorder %s340, %s341
      %p353 = scmp.eq.s32.totalorder %s37, 1
      %p354 = por %p352, %p353
      %p356 = scmp.ne.s32.totalorder %s341, %s355
      %p357 = scmp.eq.s32.totalorder %s37, 0
      %p358 = por %p356, %p357
      %s360 = sadd.s32 %s359, 1
      %p363 = scmp.eq.s32.totalorder %s31, 1
      %p364 = scmp.ne.s32.totalorder %s359, %s361
      %p365 = scmp.eq.s32.totalorder %s31, 0
      %p366 = por %p364, %p365
      %p367 = scmp.ne.s32.totalorder %s359, %s361
      %p368 = scmp.eq.s32.totalorder %s36, 1
      %p369 = por %p367, %p368
      %p370 = scmp.ne.s32.totalorder %s361, %s362
      %p371 = scmp.eq.s32.totalorder %s36, 0
      %p372 = por %p370, %p371
      %p373 = scmp.ne.s32.totalorder %s361, %s362
      %p374 = scmp.eq.s32.totalorder %s37, 1
      %p375 = por %p373, %p374
      %p377 = scmp.ne.s32.totalorder %s362, %s376
      %p378 = scmp.eq.s32.totalorder %s37, 0
      %p379 = por %p377, %p378
      %s381 = sadd.s32 %s380, 1
      %p384 = scmp.eq.s32.totalorder %s31, 1
      %p385 = scmp.ne.s32.totalorder %s380, %s382
      %p386 = scmp.eq.s32.totalorder %s31, 0
      %p387 = por %p385, %p386
      %p388 = scmp.ne.s32.totalorder %s380, %s382
      %p389 = scmp.eq.s32.totalorder %s36, 1
      %p390 = por %p388, %p389
      %p391 = scmp.ne.s32.totalorder %s382, %s383
      %p392 = scmp.eq.s32.totalorder %s36, 0
      %p393 = por %p391, %p392
      %p394 = scmp.ne.s32.totalorder %s382, %s383
      %p395 = scmp.eq.s32.totalorder %s37, 1
      %p396 = por %p394, %p395
      %p398 = scmp.ne.s32.totalorder %s383, %s397
      %p399 = scmp.eq.s32.totalorder %s37, 0
      %p400 = por %p398, %p399
      %s402 = sadd.s32 %s401, 1
      %p405 = scmp.eq.s32.totalorder %s31, 1
      %p406 = scmp.ne.s32.totalorder %s401, %s403
      %p407 = scmp.eq.s32.totalorder %s31, 0
      %p408 = por %p406, %p407
      %p409 = scmp.ne.s32.totalorder %s401, %s403
      %p410 = scmp.eq.s32.totalorder %s36, 1
      %p411 = por %p409, %p410
      %p412 = scmp.ne.s32.totalorder %s403, %s404
      %p413 = scmp.eq.s32.totalorder %s36, 0
      %p414 = por %p412, %p413
      %p415 = scmp.ne.s32.totalorder %s403, %s404
      %p416 = scmp.eq.s32.totalorder %s37, 1
      %p417 = por %p415, %p416
      %p419 = scmp.ne.s32.totalorder %s404, %s418
      %p420 = scmp.eq.s32.totalorder %s37, 0
      %p421 = por %p419, %p420
      %s423 = sadd.s32 %s422, 1
      %p426 = scmp.eq.s32.totalorder %s31, 1
      %p427 = scmp.ne.s32.totalorder %s422, %s424
      %p428 = scmp.eq.s32.totalorder %s31, 0
      %p429 = por %p427, %p428
      %p430 = scmp.ne.s32.totalorder %s422, %s424
      %p431 = scmp.eq.s32.totalorder %s36, 1
      %p432 = por %p430, %p431
      %p433 = scmp.ne.s32.totalorder %s424, %s425
      %p434 = scmp.eq.s32.totalorder %s36, 0
      %p435 = por %p433, %p434
      %p436 = scmp.ne.s32.totalorder %s424, %s425
      %p437 = scmp.eq.s32.totalorder %s37, 1
      %p438 = por %p436, %p437
      %p440 = scmp.ne.s32.totalorder %s425, %s439
      %p441 = scmp.eq.s32.totalorder %s37, 0
      %p442 = por %p440, %p441
      %s444 = sadd.s32 %s443, 1
      %p447 = scmp.eq.s32.totalorder %s31, 1
      %p448 = scmp.ne.s32.totalorder %s443, %s445
      %p449 = scmp.eq.s32.totalorder %s31, 0
      %p450 = por %p448, %p449
      %p451 = scmp.ne.s32.totalorder %s443, %s445
      %p452 = scmp.eq.s32.totalorder %s36, 1
      %p453 = por %p451, %p452
      %p454 = scmp.ne.s32.totalorder %s445, %s446
      %p455 = scmp.eq.s32.totalorder %s36, 0
      %p456 = por %p454, %p455
      %p457 = scmp.ne.s32.totalorder %s445, %s446
      %p458 = scmp.eq.s32.totalorder %s37, 1
      %p459 = por %p457, %p458
      %p461 = scmp.ne.s32.totalorder %s446, %s460
      %p462 = scmp.eq.s32.totalorder %s37, 0
      %p463 = por %p461, %p462
      %s464 = ssub.s32 %s31, %s38
      %p465 = scmp.eq.s32.totalorder %s464, 0
      %s467 = sadd.s32 %s466, 1
      %s468 = scalar_select %p465, %s466, %s467
      %p471 = pneg %p465
      %p472 = scmp.eq.s32.totalorder %s31, 1
      %p473 = por %p471, %p472
      %p474 = scmp.ne.s32.totalorder %s466, %s469
      %p475 = scmp.eq.s32.totalorder %s31, 0
      %p476 = por %p474, %p475
      %p477 = scmp.ne.s32.totalorder %s466, %s469
      %p478 = scmp.eq.s32.totalorder %s36, 1
      %p479 = por %p477, %p478
      %p480 = scmp.ne.s32.totalorder %s469, %s470
      %p481 = scmp.eq.s32.totalorder %s36, 0
      %p482 = por %p480, %p481
      %p483 = scmp.ne.s32.totalorder %s469, %s470
      %p484 = scmp.eq.s32.totalorder %s37, 1
      %p485 = por %p483, %p484
      %p487 = scmp.ne.s32.totalorder %s470, %s486
      %p488 = scmp.eq.s32.totalorder %s37, 0
      %p489 = por %p487, %p488
      %p490 = scmp.le.s32.totalorder 1, %s31
      %p491 = scmp.lt.s32.totalorder %s31, 3
      %p492 = pnand %p490, %p491
      %p493 = pneg %p492
      // Predicated region
      $region9: #{vit_forward.1} parent=5 // pred_check
        _
      $region10: #{vit_forward.1} parent=5 // pred_check_branch
        %495 = sbr.rel (%p492) target = $region12
      $region11: #{vit_forward.1} parent=5 // pred_region
        %s496 = ssub.s32 %s31, 1
        // Predicated region
        $region13: #{vit_forward.1} parent=11 // pred_check
          %p497 = pneg %p78
        $region14: #{vit_forward.1} parent=11 // pred_check_branch
          %499 = sbr.rel (%p497) target = $region16
        $region15: #{vit_forward.1} parent=11 // pred_region
          _
        $region16: #{vit_forward.1} parent=11 // pred_fallthru
          _
        // Predicated region
        $region17: #{vit_forward.1} parent=11 // pred_check
          %p500 = pneg %p99
        $region18: #{vit_forward.1} parent=11 // pred_check_branch
          %502 = sbr.rel (%p500) target = $region20
        $region19: #{vit_forward.1} parent=11 // pred_region
          _
        $region20: #{vit_forward.1} parent=11 // pred_fallthru
          _
        // Predicated region
        $region21: #{vit_forward.1} parent=11 // pred_check
          %p503 = pneg %p120
        $region22: #{vit_forward.1} parent=11 // pred_check_branch
          %505 = sbr.rel (%p503) target = $region24
        $region23: #{vit_forward.1} parent=11 // pred_region
          _
        $region24: #{vit_forward.1} parent=11 // pred_fallthru
          _
        // Predicated region
        $region25: #{vit_forward.1} parent=11 // pred_check
          %p506 = pneg %p141
        $region26: #{vit_forward.1} parent=11 // pred_check_branch
          %508 = sbr.rel (%p506) target = $region28
        $region27: #{vit_forward.1} parent=11 // pred_region
          _
        $region28: #{vit_forward.1} parent=11 // pred_fallthru
          _
        // Predicated region
        $region29: #{vit_forward.1} parent=11 // pred_check
          %p509 = pneg %p162
        $region30: #{vit_forward.1} parent=11 // pred_check_branch
          %511 = sbr.rel (%p509) target = $region32
        $region31: #{vit_forward.1} parent=11 // pred_region
          _
        $region32: #{vit_forward.1} parent=11 // pred_fallthru
          _
        // Predicated region
        $region33: #{vit_forward.1} parent=11 // pred_check
          %p512 = pneg %p183
        $region34: #{vit_forward.1} parent=11 // pred_check_branch
          %514 = sbr.rel (%p512) target = $region36
        $region35: #{vit_forward.1} parent=11 // pred_region
          _
        $region36: #{vit_forward.1} parent=11 // pred_fallthru
          _
        // Predicated region
        $region37: #{vit_forward.1} parent=11 // pred_check
          %p515 = pneg %p204
        $region38: #{vit_forward.1} parent=11 // pred_check_branch
          %517 = sbr.rel (%p515) target = $region40
        $region39: #{vit_forward.1} parent=11 // pred_region
          _
        $region40: #{vit_forward.1} parent=11 // pred_fallthru
          _
        // Predicated region
        $region41: #{vit_forward.1} parent=11 // pred_check
          %p518 = pneg %p225
        $region42: #{vit_forward.1} parent=11 // pred_check_branch
          %520 = sbr.rel (%p518) target = $region44
        $region43: #{vit_forward.1} parent=11 // pred_region
          %s522 = ssub.s32 2048, 2048
          %523 = vsyncadd [#allocation3], %s522
          %s524 = sshll.u32 [#allocation2], 4
          %s525 = int_to_ptr.vmem [resolvable:$true] %s524
          %530 = dma.hbm_to_vmem [thread:$0]  %s8, 2048, %s525, [#allocation3], 64, 64, 4
        $region44: #{vit_forward.1} parent=11 // pred_fallthru
          _
        // Predicated region
        $region45: #{vit_forward.1} parent=11 // pred_check
          %p531 = pneg %p246
        $region46: #{vit_forward.1} parent=11 // pred_check_branch
          %533 = sbr.rel (%p531) target = $region48
        $region47: #{vit_forward.1} parent=11 // pred_region
          _
        $region48: #{vit_forward.1} parent=11 // pred_fallthru
          _
        // Predicated region
        $region49: #{vit_forward.1} parent=11 // pred_check
          %p534 = pneg %p267
        $region50: #{vit_forward.1} parent=11 // pred_check_branch
          %536 = sbr.rel (%p534) target = $region52
        $region51: #{vit_forward.1} parent=11 // pred_region
          _
        $region52: #{vit_forward.1} parent=11 // pred_fallthru
          _
        // Predicated region
        $region53: #{vit_forward.1} parent=11 // pred_check
          %p537 = pneg %p288
        $region54: #{vit_forward.1} parent=11 // pred_check_branch
          %539 = sbr.rel (%p537) target = $region56
        $region55: #{vit_forward.1} parent=11 // pred_region
          _
        $region56: #{vit_forward.1} parent=11 // pred_fallthru
          _
        // Predicated region
        $region57: #{vit_forward.1} parent=11 // pred_check
          %p540 = pneg %p309
        $region58: #{vit_forward.1} parent=11 // pred_check_branch
          %542 = sbr.rel (%p540) target = $region60
        $region59: #{vit_forward.1} parent=11 // pred_region
          _
        $region60: #{vit_forward.1} parent=11 // pred_fallthru
          _
        // Predicated region
        $region61: #{vit_forward.1} parent=11 // pred_check
          %p543 = pneg %p330
        $region62: #{vit_forward.1} parent=11 // pred_check_branch
          %545 = sbr.rel (%p543) target = $region64
        $region63: #{vit_forward.1} parent=11 // pred_region
          _
        $region64: #{vit_forward.1} parent=11 // pred_fallthru
          _
        // Predicated region
        $region65: #{vit_forward.1} parent=11 // pred_check
          %p546 = pneg %p351
        $region66: #{vit_forward.1} parent=11 // pred_check_branch
          %548 = sbr.rel (%p546) target = $region68
        $region67: #{vit_forward.1} parent=11 // pred_region
          _
        $region68: #{vit_forward.1} parent=11 // pred_fallthru
          _
        // Predicated region
        $region69: #{vit_forward.1} parent=11 // pred_check
          %p549 = pneg %p372
        $region70: #{vit_forward.1} parent=11 // pred_check_branch
          %551 = sbr.rel (%p549) target = $region72
        $region71: #{vit_forward.1} parent=11 // pred_region
          _
        $region72: #{vit_forward.1} parent=11 // pred_fallthru
          _
        // Predicated region
        $region73: #{vit_forward.1} parent=11 // pred_check
          %p552 = pneg %p393
        $region74: #{vit_forward.1} parent=11 // pred_check_branch
          %554 = sbr.rel (%p552) target = $region76
        $region75: #{vit_forward.1} parent=11 // pred_region
          _
        $region76: #{vit_forward.1} parent=11 // pred_fallthru
          _
        // Predicated region
        $region77: #{vit_forward.1} parent=11 // pred_check
          %p555 = pneg %p414
        $region78: #{vit_forward.1} parent=11 // pred_check_branch
          %557 = sbr.rel (%p555) target = $region80
        $region79: #{vit_forward.1} parent=11 // pred_region
          _
        $region80: #{vit_forward.1} parent=11 // pred_fallthru
          _
        // Predicated region
        $region81: #{vit_forward.1} parent=11 // pred_check
          %p558 = pneg %p435
        $region82: #{vit_forward.1} parent=11 // pred_check_branch
          %560 = sbr.rel (%p558) target = $region84
        $region83: #{vit_forward.1} parent=11 // pred_region
          %s562 = ssub.s32 1024, 1024
          %563 = vsyncadd [#allocation6], %s562
          %s564 = sshll.u32 [#allocation5], 4
          %s565 = int_to_ptr.vmem [resolvable:$true] %s564
          %570 = dma.hbm_to_vmem [thread:$0]  %s18, 1024, %s565, [#allocation6], 64, 64, 4
        $region84: #{vit_forward.1} parent=11 // pred_fallthru
          _
        // Predicated region
        $region85: #{vit_forward.1} parent=11 // pred_check
          %p571 = pneg %p456
        $region86: #{vit_forward.1} parent=11 // pred_check_branch
          %573 = sbr.rel (%p571) target = $region88
        $region87: #{vit_forward.1} parent=11 // pred_region
          _
        $region88: #{vit_forward.1} parent=11 // pred_fallthru
          _
      $region12: #{vit_forward.1} parent=5 // pred_fallthru
        _
      %p574 = scmp.lt.s32.totalorder %s31, 2
      // Predicated region
      $region89: #{vit_forward.1} parent=5 // pred_check
        %p575 = pneg %p574
      $region90: #{vit_forward.1} parent=5 // pred_check_branch
        %577 = sbr.rel (%p575) target = $region92
      $region91: #{vit_forward.1} parent=5 // pred_region
        // Predicated region
        $region93: #{vit_forward.1} parent=91 // pred_check
          %p578 = pneg %p51
        $region94: #{vit_forward.1} parent=91 // pred_check_branch
          %580 = sbr.rel (%p578) target = $region96
        $region95: #{vit_forward.1} parent=91 // pred_region
          %p581 = scmp.lt.s32.totalorder %s31, 1
          %s582 = scalar_select %p581, %s31, 1
          %s583 = smul.addr %s582, 2
          %s584 = smul.addr %s583, 4
          %s585 = scalar_lea.vmem %s0, %s584
        $region96: #{vit_forward.1} parent=91 // pred_fallthru
          _
      $region92: #{vit_forward.1} parent=5 // pred_fallthru
        _
      %p586 = scmp.le.s32.totalorder 1, %s31
      %p587 = scmp.lt.s32.totalorder %s31, 3
      %p588 = pnand %p586, %p587
      %p589 = pneg %p588
      // Predicated region
      $region97: #{vit_forward.1} parent=5 // pred_check
        _
      $region98: #{vit_forward.1} parent=5 // pred_check_branch
        %591 = sbr.rel (%p588) target = $region100
      $region99: #{vit_forward.1} parent=5 // pred_region
        %s592 = ssub.s32 %s31, 1
        // Predicated region
        $region101: #{vit_forward.1} parent=99 // pred_check
          %p593 = pneg %p225
        $region102: #{vit_forward.1} parent=99 // pred_check_branch
          %595 = sbr.rel (%p593) target = $region104
        $region103: #{vit_forward.1} parent=99 // pred_region
          %596 = dma.done [#allocation3], 2048
        $region104: #{vit_forward.1} parent=99 // pred_fallthru
          _
        // Predicated region
        $region105: #{vit_forward.1} parent=99 // pred_check
          %p597 = pneg %p435
        $region106: #{vit_forward.1} parent=99 // pred_check_branch
          %599 = sbr.rel (%p597) target = $region108
        $region107: #{vit_forward.1} parent=99 // pred_region
          %600 = dma.done [#allocation6], 1024
        $region108: #{vit_forward.1} parent=99 // pred_fallthru
          _
        %p601 = scmp.lt.s32.totalorder %s36, 1
        %s602 = scalar_select %p601, %s36, 1
        %s603 = smul.addr %s602, 2
        %s604 = smul.addr %s603, 4
        %s605 = scalar_lea.vmem %s0, %s604
        %p606 = pneg %p57
        %p607 = pneg %p54
        %p608 = pneg %p78
        %p609 = pneg %p75
        %p610 = pneg %p99
        %p611 = pneg %p96
        %p612 = pneg %p120
        %p613 = pneg %p117
        %p614 = pneg %p141
        %p615 = pneg %p138
        %p616 = pneg %p162
        %p617 = pneg %p159
        %p618 = pneg %p183
        %p619 = pneg %p180
        %p620 = pneg %p204
        %p621 = pneg %p201
        %p622 = pneg %p225
        %p623 = pneg %p222
        %p624 = pneg %p246
        %p625 = pneg %p243
        %p626 = pneg %p267
        %p627 = pneg %p264
        %p628 = pneg %p288
        %p629 = pneg %p285
        %p630 = pneg %p309
        %p631 = pneg %p306
        %p632 = pneg %p330
        %p633 = pneg %p327
        %p634 = pneg %p351
        %p635 = pneg %p348
        %p636 = pneg %p372
        %p637 = pneg %p369
        %p638 = pneg %p393
        %p639 = pneg %p390
        %p640 = pneg %p414
        %p641 = pneg %p411
        %p642 = pneg %p435
        %p643 = pneg %p432
        %p644 = pneg %p456
        %p645 = pneg %p453
        %p646 = pneg %p482
        %p647 = pneg %p479
        %s648 = sand.u32 %s469, 1
        %s649 = scalar_lea.sflag [#allocation4], %s648
        %s650 = sand.u32 %s469, 1
        %s651 = scalar_lea.vmem [#allocation7], %s650
        %p652 = scmp.lt.s32.totalorder %s36, 1
        %s653 = scalar_select %p652, %s36, 1
        %s654 = smul.addr %s653, 2
        %s655 = smul.addr %s654, 4
        %s656 = scalar_lea.vmem %s0, %s655
        %v658 = vld [vmem:[%s656] sm:$0xff]
        %v660 = vcombine.high %v658, %v658
        %v662 = vpack.c.bf16 %v658, %v658
        %v663 = vpack.c.bf16 %v660, %v660
        %v664 = vld [vmem:[%s1] sm:$0xf]
        %v665 = vld [vmem:[%s1 + $0x4] sm:$0xf]
        %v666 = vld [vmem:[%s1 + $0x8] sm:$0xf]
        %v667 = vld [vmem:[%s1 + $0xc] sm:$0xf]
        %v668 = vld [vmem:[%s1 + $0x10] sm:$0xf]
        %v669 = vld [vmem:[%s1 + $0x14] sm:$0xf]
        %v670 = vld [vmem:[%s1 + $0x18] sm:$0xf]
        %v671 = vld [vmem:[%s1 + $0x1c] sm:$0xf]
        %v672 = vld [vmem:[%s1 + $0x20] sm:$0xf]
        %v673 = vld [vmem:[%s1 + $0x24] sm:$0xf]
        %v674 = vld [vmem:[%s1 + $0x28] sm:$0xf]
        %v675 = vld [vmem:[%s1 + $0x2c] sm:$0xf]
        %v676 = vld [vmem:[%s1 + $0x30] sm:$0xf]
        %v677 = vld [vmem:[%s1 + $0x34] sm:$0xf]
        %v678 = vld [vmem:[%s1 + $0x38] sm:$0xf]
        %v679 = vld [vmem:[%s1 + $0x3c] sm:$0xf]
        %v680 = vld [vmem:[%s1 + $0x40] sm:$0xf]
        %v681 = vld [vmem:[%s1 + $0x44] sm:$0xf]
        %v682 = vld [vmem:[%s1 + $0x48] sm:$0xf]
        %v683 = vld [vmem:[%s1 + $0x4c] sm:$0xf]
        %v684 = vld [vmem:[%s1 + $0x50] sm:$0xf]
        %v685 = vld [vmem:[%s1 + $0x54] sm:$0xf]
        %v686 = vld [vmem:[%s1 + $0x58] sm:$0xf]
        %v687 = vld [vmem:[%s1 + $0x5c] sm:$0xf]
        %v688 = vld [vmem:[%s1 + $0x60] sm:$0xf]
        %v689 = vld [vmem:[%s1 + $0x64] sm:$0xf]
        %v690 = vld [vmem:[%s1 + $0x68] sm:$0xf]
        %v691 = vld [vmem:[%s1 + $0x6c] sm:$0xf]
        %v692 = vld [vmem:[%s1 + $0x70] sm:$0xf]
        %v693 = vld [vmem:[%s1 + $0x74] sm:$0xf]
        %v694 = vld [vmem:[%s1 + $0x78] sm:$0xf]
        %v695 = vld [vmem:[%s1 + $0x7c] sm:$0xf]
        %v696 = vld [vmem:[%s2] sm:$0x1]
        %v698 = vlaneseq
        %v699 = vshrl.u32 %v698, 7
        %v700 = vsub.s32 0, %v699
        %v701 = vrot.slane %v696, %v700
        %v735 = vunpack.c.l.b16 %v664
        %v736 = vunpack.c.l.b16 %v665
        %v737 = vunpack.c.l.b16 %v666
        %v738 = vunpack.c.l.b16 %v667
        %v739 = vunpack.c.l.b16 %v668
        %v740 = vunpack.c.l.b16 %v669
        %v741 = vunpack.c.l.b16 %v670
        %v742 = vunpack.c.l.b16 %v671
        %v743 = vunpack.c.l.b16 %v672
        %v744 = vunpack.c.l.b16 %v673
        %v745 = vunpack.c.l.b16 %v674
        %v746 = vunpack.c.l.b16 %v675
        %v747 = vunpack.c.l.b16 %v676
        %v748 = vunpack.c.l.b16 %v677
        %v749 = vunpack.c.l.b16 %v678
        %v750 = vunpack.c.l.b16 %v679
        %v751 = vunpack.c.l.b16 %v680
        %v752 = vunpack.c.l.b16 %v681
        %v753 = vunpack.c.l.b16 %v682
        %v754 = vunpack.c.l.b16 %v683
        %v755 = vunpack.c.l.b16 %v684
        %v756 = vunpack.c.l.b16 %v685
        %v757 = vunpack.c.l.b16 %v686
        %v758 = vunpack.c.l.b16 %v687
        %v759 = vunpack.c.l.b16 %v688
        %v760 = vunpack.c.l.b16 %v689
        %v761 = vunpack.c.l.b16 %v690
        %v762 = vunpack.c.l.b16 %v691
        %v763 = vunpack.c.l.b16 %v692
        %v764 = vunpack.c.l.b16 %v693
        %v765 = vunpack.c.l.b16 %v694
        %v766 = vunpack.c.l.b16 %v695
        %v767 = vpack.c.b16 %v736, %v735
        %v768 = vpack.c.b16 %v738, %v737
        %v769 = vpack.c.b16 %v740, %v739
        %v770 = vpack.c.b16 %v742, %v741
        %v771 = vpack.c.b16 %v744, %v743
        %v772 = vpack.c.b16 %v746, %v745
        %v773 = vpack.c.b16 %v748, %v747
        %v774 = vpack.c.b16 %v750, %v749
        %v775 = vpack.c.b16 %v752, %v751
        %v776 = vpack.c.b16 %v754, %v753
        %v777 = vpack.c.b16 %v756, %v755
        %v778 = vpack.c.b16 %v758, %v757
        %v779 = vpack.c.b16 %v760, %v759
        %v780 = vpack.c.b16 %v762, %v761
        %v781 = vpack.c.b16 %v764, %v763
        %v782 = vpack.c.b16 %v766, %v765
        %799 = vmatprep.subr.bf16.mxu0 0
        %800 = vmatpush1.bf16.msra.mxu0 %v767
        %801 = vmatprep.subr.bf16.mxu0 0
        %802 = vmatpush1.bf16.msra.mxu0 %v768
        %803 = vmatprep.subr.bf16.mxu0 0
        %804 = vmatpush1.bf16.msra.mxu0 %v769
        %805 = vmatprep.subr.bf16.mxu0 0
        %806 = vmatpush1.bf16.msra.mxu0 %v770
        %807 = vmatprep.subr.bf16.mxu0 0
        %808 = vmatpush1.bf16.msra.mxu0 %v771
        %809 = vmatprep.subr.bf16.mxu0 0
        %810 = vmatpush1.bf16.msra.mxu0 %v772
        %811 = vmatprep.subr.bf16.mxu0 0
        %812 = vmatpush1.bf16.msra.mxu0 %v773
        %813 = vmatprep.subr.bf16.mxu0 0
        %814 = vmatpush1.bf16.msra.mxu0 %v774
        %815 = vmatprep.subr.bf16.mxu0 0
        %816 = vmatpush1.bf16.msra.mxu0 %v775
        %817 = vmatprep.subr.bf16.mxu0 0
        %818 = vmatpush1.bf16.msra.mxu0 %v776
        %819 = vmatprep.subr.bf16.mxu0 0
        %820 = vmatpush1.bf16.msra.mxu0 %v777
        %821 = vmatprep.subr.bf16.mxu0 0
        %822 = vmatpush1.bf16.msra.mxu0 %v778
        %823 = vmatprep.subr.bf16.mxu0 0
        %824 = vmatpush1.bf16.msra.mxu0 %v779
        %825 = vmatprep.subr.bf16.mxu0 0
        %826 = vmatpush1.bf16.msra.mxu0 %v780
        %827 = vmatprep.subr.bf16.mxu0 0
        %828 = vmatpush1.bf16.msra.mxu0 %v781
        %829 = vmatprep.subr.bf16.mxu0 0
        %830 = vmatpush1.bf16.msra.mxu0 %v782
        %831 = vmatprep.mubr.bf16.mxu0 %v663
        %832 = vmatmul.mubr.bf16.gmra.mrb[0].mxu0 %v662
        %v833 = vpop.f32.mrb[0].mxu0
        %v834 = vadd.f32 %v701, %v833
        %v835 = vpop.f32.mrb[0].mxu0
        %v836 = vpop.f32.mrb[0].mxu0
        %v837 = vpop.f32.mrb[0].mxu0
        %838 = vdwg.mxu0
        %v840 = vrot.slane %v834, 7
        %vm842 = vcmask 1040384
        %v843 = vsel %vm842, 0.0, %v840
        %v844 = vld [vmem:[%s3] sm:$0x1f]
        %v845 = vlaneseq
        %v846 = vshrl.u32 %v845, 7
        %v847 = vlaneseq
        %v848 = vand.u32 %v847, 127
        %vm849 = vcmp.le.s32.totalorder %v848, %v846
        %v850 = vsel %vm849, 0.0, -1e+30
        %v851 = vld [vmem:[%s4] sm:$0x1]
        %v852 = vld [vmem:[%s5] sm:$0x1]
        %vm853 = vcmask 1044480
        %v854 = vsel %vm853, %v843, 0.0
        %855 = vadd.xlane.f32.xlu0 %v854
        %v856 = vpop.xlane.xlu0 %855
        %v857 = vrcp.pop 128.0
        %v858 = vmul.f32 %v856, %v857
        %v859 = vsub.f32 %v843, %v858
        %v860 = vmul.f32 %v859, %v859
        %v861 = vsel %vm853, %v860, 0.0
        %862 = vadd.xlane.f32.xlu0 %v861
        %v863 = vpop.xlane.xlu0 %862
        %v864 = vmul.f32 %v863, %v857
        %v865 = vadd.f32 %v864, 1e-05
        %v866 = vrsqrt.pop %v865
        %v867 = vmul.f32 %v859, %v866
        %v869 = vlaneseq
        %v870 = vshrl.u32 %v869, 7
        %v871 = vsub.s32 0, %v870
        %v872 = vrot.slane %v851, %v871
        %v874 = vmul.f32 %v867, %v872
        %v876 = vlaneseq
        %v877 = vshrl.u32 %v876, 7
        %v878 = vsub.s32 0, %v877
        %v879 = vrot.slane %v852, %v878
        %v881 = vadd.f32 %v874, %v879
        %v882 = vpack.c.bf16 %v881, %v881
        %v883 = vld [vmem:[%s6] sm:$0xff]
        %v884 = vld [vmem:[%s6 + $0x8] sm:$0xf]
        %v885 = vld [vmem:[%s6 + $0xc] sm:$0xff]
        %v886 = vld [vmem:[%s6 + $0x14] sm:$0xf]
        %v887 = vld [vmem:[%s6 + $0x18] sm:$0xff]
        %v888 = vld [vmem:[%s6 + $0x20] sm:$0xf]
        %v889 = vld [vmem:[%s6 + $0x24] sm:$0xff]
        %v890 = vld [vmem:[%s6 + $0x2c] sm:$0xf]
        %v891 = vld [vmem:[%s6 + $0x30] sm:$0xff]
        %v892 = vld [vmem:[%s6 + $0x38] sm:$0xf]
        %v893 = vld [vmem:[%s6 + $0x3c] sm:$0xff]
        %v894 = vld [vmem:[%s6 + $0x44] sm:$0xf]
        %v895 = vld [vmem:[%s6 + $0x48] sm:$0xff]
        %v896 = vld [vmem:[%s6 + $0x50] sm:$0xf]
        %v897 = vld [vmem:[%s6 + $0x54] sm:$0xff]
        %v898 = vld [vmem:[%s6 + $0x5c] sm:$0xf]
        %v899 = vld [vmem:[%s6 + $0x60] sm:$0xff]
        %v900 = vld [vmem:[%s6 + $0x68] sm:$0xf]
        %v901 = vld [vmem:[%s6 + $0x6c] sm:$0xff]
        %v902 = vld [vmem:[%s6 + $0x74] sm:$0xf]
        %v903 = vld [vmem:[%s6 + $0x78] sm:$0xff]
        %v904 = vld [vmem:[%s6 + $0x80] sm:$0xf]
        %v905 = vld [vmem:[%s6 + $0x84] sm:$0xff]
        %v906 = vld [vmem:[%s6 + $0x8c] sm:$0xf]
        %v907 = vld [vmem:[%s6 + $0x90] sm:$0xff]
        %v908 = vld [vmem:[%s6 + $0x98] sm:$0xf]
        %v909 = vld [vmem:[%s6 + $0x9c] sm:$0xff]
        %v910 = vld [vmem:[%s6 + $0xa4] sm:$0xf]
        %v911 = vld [vmem:[%s6 + $0xa8] sm:$0xff]
        %v912 = vld [vmem:[%s6 + $0xb0] sm:$0xf]
        %v913 = vld [vmem:[%s6 + $0xb4] sm:$0xff]
        %v914 = vld [vmem:[%s6 + $0xbc] sm:$0xf]
        %v915 = vld [vmem:[%s7] sm:$0x7]
        %v917 = vlaneseq
        %v918 = vshrl.u32 %v917, 7
        %v919 = vsub.s32 0, %v918
        %v920 = vrot.slane %v915, %v919
        %v921 = vlaneseq
        %v922 = vshrl.u32 %v921, 7
        %v923 = vsub.s32 1, %v922
        %v924 = vrot.slane %v915, %v923
        %v925 = vlaneseq
        %v926 = vshrl.u32 %v925, 7
        %v927 = vsub.s32 2, %v926
        %v928 = vrot.slane %v915, %v927
        %v964 = vunpack.c.l.b16 %v883
        %v965 = vunpack.c.h.b16 %v883
        %v966 = vunpack.c.l.b16 %v884
        %v967 = vunpack.c.l.b16 %v885
        %v968 = vunpack.c.h.b16 %v885
        %v969 = vunpack.c.l.b16 %v886
        %v970 = vunpack.c.l.b16 %v887
        %v971 = vunpack.c.h.b16 %v887
        %v972 = vunpack.c.l.b16 %v888
        %v973 = vunpack.c.l.b16 %v889
        %v974 = vunpack.c.h.b16 %v889
        %v975 = vunpack.c.l.b16 %v890
        %v976 = vunpack.c.l.b16 %v891
        %v977 = vunpack.c.h.b16 %v891
        %v978 = vunpack.c.l.b16 %v892
        %v979 = vunpack.c.l.b16 %v893
        %v980 = vunpack.c.h.b16 %v893
        %v981 = vunpack.c.l.b16 %v894
        %v982 = vunpack.c.l.b16 %v895
        %v983 = vunpack.c.h.b16 %v895
        %v984 = vunpack.c.l.b16 %v896
        %v985 = vunpack.c.l.b16 %v897
        %v986 = vunpack.c.h.b16 %v897
        %v987 = vunpack.c.l.b16 %v898
        %v988 = vunpack.c.l.b16 %v899
        %v989 = vunpack.c.h.b16 %v899
        %v990 = vunpack.c.l.b16 %v900
        %v991 = vunpack.c.l.b16 %v901
        %v992 = vunpack.c.h.b16 %v901
        %v993 = vunpack.c.l.b16 %v902
        %v994 = vunpack.c.l.b16 %v903
        %v995 = vunpack.c.h.b16 %v903
        %v996 = vunpack.c.l.b16 %v904
        %v997 = vunpack.c.l.b16 %v905
        %v998 = vunpack.c.h.b16 %v905
        %v999 = vunpack.c.l.b16 %v906
        %v1000 = vunpack.c.l.b16 %v907
        %v1001 = vunpack.c.h.b16 %v907
        %v1002 = vunpack.c.l.b16 %v908
        %v1003 = vunpack.c.l.b16 %v909
        %v1004 = vunpack.c.h.b16 %v909
        %v1005 = vunpack.c.l.b16 %v910
        %v1006 = vunpack.c.l.b16 %v911
        %v1007 = vunpack.c.h.b16 %v911
        %v1008 = vunpack.c.l.b16 %v912
        %v1009 = vunpack.c.l.b16 %v913
        %v1010 = vunpack.c.h.b16 %v913
        %v1011 = vunpack.c.l.b16 %v914
        %v1012 = vpack.c.b16 %v967, %v964
        %v1013 = vpack.c.b16 %v968, %v965
        %v1014 = vpack.c.b16 %v969, %v966
        %v1015 = vpack.c.b16 %v973, %v970
        %v1016 = vpack.c.b16 %v974, %v971
        %v1017 = vpack.c.b16 %v975, %v972
        %v1018 = vpack.c.b16 %v979, %v976
        %v1019 = vpack.c.b16 %v980, %v977
        %v1020 = vpack.c.b16 %v981, %v978
        %v1021 = vpack.c.b16 %v985, %v982
        %v1022 = vpack.c.b16 %v986, %v983
        %v1023 = vpack.c.b16 %v987, %v984
        %v1024 = vpack.c.b16 %v991, %v988
        %v1025 = vpack.c.b16 %v992, %v989
        %v1026 = vpack.c.b16 %v993, %v990
        %v1027 = vpack.c.b16 %v997, %v994
        %v1028 = vpack.c.b16 %v998, %v995
        %v1029 = vpack.c.b16 %v999, %v996
        %v1030 = vpack.c.b16 %v1003, %v1000
        %v1031 = vpack.c.b16 %v1004, %v1001
        %v1032 = vpack.c.b16 %v1005, %v1002
        %v1033 = vpack.c.b16 %v1009, %v1006
        %v1034 = vpack.c.b16 %v1010, %v1007
        %v1035 = vpack.c.b16 %v1011, %v1008
        %1060 = vmatprep.subr.bf16.mxu0 %v1013
        %1061 = vmatpush1.bf16.msra.mxu0 %v1012
        %1062 = vmatprep.subr.bf16.mxu0 %v1016
        %1063 = vmatpush1.bf16.msra.mxu0 %v1015
        %1064 = vmatprep.subr.bf16.mxu0 %v1019
        %1065 = vmatpush1.bf16.msra.mxu0 %v1018
        %1066 = vmatprep.subr.bf16.mxu0 %v1022
        %1067 = vmatpush1.bf16.msra.mxu0 %v1021
        %1068 = vmatprep.subr.bf16.mxu0 %v1025
        %1069 = vmatpush1.bf16.msra.mxu0 %v1024
        %1070 = vmatprep.subr.bf16.mxu0 %v1028
        %1071 = vmatpush1.bf16.msra.mxu0 %v1027
        %1072 = vmatprep.subr.bf16.mxu0 %v1031
        %1073 = vmatpush1.bf16.msra.mxu0 %v1030
        %1074 = vmatprep.subr.bf16.mxu0 %v1034
        %1075 = vmatpush1.bf16.msra.mxu0 %v1033
        %1076 = vmatprep.subr.bf16.mxu0 0
        %1077 = vmatpush1.bf16.msra.mxu0 0
        %1078 = vmatprep.subr.bf16.mxu0 0
        %1079 = vmatpush1.bf16.msra.mxu0 0
        %1080 = vmatprep.subr.bf16.mxu0 0
        %1081 = vmatpush1.bf16.msra.mxu0 0
        %1082 = vmatprep.subr.bf16.mxu0 0
        %1083 = vmatpush1.bf16.msra.mxu0 0
        %1084 = vmatprep.subr.bf16.mxu0 0
        %1085 = vmatpush1.bf16.msra.mxu0 0
        %1086 = vmatprep.subr.bf16.mxu0 0
        %1087 = vmatpush1.bf16.msra.mxu0 0
        %1088 = vmatprep.subr.bf16.mxu0 0
        %1089 = vmatpush1.bf16.msra.mxu0 0
        %1090 = vmatprep.subr.bf16.mxu0 0
        %1091 = vmatpush1.bf16.msra.mxu0 0
        %1092 = vmatprep.mubr.bf16.mxu0 0
        %1093 = vmatmul.mubr.bf16.gmra.mrb[0].mxu0 %v882
        %v1094 = vpop.f32.mrb[0].mxu0
        %v1095 = vadd.f32 %v920, %v1094
        %v1096 = vpop.f32.mrb[0].mxu0
        %v1097 = vadd.f32 %v924, %v1096
        %v1098 = vpop.f32.mrb[0].mxu0
        %v1099 = vpop.f32.mrb[0].mxu0
        %1100 = vdwg.mxu0
        %1101 = vmatprep.subr.bf16.mxu0 0
        %1102 = vmatpush1.bf16.msra.mxu0 %v1014
        %1103 = vmatprep.subr.bf16.mxu0 0
        %1104 = vmatpush1.bf16.msra.mxu0 %v1017
        %1105 = vmatprep.subr.bf16.mxu0 0
        %1106 = vmatpush1.bf16.msra.mxu0 %v1020
        %1107 = vmatprep.subr.bf16.mxu0 0
        %1108 = vmatpush1.bf16.msra.mxu0 %v1023
        %1109 = vmatprep.subr.bf16.mxu0 0
        %1110 = vmatpush1.bf16.msra.mxu0 %v1026
        %1111 = vmatprep.subr.bf16.mxu0 0
        %1112 = vmatpush1.bf16.msra.mxu0 %v1029
        %1113 = vmatprep.subr.bf16.mxu0 0
        %1114 = vmatpush1.bf16.msra.mxu0 %v1032
        %1115 = vmatprep.subr.bf16.mxu0 0
        %1116 = vmatpush1.bf16.msra.mxu0 %v1035
        %1117 = vmatprep.subr.bf16.mxu0 0
        %1118 = vmatpush1.bf16.msra.mxu0 0
        %1119 = vmatprep.subr.bf16.mxu0 0
        %1120 = vmatpush1.bf16.msra.mxu0 0
        %1121 = vmatprep.subr.bf16.mxu0 0
        %1122 = vmatpush1.bf16.msra.mxu0 0
        %1123 = vmatprep.subr.bf16.mxu0 0
        %1124 = vmatpush1.bf16.msra.mxu0 0
        %1125 = vmatprep.subr.bf16.mxu0 0
        %1126 = vmatpush1.bf16.msra.mxu0 0
        %1127 = vmatprep.subr.bf16.mxu0 0
        %1128 = vmatpush1.bf16.msra.mxu0 0
        %1129 = vmatprep.subr.bf16.mxu0 0
        %1130 = vmatpush1.bf16.msra.mxu0 0
        %1131 = vmatprep.subr.bf16.mxu0 0
        %1132 = vmatpush1.bf16.msra.mxu0 0
        %1133 = vmatprep.mubr.bf16.mxu0 0
        %1134 = vmatmul.mubr.bf16.gmra.mrb[0].mxu0 %v882
        %v1135 = vpop.f32.mrb[0].mxu0
        %v1136 = vadd.f32 %v928, %v1135
        %v1137 = vpop.f32.mrb[0].mxu0
        %v1138 = vpop.f32.mrb[0].mxu0
        %v1139 = vpop.f32.mrb[0].mxu0
        %1140 = vdwg.mxu0
        %v1141 = vadd.f32 %v1095, %v844
        %v1142 = vadd.f32 %v1097, %v844
        %v1143 = vpack.c.bf16 %v1141, %v1141
        %v1144 = vpack.c.bf16 %v1142, %v1142
        %v1145 = vpack.c.bf16 %v1136, %v1136
        %vm1146 = vcmask 261120
        %v1148 = vsel %vm1146, %v1143, 0
        %v1151 = vsel %vm1146, %v1144, 0
        %1153 = vmatprep.subr.bf16.mxu0 0
        %1154 = vmatpush1.bf16.xpose.msra.mxu0 %v1151
        %1155 = vmatprep.subr.bf16.mxu0 0
        %1156 = vmatpush1.bf16.xpose.msra.mxu0 0
        %1157 = vmatprep.subr.bf16.mxu0 0
        %1158 = vmatpush1.bf16.xpose.msra.mxu0 0
        %1159 = vmatprep.subr.bf16.mxu0 0
        %1160 = vmatpush1.bf16.xpose.msra.mxu0 0
        %1161 = vmatprep.subr.bf16.mxu0 0
        %1162 = vmatpush1.bf16.xpose.msra.mxu0 0
        %1163 = vmatprep.subr.bf16.mxu0 0
        %1164 = vmatpush1.bf16.xpose.msra.mxu0 0
        %1165 = vmatprep.subr.bf16.mxu0 0
        %1166 = vmatpush1.bf16.xpose.msra.mxu0 0
        %1167 = vmatprep.subr.bf16.mxu0 0
        %1168 = vmatpush1.bf16.xpose.msra.mxu0 0
        %1169 = vmatprep.subr.bf16.mxu0 0
        %1170 = vmatpush1.bf16.xpose.msra.mxu0 0
        %1171 = vmatprep.subr.bf16.mxu0 0
        %1172 = vmatpush1.bf16.xpose.msra.mxu0 0
        %1173 = vmatprep.subr.bf16.mxu0 0
        %1174 = vmatpush1.bf16.xpose.msra.mxu0 0
        %1175 = vmatprep.subr.bf16.mxu0 0
        %1176 = vmatpush1.bf16.xpose.msra.mxu0 0
        %1177 = vmatprep.subr.bf16.mxu0 0
        %1178 = vmatpush1.bf16.xpose.msra.mxu0 0
        %1179 = vmatprep.subr.bf16.mxu0 0
        %1180 = vmatpush1.bf16.xpose.msra.mxu0 0
        %1181 = vmatprep.subr.bf16.mxu0 0
        %1182 = vmatpush1.bf16.xpose.msra.mxu0 0
        %1183 = vmatprep.subr.bf16.mxu0 0
        %1184 = vmatpush1.bf16.xpose.msra.mxu0 0
        %1185 = vmatprep.mubr.bf16.mxu0 0
        %1186 = vmatmul.mubr.bf16.gmra.mrb[0].mxu0 %v1148
        %v1187 = vpop.f32.mrb[0].mxu0
        %v1188 = vadd.f32 0.0, %v1187
        %v1189 = vpop.f32.mrb[0].mxu0
        %v1190 = vpop.f32.mrb[0].mxu0
        %v1191 = vpop.f32.mrb[0].mxu0
        %1192 = vdwg.mxu0
        %v1193 = vmul.f32 %v1188, 0.17677669
        %v1194 = vadd.f32 %v1193, %v850
        %vm1195 = vcmask 36864
        %v1196 = vsel %vm1195, %v1194, -inf
        %1197 = vmax.xlane.f32.xlu0 %v1196
        %v1198 = vpop.xlane.xlu0 %1197
        %v1199 = vsub.f32 %v1194, %v1198
        %v1200 = vmul.f32 %v1199, 1.442695
        %v1201 = vpow.pop %v1200
        %v1202 = vsel %vm1195, %v1201, 0.0
        %1203 = vadd.xlane.f32.xlu0 %v1202
        %v1204 = vpop.xlane.xlu0 %1203
        %v1205 = vrcp.pop %v1204
        %v1206 = vmul.f32 %v1201, %v1205
        %v1207 = vpack.c.bf16 %v1206, %v1206
        %vm1208 = vcmask 39936
        %v1210 = vsel %vm1208, %v1207, 0
        %vm1212 = vcmask 1041408
        %vm1213 = vcmask 1042432
        %v1214 = vsel %vm1212, 4294967295, 65535
        %v1215 = vsel %vm1213, %v1214, 0
        %v1217 = vand.u32 %v1145, %v1215
        %1219 = vmatprep.subr.bf16.mxu0 0
        %1220 = vmatpush1.bf16.msra.mxu0 %v1217
        %1221 = vmatprep.subr.bf16.mxu0 0
        %1222 = vmatpush1.bf16.msra.mxu0 0
        %1223 = vmatprep.subr.bf16.mxu0 0
        %1224 = vmatpush1.bf16.msra.mxu0 0
        %1225 = vmatprep.subr.bf16.mxu0 0
        %1226 = vmatpush1.bf16.msra.mxu0 0
        %1227 = vmatprep.subr.bf16.mxu0 0
        %1228 = vmatpush1.bf16.msra.mxu0 0
        %1229 = vmatprep.subr.bf16.mxu0 0
        %1230 = vmatpush1.bf16.msra.mxu0 0
        %1231 = vmatprep.subr.bf16.mxu0 0
        %1232 = vmatpush1.bf16.msra.mxu0 0
        %1233 = vmatprep.subr.bf16.mxu0 0
        %1234 = vmatpush1.bf16.msra.mxu0 0
        %1235 = vmatprep.subr.bf16.mxu0 0
        %1236 = vmatpush1.bf16.msra.mxu0 0
        %1237 = vmatprep.subr.bf16.mxu0 0
        %1238 = vmatpush1.bf16.msra.mxu0 0
        %1239 = vmatprep.subr.bf16.mxu0 0
        %1240 = vmatpush1.bf16.msra.mxu0 0
        %1241 = vmatprep.subr.bf16.mxu0 0
        %1242 = vmatpush1.bf16.msra.mxu0 0
        %1243 = vmatprep.subr.bf16.mxu0 0
        %1244 = vmatpush1.bf16.msra.mxu0 0
        %1245 = vmatprep.subr.bf16.mxu0 0
        %1246 = vmatpush1.bf16.msra.mxu0 0
        %1247 = vmatprep.subr.bf16.mxu0 0
        %1248 = vmatpush1.bf16.msra.mxu0 0
        %1249 = vmatprep.subr.bf16.mxu0 0
        %1250 = vmatpush1.bf16.msra.mxu0 0
        %1251 = vmatprep.mubr.bf16.mxu0 0
        %1252 = vmatmul.mubr.bf16.gmra.mrb[0].mxu0 %v1210
        %v1253 = vpop.f32.mrb[0].mxu0
        %v1254 = vadd.f32 0.0, %v1253
        %v1255 = vpop.f32.mrb[0].mxu0
        %v1256 = vpop.f32.mrb[0].mxu0
        %v1257 = vpop.f32.mrb[0].mxu0
        %1258 = vdwg.mxu0
        %1260 = vrot.lane.b32.xlu0 %v1143, 96
        %v1261 = vpop.permute.xlu0 %1260
        %1263 = vrot.lane.b32.xlu0 %v1144, 96
        %v1264 = vpop.permute.xlu0 %1263
        %v1266 = vsel %vm1146, %v1261, 0
        %v1269 = vsel %vm1146, %v1264, 0
        %1271 = vmatprep.subr.bf16.mxu0 0
        %1272 = vmatpush1.bf16.xpose.msra.mxu0 %v1269
        %1273 = vmatprep.subr.bf16.mxu0 0
        %1274 = vmatpush1.bf16.xpose.msra.mxu0 0
        %1275 = vmatprep.subr.bf16.mxu0 0
        %1276 = vmatpush1.bf16.xpose.msra.mxu0 0
        %1277 = vmatprep.subr.bf16.mxu0 0
        %1278 = vmatpush1.bf16.xpose.msra.mxu0 0
        %1279 = vmatprep.subr.bf16.mxu0 0
        %1280 = vmatpush1.bf16.xpose.msra.mxu0 0
        %1281 = vmatprep.subr.bf16.mxu0 0
        %1282 = vmatpush1.bf16.xpose.msra.mxu0 0
        %1283 = vmatprep.subr.bf16.mxu0 0
        %1284 = vmatpush1.bf16.xpose.msra.mxu0 0
        %1285 = vmatprep.subr.bf16.mxu0 0
        %1286 = vmatpush1.bf16.xpose.msra.mxu0 0
        %1287 = vmatprep.subr.bf16.mxu0 0
        %1288 = vmatpush1.bf16.xpose.msra.mxu0 0
        %1289 = vmatprep.subr.bf16.mxu0 0
        %1290 = vmatpush1.bf16.xpose.msra.mxu0 0
        %1291 = vmatprep.subr.bf16.mxu0 0
        %1292 = vmatpush1.bf16.xpose.msra.mxu0 0
        %1293 = vmatprep.subr.bf16.mxu0 0
        %1294 = vmatpush1.bf16.xpose.msra.mxu0 0
        %1295 = vmatprep.subr.bf16.mxu0 0
        %1296 = vmatpush1.bf16.xpose.msra.mxu0 0
        %1297 = vmatprep.subr.bf16.mxu0 0
        %1298 = vmatpush1.bf16.xpose.msra.mxu0 0
        %1299 = vmatprep.subr.bf16.mxu0 0
        %1300 = vmatpush1.bf16.xpose.msra.mxu0 0
        %1301 = vmatprep.subr.bf16.mxu0 0
        %1302 = vmatpush1.bf16.xpose.msra.mxu0 0
        %1303 = vmatprep.mubr.bf16.mxu0 0
        %1304 = vmatmul.mubr.bf16.gmra.mrb[0].mxu0 %v1266
        %v1305 = vpop.f32.mrb[0].mxu0
        %v1306 = vadd.f32 0.0, %v1305
        %v1307 = vpop.f32.mrb[0].mxu0
        %v1308 = vpop.f32.mrb[0].mxu0
        %v1309 = vpop.f32.mrb[0].mxu0
        %1310 = vdwg.mxu0
        %v1311 = vmul.f32 %v1306, 0.17677669
        %v1312 = vadd.f32 %v1311, %v850
        %v1313 = vsel %vm1195, %v1312, -inf
        %1314 = vmax.xlane.f32.xlu0 %v1313
        %v1315 = vpop.xlane.xlu0 %1314
        %v1316 = vsub.f32 %v1312, %v1315
        %v1317 = vmul.f32 %v1316, 1.442695
        %v1318 = vpow.pop %v1317
        %v1319 = vsel %vm1195, %v1318, 0.0
        %1320 = vadd.xlane.f32.xlu0 %v1319
        %v1321 = vpop.xlane.xlu0 %1320
        %v1322 = vrcp.pop %v1321
        %v1323 = vmul.f32 %v1318, %v1322
        %v1324 = vpack.c.bf16 %v1323, %v1323
        %1326 = vrot.lane.b32.xlu0 %v1145, 96
        %v1327 = vpop.permute.xlu0 %1326
        %v1329 = vsel %vm1208, %v1324, 0
        %v1332 = vand.u32 %v1327, %v1215
        %1334 = vmatprep.subr.bf16.mxu0 0
        %1335 = vmatpush1.bf16.msra.mxu0 %v1332
        %1336 = vmatprep.subr.bf16.mxu0 0
        %1337 = vmatpush1.bf16.msra.mxu0 0
        %1338 = vmatprep.subr.bf16.mxu0 0
        %1339 = vmatpush1.bf16.msra.mxu0 0
        %1340 = vmatprep.subr.bf16.mxu0 0
        %1341 = vmatpush1.bf16.msra.mxu0 0
        %1342 = vmatprep.subr.bf16.mxu0 0
        %1343 = vmatpush1.bf16.msra.mxu0 0
        %1344 = vmatprep.subr.bf16.mxu0 0
        %1345 = vmatpush1.bf16.msra.mxu0 0
        %1346 = vmatprep.subr.bf16.mxu0 0
        %1347 = vmatpush1.bf16.msra.mxu0 0
        %1348 = vmatprep.subr.bf16.mxu0 0
        %1349 = vmatpush1.bf16.msra.mxu0 0
        %1350 = vmatprep.subr.bf16.mxu0 0
        %1351 = vmatpush1.bf16.msra.mxu0 0
        %1352 = vmatprep.subr.bf16.mxu0 0
        %1353 = vmatpush1.bf16.msra.mxu0 0
        %1354 = vmatprep.subr.bf16.mxu0 0
        %1355 = vmatpush1.bf16.msra.mxu0 0
        %1356 = vmatprep.subr.bf16.mxu0 0
        %1357 = vmatpush1.bf16.msra.mxu0 0
        %1358 = vmatprep.subr.bf16.mxu0 0
        %1359 = vmatpush1.bf16.msra.mxu0 0
        %1360 = vmatprep.subr.bf16.mxu0 0
        %1361 = vmatpush1.bf16.msra.mxu0 0
        %1362 = vmatprep.subr.bf16.mxu0 0
        %1363 = vmatpush1.bf16.msra.mxu0 0
        %1364 = vmatprep.subr.bf16.mxu0 0
        %1365 = vmatpush1.bf16.msra.mxu0 0
        %1366 = vmatprep.mubr.bf16.mxu0 0
        %1367 = vmatmul.mubr.bf16.gmra.mrb[0].mxu0 %v1329
        %v1368 = vpop.f32.mrb[0].mxu0
        %v1369 = vadd.f32 0.0, %v1368
        %v1370 = vpop.f32.mrb[0].mxu0
        %v1371 = vpop.f32.mrb[0].mxu0
        %v1372 = vpop.f32.mrb[0].mxu0
        %1373 = vdwg.mxu0
        %1374 = vrot.lane.b32.xlu0 %v1143, 64
        %v1375 = vpop.permute.xlu0 %1374
        %1376 = vrot.lane.b32.xlu0 %v1144, 64
        %v1377 = vpop.permute.xlu0 %1376
        %v1379 = vsel %vm1146, %v1375, 0
        %v1382 = vsel %vm1146, %v1377, 0
        %1384 = vmatprep.subr.bf16.mxu0 0
        %1385 = vmatpush1.bf16.xpose.msra.mxu0 %v1382
        %1386 = vmatprep.subr.bf16.mxu0 0
        %1387 = vmatpush1.bf16.xpose.msra.mxu0 0
        %1388 = vmatprep.subr.bf16.mxu0 0
        %1389 = vmatpush1.bf16.xpose.msra.mxu0 0
        %1390 = vmatprep.subr.bf16.mxu0 0
        %1391 = vmatpush1.bf16.xpose.msra.mxu0 0
        %1392 = vmatprep.subr.bf16.mxu0 0
        %1393 = vmatpush1.bf16.xpose.msra.mxu0 0
        %1394 = vmatprep.subr.bf16.mxu0 0
        %1395 = vmatpush1.bf16.xpose.msra.mxu0 0
        %1396 = vmatprep.subr.bf16.mxu0 0
        %1397 = vmatpush1.bf16.xpose.msra.mxu0 0
        %1398 = vmatprep.subr.bf16.mxu0 0
        %1399 = vmatpush1.bf16.xpose.msra.mxu0 0
        %1400 = vmatprep.subr.bf16.mxu0 0
        %1401 = vmatpush1.bf16.xpose.msra.mxu0 0
        %1402 = vmatprep.subr.bf16.mxu0 0
        %1403 = vmatpush1.bf16.xpose.msra.mxu0 0
        %1404 = vmatprep.subr.bf16.mxu0 0
        %1405 = vmatpush1.bf16.xpose.msra.mxu0 0
        %1406 = vmatprep.subr.bf16.mxu0 0
        %1407 = vmatpush1.bf16.xpose.msra.mxu0 0
        %1408 = vmatprep.subr.bf16.mxu0 0
        %1409 = vmatpush1.bf16.xpose.msra.mxu0 0
        %1410 = vmatprep.subr.bf16.mxu0 0
        %1411 = vmatpush1.bf16.xpose.msra.mxu0 0
        %1412 = vmatprep.subr.bf16.mxu0 0
        %1413 = vmatpush1.bf16.xpose.msra.mxu0 0
        %1414 = vmatprep.subr.bf16.mxu0 0
        %1415 = vmatpush1.bf16.xpose.msra.mxu0 0
        %1416 = vmatprep.mubr.bf16.mxu0 0
        %1417 = vmatmul.mubr.bf16.gmra.mrb[0].mxu0 %v1379
        %v1418 = vpop.f32.mrb[0].mxu0
        %v1419 = vadd.f32 0.0, %v1418
        %v1420 = vpop.f32.mrb[0].mxu0
        %v1421 = vpop.f32.mrb[0].mxu0
        %v1422 = vpop.f32.mrb[0].mxu0
        %1423 = vdwg.mxu0
        %v1424 = vmul.f32 %v1419, 0.17677669
        %v1425 = vadd.f32 %v1424, %v850
        %v1426 = vsel %vm1195, %v1425, -inf
        %1427 = vmax.xlane.f32.xlu0 %v1426
        %v1428 = vpop.xlane.xlu0 %1427
        %v1429 = vsub.f32 %v1425, %v1428
        %v1430 = vmul.f32 %v1429, 1.442695
        %v1431 = vpow.pop %v1430
        %v1432 = vsel %vm1195, %v1431, 0.0
        %1433 = vadd.xlane.f32.xlu0 %v1432
        %v1434 = vpop.xlane.xlu0 %1433
        %v1435 = vrcp.pop %v1434
        %v1436 = vmul.f32 %v1431, %v1435
        %v1437 = vpack.c.bf16 %v1436, %v1436
        %1438 = vrot.lane.b32.xlu0 %v1145, 64
        %v1439 = vpop.permute.xlu0 %1438
        %v1441 = vsel %vm1208, %v1437, 0
        %v1444 = vand.u32 %v1439, %v1215
        %1446 = vmatprep.subr.bf16.mxu0 0
        %1447 = vmatpush1.bf16.msra.mxu0 %v1444
        %1448 = vmatprep.subr.bf16.mxu0 0
        %1449 = vmatpush1.bf16.msra.mxu0 0
        %1450 = vmatprep.subr.bf16.mxu0 0
        %1451 = vmatpush1.bf16.msra.mxu0 0
        %1452 = vmatprep.subr.bf16.mxu0 0
        %1453 = vmatpush1.bf16.msra.mxu0 0
        %1454 = vmatprep.subr.bf16.mxu0 0
        %1455 = vmatpush1.bf16.msra.mxu0 0
        %1456 = vmatprep.subr.bf16.mxu0 0
        %1457 = vmatpush1.bf16.msra.mxu0 0
        %1458 = vmatprep.subr.bf16.mxu0 0
        %1459 = vmatpush1.bf16.msra.mxu0 0
        %1460 = vmatprep.subr.bf16.mxu0 0
        %1461 = vmatpush1.bf16.msra.mxu0 0
        %1462 = vmatprep.subr.bf16.mxu0 0
        %1463 = vmatpush1.bf16.msra.mxu0 0
        %1464 = vmatprep.subr.bf16.mxu0 0
        %1465 = vmatpush1.bf16.msra.mxu0 0
        %1466 = vmatprep.subr.bf16.mxu0 0
        %1467 = vmatpush1.bf16.msra.mxu0 0
        %1468 = vmatprep.subr.bf16.mxu0 0
        %1469 = vmatpush1.bf16.msra.mxu0 0
        %1470 = vmatprep.subr.bf16.mxu0 0
        %1471 = vmatpush1.bf16.msra.mxu0 0
        %1472 = vmatprep.subr.bf16.mxu0 0
        %1473 = vmatpush1.bf16.msra.mxu0 0
        %1474 = vmatprep.subr.bf16.mxu0 0
        %1475 = vmatpush1.bf16.msra.mxu0 0
        %1476 = vmatprep.subr.bf16.mxu0 0
        %1477 = vmatpush1.bf16.msra.mxu0 0
        %1478 = vmatprep.mubr.bf16.mxu0 0
        %1479 = vmatmul.mubr.bf16.gmra.mrb[0].mxu0 %v1441
        %v1480 = vpop.f32.mrb[0].mxu0
        %v1481 = vadd.f32 0.0, %v1480
        %v1482 = vpop.f32.mrb[0].mxu0
        %v1483 = vpop.f32.mrb[0].mxu0
        %v1484 = vpop.f32.mrb[0].mxu0
        %1485 = vdwg.mxu0
        %1486 = vrot.lane.b32.xlu0 %v1143, 32
        %v1487 = vpop.permute.xlu0 %1486
        %1488 = vrot.lane.b32.xlu0 %v1144, 32
        %v1489 = vpop.permute.xlu0 %1488
        %v1491 = vsel %vm1146, %v1487, 0
        %v1494 = vsel %vm1146, %v1489, 0
        %1496 = vmatprep.subr.bf16.mxu0 0
        %1497 = vmatpush1.bf16.xpose.msra.mxu0 %v1494
        %1498 = vmatprep.subr.bf16.mxu0 0
        %1499 = vmatpush1.bf16.xpose.msra.mxu0 0
        %1500 = vmatprep.subr.bf16.mxu0 0
        %1501 = vmatpush1.bf16.xpose.msra.mxu0 0
        %1502 = vmatprep.subr.bf16.mxu0 0
        %1503 = vmatpush1.bf16.xpose.msra.mxu0 0
        %1504 = vmatprep.subr.bf16.mxu0 0
        %1505 = vmatpush1.bf16.xpose.msra.mxu0 0
        %1506 = vmatprep.subr.bf16.mxu0 0
        %1507 = vmatpush1.bf16.xpose.msra.mxu0 0
        %1508 = vmatprep.subr.bf16.mxu0 0
        %1509 = vmatpush1.bf16.xpose.msra.mxu0 0
        %1510 = vmatprep.subr.bf16.mxu0 0
        %1511 = vmatpush1.bf16.xpose.msra.mxu0 0
        %1512 = vmatprep.subr.bf16.mxu0 0
        %1513 = vmatpush1.bf16.xpose.msra.mxu0 0
        %1514 = vmatprep.subr.bf16.mxu0 0
        %1515 = vmatpush1.bf16.xpose.msra.mxu0 0
        %1516 = vmatprep.subr.bf16.mxu0 0
        %1517 = vmatpush1.bf16.xpose.msra.mxu0 0
        %1518 = vmatprep.subr.bf16.mxu0 0
        %1519 = vmatpush1.bf16.xpose.msra.mxu0 0
        %1520 = vmatprep.subr.bf16.mxu0 0
        %1521 = vmatpush1.bf16.xpose.msra.mxu0 0
        %1522 = vmatprep.subr.bf16.mxu0 0
        %1523 = vmatpush1.bf16.xpose.msra.mxu0 0
        %1524 = vmatprep.subr.bf16.mxu0 0
        %1525 = vmatpush1.bf16.xpose.msra.mxu0 0
        %1526 = vmatprep.subr.bf16.mxu0 0
        %1527 = vmatpush1.bf16.xpose.msra.mxu0 0
        %1528 = vmatprep.mubr.bf16.mxu0 0
        %1529 = vmatmul.mubr.bf16.gmra.mrb[0].mxu0 %v1491
        %v1530 = vpop.f32.mrb[0].mxu0
        %v1531 = vadd.f32 0.0, %v1530
        %v1532 = vpop.f32.mrb[0].mxu0
        %v1533 = vpop.f32.mrb[0].mxu0
        %v1534 = vpop.f32.mrb[0].mxu0
        %1535 = vdwg.mxu0
        %v1536 = vmul.f32 %v1531, 0.17677669
        %v1537 = vadd.f32 %v1536, %v850
        %v1538 = vsel %vm1195, %v1537, -inf
        %1539 = vmax.xlane.f32.xlu0 %v1538
        %v1540 = vpop.xlane.xlu0 %1539
        %v1541 = vsub.f32 %v1537, %v1540
        %v1542 = vmul.f32 %v1541, 1.442695
        %v1543 = vpow.pop %v1542
        %v1544 = vsel %vm1195, %v1543, 0.0
        %1545 = vadd.xlane.f32.xlu0 %v1544
        %v1546 = vpop.xlane.xlu0 %1545
        %v1547 = vrcp.pop %v1546
        %v1548 = vmul.f32 %v1543, %v1547
        %v1549 = vpack.c.bf16 %v1548, %v1548
        %1550 = vrot.lane.b32.xlu0 %v1145, 32
        %v1551 = vpop.permute.xlu0 %1550
        %v1553 = vsel %vm1208, %v1549, 0
        %v1556 = vand.u32 %v1551, %v1215
        %1558 = vmatprep.subr.bf16.mxu0 0
        %1559 = vmatpush1.bf16.msra.mxu0 %v1556
        %1560 = vmatprep.subr.bf16.mxu0 0
        %1561 = vmatpush1.bf16.msra.mxu0 0
        %1562 = vmatprep.subr.bf16.mxu0 0
        %1563 = vmatpush1.bf16.msra.mxu0 0
        %1564 = vmatprep.subr.bf16.mxu0 0
        %1565 = vmatpush1.bf16.msra.mxu0 0
        %1566 = vmatprep.subr.bf16.mxu0 0
        %1567 = vmatpush1.bf16.msra.mxu0 0
        %1568 = vmatprep.subr.bf16.mxu0 0
        %1569 = vmatpush1.bf16.msra.mxu0 0
        %1570 = vmatprep.subr.bf16.mxu0 0
        %1571 = vmatpush1.bf16.msra.mxu0 0
        %1572 = vmatprep.subr.bf16.mxu0 0
        %1573 = vmatpush1.bf16.msra.mxu0 0
        %1574 = vmatprep.subr.bf16.mxu0 0
        %1575 = vmatpush1.bf16.msra.mxu0 0
        %1576 = vmatprep.subr.bf16.mxu0 0
        %1577 = vmatpush1.bf16.msra.mxu0 0
        %1578 = vmatprep.subr.bf16.mxu0 0
        %1579 = vmatpush1.bf16.msra.mxu0 0
        %1580 = vmatprep.subr.bf16.mxu0 0
        %1581 = vmatpush1.bf16.msra.mxu0 0
        %1582 = vmatprep.subr.bf16.mxu0 0
        %1583 = vmatpush1.bf16.msra.mxu0 0
        %1584 = vmatprep.subr.bf16.mxu0 0
        %1585 = vmatpush1.bf16.msra.mxu0 0
        %1586 = vmatprep.subr.bf16.mxu0 0
        %1587 = vmatpush1.bf16.msra.mxu0 0
        %1588 = vmatprep.subr.bf16.mxu0 0
        %1589 = vmatpush1.bf16.msra.mxu0 0
        %1590 = vmatprep.mubr.bf16.mxu0 0
        %1591 = vmatmul.mubr.bf16.gmra.mrb[0].mxu0 %v1553
        %v1592 = vpop.f32.mrb[0].mxu0
        %v1593 = vadd.f32 0.0, %v1592
        %v1594 = vpop.f32.mrb[0].mxu0
        %v1595 = vpop.f32.mrb[0].mxu0
        %v1596 = vpop.f32.mrb[0].mxu0
        %1597 = vdwg.mxu0
        %1599 = vrot.lane.b32.xlu0 %v1369, 32
        %v1600 = vpop.permute.xlu0 %1599
        %1603 = vrot.lane.b32.xlu0 %v1481, 64
        %v1604 = vpop.permute.xlu0 %1603
        %1607 = vrot.lane.b32.xlu0 %v1593, 96
        %v1608 = vpop.permute.xlu0 %1607
        %v1610 = vsel %vm1146, %v1254, %v1600
        %vm1611 = vcmask 523264
        %v1612 = vsel %vm1611, %v1610, %v1604
        %vm1613 = vcmask 785408
        %v1614 = vsel %vm1613, %v1612, %v1608
        %v1615 = vpack.c.bf16 %v1614, %v1614
        %v1616 = vld [vmem:[#allocation2] sm:$0xf]
        %v1617 = vld [vmem:[#allocation2 + $0x4] sm:$0xf]
        %v1618 = vld [vmem:[#allocation2 + $0x8] sm:$0xf]
        %v1619 = vld [vmem:[#allocation2 + $0xc] sm:$0xf]
        %v1620 = vld [vmem:[#allocation2 + $0x10] sm:$0xf]
        %v1621 = vld [vmem:[#allocation2 + $0x14] sm:$0xf]
        %v1622 = vld [vmem:[#allocation2 + $0x18] sm:$0xf]
        %v1623 = vld [vmem:[#allocation2 + $0x1c] sm:$0xf]
        %v1624 = vld [vmem:[#allocation2 + $0x20] sm:$0xf]
        %v1625 = vld [vmem:[#allocation2 + $0x24] sm:$0xf]
        %v1626 = vld [vmem:[#allocation2 + $0x28] sm:$0xf]
        %v1627 = vld [vmem:[#allocation2 + $0x2c] sm:$0xf]
        %v1628 = vld [vmem:[#allocation2 + $0x30] sm:$0xf]
        %v1629 = vld [vmem:[#allocation2 + $0x34] sm:$0xf]
        %v1630 = vld [vmem:[#allocation2 + $0x38] sm:$0xf]
        %v1631 = vld [vmem:[#allocation2 + $0x3c] sm:$0xf]
        %v1632 = vld [vmem:[%s9] sm:$0x1]
        %v1634 = vlaneseq
        %v1635 = vshrl.u32 %v1634, 7
        %v1636 = vsub.s32 0, %v1635
        %v1637 = vrot.slane %v1632, %v1636
        %v1655 = vunpack.c.l.b16 %v1616
        %v1656 = vunpack.c.l.b16 %v1617
        %v1657 = vunpack.c.l.b16 %v1618
        %v1658 = vunpack.c.l.b16 %v1619
        %v1659 = vunpack.c.l.b16 %v1620
        %v1660 = vunpack.c.l.b16 %v1621
        %v1661 = vunpack.c.l.b16 %v1622
        %v1662 = vunpack.c.l.b16 %v1623
        %v1663 = vunpack.c.l.b16 %v1624
        %v1664 = vunpack.c.l.b16 %v1625
        %v1665 = vunpack.c.l.b16 %v1626
        %v1666 = vunpack.c.l.b16 %v1627
        %v1667 = vunpack.c.l.b16 %v1628
        %v1668 = vunpack.c.l.b16 %v1629
        %v1669 = vunpack.c.l.b16 %v1630
        %v1670 = vunpack.c.l.b16 %v1631
        %v1671 = vpack.c.b16 %v1656, %v1655
        %v1672 = vpack.c.b16 %v1658, %v1657
        %v1673 = vpack.c.b16 %v1660, %v1659
        %v1674 = vpack.c.b16 %v1662, %v1661
        %v1675 = vpack.c.b16 %v1664, %v1663
        %v1676 = vpack.c.b16 %v1666, %v1665
        %v1677 = vpack.c.b16 %v1668, %v1667
        %v1678 = vpack.c.b16 %v1670, %v1669
        %1687 = vmatprep.subr.bf16.mxu0 0
        %1688 = vmatpush1.bf16.msra.mxu0 %v1671
        %1689 = vmatprep.subr.bf16.mxu0 0
        %1690 = vmatpush1.bf16.msra.mxu0 %v1672
        %1691 = vmatprep.subr.bf16.mxu0 0
        %1692 = vmatpush1.bf16.msra.mxu0 %v1673
        %1693 = vmatprep.subr.bf16.mxu0 0
        %1694 = vmatpush1.bf16.msra.mxu0 %v1674
        %1695 = vmatprep.subr.bf16.mxu0 0
        %1696 = vmatpush1.bf16.msra.mxu0 %v1675
        %1697 = vmatprep.subr.bf16.mxu0 0
        %1698 = vmatpush1.bf16.msra.mxu0 %v1676
        %1699 = vmatprep.subr.bf16.mxu0 0
        %1700 = vmatpush1.bf16.msra.mxu0 %v1677
        %1701 = vmatprep.subr.bf16.mxu0 0
        %1702 = vmatpush1.bf16.msra.mxu0 %v1678
        %1703 = vmatprep.subr.bf16.mxu0 0
        %1704 = vmatpush1.bf16.msra.mxu0 0
        %1705 = vmatprep.subr.bf16.mxu0 0
        %1706 = vmatpush1.bf16.msra.mxu0 0
        %1707 = vmatprep.subr.bf16.mxu0 0
        %1708 = vmatpush1.bf16.msra.mxu0 0
        %1709 = vmatprep.subr.bf16.mxu0 0
        %1710 = vmatpush1.bf16.msra.mxu0 0
        %1711 = vmatprep.subr.bf16.mxu0 0
        %1712 = vmatpush1.bf16.msra.mxu0 0
        %1713 = vmatprep.subr.bf16.mxu0 0
        %1714 = vmatpush1.bf16.msra.mxu0 0
        %1715 = vmatprep.subr.bf16.mxu0 0
        %1716 = vmatpush1.bf16.msra.mxu0 0
        %1717 = vmatprep.subr.bf16.mxu0 0
        %1718 = vmatpush1.bf16.msra.mxu0 0
        %1719 = vmatprep.mubr.bf16.mxu0 0
        %1720 = vmatmul.mubr.bf16.gmra.mrb[0].mxu0 %v1615
        %v1721 = vpop.f32.mrb[0].mxu0
        %v1722 = vadd.f32 %v1637, %v1721
        %v1723 = vpop.f32.mrb[0].mxu0
        %v1724 = vpop.f32.mrb[0].mxu0
        %v1725 = vpop.f32.mrb[0].mxu0
        %1726 = vdwg.mxu0
        %v1727 = vadd.f32 %v843, %v1722
        %v1728 = vld [vmem:[%s10] sm:$0x1]
        %v1729 = vld [vmem:[%s11] sm:$0x1]
        %v1730 = vsel %vm853, %v1727, 0.0
        %1731 = vadd.xlane.f32.xlu0 %v1730
        %v1732 = vpop.xlane.xlu0 %1731
        %v1733 = vmul.f32 %v1732, %v857
        %v1734 = vsub.f32 %v1727, %v1733
        %v1735 = vmul.f32 %v1734, %v1734
        %v1736 = vsel %vm853, %v1735, 0.0
        %1737 = vadd.xlane.f32.xlu0 %v1736
        %v1738 = vpop.xlane.xlu0 %1737
        %v1739 = vmul.f32 %v1738, %v857
        %v1740 = vadd.f32 %v1739, 1e-05
        %v1741 = vrsqrt.pop %v1740
        %v1742 = vmul.f32 %v1734, %v1741
        %v1744 = vlaneseq
        %v1745 = vshrl.u32 %v1744, 7
        %v1746 = vsub.s32 0, %v1745
        %v1747 = vrot.slane %v1728, %v1746
        %v1749 = vmul.f32 %v1742, %v1747
        %v1751 = vlaneseq
        %v1752 = vshrl.u32 %v1751, 7
        %v1753 = vsub.s32 0, %v1752
        %v1754 = vrot.slane %v1729, %v1753
        %v1756 = vadd.f32 %v1749, %v1754
        %v1757 = vpack.c.bf16 %v1756, %v1756
        %v1758 = vld [vmem:[%s12] sm:$0xff]
        %v1759 = vld [vmem:[%s12 + $0x8] sm:$0xff]
        %v1760 = vld [vmem:[%s12 + $0x10] sm:$0xff]
        %v1761 = vld [vmem:[%s12 + $0x18] sm:$0xff]
        %v1762 = vld [vmem:[%s12 + $0x20] sm:$0xff]
        %v1763 = vld [vmem:[%s12 + $0x28] sm:$0xff]
        %v1764 = vld [vmem:[%s12 + $0x30] sm:$0xff]
        %v1765 = vld [vmem:[%s12 + $0x38] sm:$0xff]
        %v1766 = vld [vmem:[%s12 + $0x40] sm:$0xff]
        %v1767 = vld [vmem:[%s12 + $0x48] sm:$0xff]
        %v1768 = vld [vmem:[%s12 + $0x50] sm:$0xff]
        %v1769 = vld [vmem:[%s12 + $0x58] sm:$0xff]
        %v1770 = vld [vmem:[%s12 + $0x60] sm:$0xff]
        %v1771 = vld [vmem:[%s12 + $0x68] sm:$0xff]
        %v1772 = vld [vmem:[%s12 + $0x70] sm:$0xff]
        %v1773 = vld [vmem:[%s12 + $0x78] sm:$0xff]
        %v1774 = vld [vmem:[%s12 + $0x80] sm:$0xff]
        %v1775 = vld [vmem:[%s12 + $0x88] sm:$0xff]
        %v1776 = vld [vmem:[%s12 + $0x90] sm:$0xff]
        %v1777 = vld [vmem:[%s12 + $0x98] sm:$0xff]
        %v1778 = vld [vmem:[%s12 + $0xa0] sm:$0xff]
        %v1779 = vld [vmem:[%s12 + $0xa8] sm:$0xff]
        %v1780 = vld [vmem:[%s12 + $0xb0] sm:$0xff]
        %v1781 = vld [vmem:[%s12 + $0xb8] sm:$0xff]
        %v1782 = vld [vmem:[%s12 + $0xc0] sm:$0xff]
        %v1783 = vld [vmem:[%s12 + $0xc8] sm:$0xff]
        %v1784 = vld [vmem:[%s12 + $0xd0] sm:$0xff]
        %v1785 = vld [vmem:[%s12 + $0xd8] sm:$0xff]
        %v1786 = vld [vmem:[%s12 + $0xe0] sm:$0xff]
        %v1787 = vld [vmem:[%s12 + $0xe8] sm:$0xff]
        %v1788 = vld [vmem:[%s12 + $0xf0] sm:$0xff]
        %v1789 = vld [vmem:[%s12 + $0xf8] sm:$0xff]
        %v1790 = vld [vmem:[%s13] sm:$0xf]
        %v1792 = vlaneseq
        %v1793 = vshrl.u32 %v1792, 7
        %v1794 = vsub.s32 0, %v1793
        %v1795 = vrot.slane %v1790, %v1794
        %v1796 = vlaneseq
        %v1797 = vshrl.u32 %v1796, 7
        %v1798 = vsub.s32 1, %v1797
        %v1799 = vrot.slane %v1790, %v1798
        %v1800 = vlaneseq
        %v1801 = vshrl.u32 %v1800, 7
        %v1802 = vsub.s32 2, %v1801
        %v1803 = vrot.slane %v1790, %v1802
        %v1804 = vlaneseq
        %v1805 = vshrl.u32 %v1804, 7
        %v1806 = vsub.s32 3, %v1805
        %v1807 = vrot.slane %v1790, %v1806
        %v1844 = vunpack.c.l.b16 %v1758
        %v1845 = vunpack.c.h.b16 %v1758
        %v1846 = vunpack.c.l.b16 %v1759
        %v1847 = vunpack.c.h.b16 %v1759
        %v1848 = vunpack.c.l.b16 %v1760
        %v1849 = vunpack.c.h.b16 %v1760
        %v1850 = vunpack.c.l.b16 %v1761
        %v1851 = vunpack.c.h.b16 %v1761
        %v1852 = vunpack.c.l.b16 %v1762
        %v1853 = vunpack.c.h.b16 %v1762
        %v1854 = vunpack.c.l.b16 %v1763
        %v1855 = vunpack.c.h.b16 %v1763
        %v1856 = vunpack.c.l.b16 %v1764
        %v1857 = vunpack.c.h.b16 %v1764
        %v1858 = vunpack.c.l.b16 %v1765
        %v1859 = vunpack.c.h.b16 %v1765
        %v1860 = vunpack.c.l.b16 %v1766
        %v1861 = vunpack.c.h.b16 %v1766
        %v1862 = vunpack.c.l.b16 %v1767
        %v1863 = vunpack.c.h.b16 %v1767
        %v1864 = vunpack.c.l.b16 %v1768
        %v1865 = vunpack.c.h.b16 %v1768
        %v1866 = vunpack.c.l.b16 %v1769
        %v1867 = vunpack.c.h.b16 %v1769
        %v1868 = vunpack.c.l.b16 %v1770
        %v1869 = vunpack.c.h.b16 %v1770
        %v1870 = vunpack.c.l.b16 %v1771
        %v1871 = vunpack.c.h.b16 %v1771
        %v1872 = vunpack.c.l.b16 %v1772
        %v1873 = vunpack.c.h.b16 %v1772
        %v1874 = vunpack.c.l.b16 %v1773
        %v1875 = vunpack.c.h.b16 %v1773
        %v1876 = vunpack.c.l.b16 %v1774
        %v1877 = vunpack.c.h.b16 %v1774
        %v1878 = vunpack.c.l.b16 %v1775
        %v1879 = vunpack.c.h.b16 %v1775
        %v1880 = vunpack.c.l.b16 %v1776
        %v1881 = vunpack.c.h.b16 %v1776
        %v1882 = vunpack.c.l.b16 %v1777
        %v1883 = vunpack.c.h.b16 %v1777
        %v1884 = vunpack.c.l.b16 %v1778
        %v1885 = vunpack.c.h.b16 %v1778
        %v1886 = vunpack.c.l.b16 %v1779
        %v1887 = vunpack.c.h.b16 %v1779
        %v1888 = vunpack.c.l.b16 %v1780
        %v1889 = vunpack.c.h.b16 %v1780
        %v1890 = vunpack.c.l.b16 %v1781
        %v1891 = vunpack.c.h.b16 %v1781
        %v1892 = vunpack.c.l.b16 %v1782
        %v1893 = vunpack.c.h.b16 %v1782
        %v1894 = vunpack.c.l.b16 %v1783
        %v1895 = vunpack.c.h.b16 %v1783
        %v1896 = vunpack.c.l.b16 %v1784
        %v1897 = vunpack.c.h.b16 %v1784
        %v1898 = vunpack.c.l.b16 %v1785
        %v1899 = vunpack.c.h.b16 %v1785
        %v1900 = vunpack.c.l.b16 %v1786
        %v1901 = vunpack.c.h.b16 %v1786
        %v1902 = vunpack.c.l.b16 %v1787
        %v1903 = vunpack.c.h.b16 %v1787
        %v1904 = vunpack.c.l.b16 %v1788
        %v1905 = vunpack.c.h.b16 %v1788
        %v1906 = vunpack.c.l.b16 %v1789
        %v1907 = vunpack.c.h.b16 %v1789
        %v1908 = vpack.c.b16 %v1848, %v1844
        %v1909 = vpack.c.b16 %v1849, %v1845
        %v1910 = vpack.c.b16 %v1850, %v1846
        %v1911 = vpack.c.b16 %v1851, %v1847
        %v1912 = vpack.c.b16 %v1856, %v1852
        %v1913 = vpack.c.b16 %v1857, %v1853
        %v1914 = vpack.c.b16 %v1858, %v1854
        %v1915 = vpack.c.b16 %v1859, %v1855
        %v1916 = vpack.c.b16 %v1864, %v1860
        %v1917 = vpack.c.b16 %v1865, %v1861
        %v1918 = vpack.c.b16 %v1866, %v1862
        %v1919 = vpack.c.b16 %v1867, %v1863
        %v1920 = vpack.c.b16 %v1872, %v1868
        %v1921 = vpack.c.b16 %v1873, %v1869
        %v1922 = vpack.c.b16 %v1874, %v1870
        %v1923 = vpack.c.b16 %v1875, %v1871
        %v1924 = vpack.c.b16 %v1880, %v1876
        %v1925 = vpack.c.b16 %v1881, %v1877
        %v1926 = vpack.c.b16 %v1882, %v1878
        %v1927 = vpack.c.b16 %v1883, %v1879
        %v1928 = vpack.c.b16 %v1888, %v1884
        %v1929 = vpack.c.b16 %v1889, %v1885
        %v1930 = vpack.c.b16 %v1890, %v1886
        %v1931 = vpack.c.b16 %v1891, %v1887
        %v1932 = vpack.c.b16 %v1896, %v1892
        %v1933 = vpack.c.b16 %v1897, %v1893
        %v1934 = vpack.c.b16 %v1898, %v1894
        %v1935 = vpack.c.b16 %v1899, %v1895
        %v1936 = vpack.c.b16 %v1904, %v1900
        %v1937 = vpack.c.b16 %v1905, %v1901
        %v1938 = vpack.c.b16 %v1906, %v1902
        %v1939 = vpack.c.b16 %v1907, %v1903
        %1972 = vmatprep.subr.bf16.mxu0 %v1909
        %1973 = vmatpush1.bf16.msra.mxu0 %v1908
        %1974 = vmatprep.subr.bf16.mxu0 %v1913
        %1975 = vmatpush1.bf16.msra.mxu0 %v1912
        %1976 = vmatprep.subr.bf16.mxu0 %v1917
        %1977 = vmatpush1.bf16.msra.mxu0 %v1916
        %1978 = vmatprep.subr.bf16.mxu0 %v1921
        %1979 = vmatpush1.bf16.msra.mxu0 %v1920
        %1980 = vmatprep.subr.bf16.mxu0 %v1925
        %1981 = vmatpush1.bf16.msra.mxu0 %v1924
        %1982 = vmatprep.subr.bf16.mxu0 %v1929
        %1983 = vmatpush1.bf16.msra.mxu0 %v1928
        %1984 = vmatprep.subr.bf16.mxu0 %v1933
        %1985 = vmatpush1.bf16.msra.mxu0 %v1932
        %1986 = vmatprep.subr.bf16.mxu0 %v1937
        %1987 = vmatpush1.bf16.msra.mxu0 %v1936
        %1988 = vmatprep.subr.bf16.mxu0 0
        %1989 = vmatpush1.bf16.msra.mxu0 0
        %1990 = vmatprep.subr.bf16.mxu0 0
        %1991 = vmatpush1.bf16.msra.mxu0 0
        %1992 = vmatprep.subr.bf16.mxu0 0
        %1993 = vmatpush1.bf16.msra.mxu0 0
        %1994 = vmatprep.subr.bf16.mxu0 0
        %1995 = vmatpush1.bf16.msra.mxu0 0
        %1996 = vmatprep.subr.bf16.mxu0 0
        %1997 = vmatpush1.bf16.msra.mxu0 0
        %1998 = vmatprep.subr.bf16.mxu0 0
        %1999 = vmatpush1.bf16.msra.mxu0 0
        %2000 = vmatprep.subr.bf16.mxu0 0
        %2001 = vmatpush1.bf16.msra.mxu0 0
        %2002 = vmatprep.subr.bf16.mxu0 0
        %2003 = vmatpush1.bf16.msra.mxu0 0
        %2004 = vmatprep.mubr.bf16.mxu0 0
        %2005 = vmatmul.mubr.bf16.gmra.mrb[0].mxu0 %v1757
        %v2006 = vpop.f32.mrb[0].mxu0
        %v2007 = vadd.f32 %v1795, %v2006
        %v2008 = vpop.f32.mrb[0].mxu0
        %v2009 = vadd.f32 %v1799, %v2008
        %v2010 = vpop.f32.mrb[0].mxu0
        %v2011 = vpop.f32.mrb[0].mxu0
        %2012 = vdwg.mxu0
        %2013 = vmatprep.subr.bf16.mxu0 %v1911
        %2014 = vmatpush1.bf16.msra.mxu0 %v1910
        %2015 = vmatprep.subr.bf16.mxu0 %v1915
        %2016 = vmatpush1.bf16.msra.mxu0 %v1914
        %2017 = vmatprep.subr.bf16.mxu0 %v1919
        %2018 = vmatpush1.bf16.msra.mxu0 %v1918
        %2019 = vmatprep.subr.bf16.mxu0 %v1923
        %2020 = vmatpush1.bf16.msra.mxu0 %v1922
        %2021 = vmatprep.subr.bf16.mxu0 %v1927
        %2022 = vmatpush1.bf16.msra.mxu0 %v1926
        %2023 = vmatprep.subr.bf16.mxu0 %v1931
        %2024 = vmatpush1.bf16.msra.mxu0 %v1930
        %2025 = vmatprep.subr.bf16.mxu0 %v1935
        %2026 = vmatpush1.bf16.msra.mxu0 %v1934
        %2027 = vmatprep.subr.bf16.mxu0 %v1939
        %2028 = vmatpush1.bf16.msra.mxu0 %v1938
        %2029 = vmatprep.subr.bf16.mxu0 0
        %2030 = vmatpush1.bf16.msra.mxu0 0
        %2031 = vmatprep.subr.bf16.mxu0 0
        %2032 = vmatpush1.bf16.msra.mxu0 0
        %2033 = vmatprep.subr.bf16.mxu0 0
        %2034 = vmatpush1.bf16.msra.mxu0 0
        %2035 = vmatprep.subr.bf16.mxu0 0
        %2036 = vmatpush1.bf16.msra.mxu0 0
        %2037 = vmatprep.subr.bf16.mxu0 0
        %2038 = vmatpush1.bf16.msra.mxu0 0
        %2039 = vmatprep.subr.bf16.mxu0 0
        %2040 = vmatpush1.bf16.msra.mxu0 0
        %2041 = vmatprep.subr.bf16.mxu0 0
        %2042 = vmatpush1.bf16.msra.mxu0 0
        %2043 = vmatprep.subr.bf16.mxu0 0
        %2044 = vmatpush1.bf16.msra.mxu0 0
        %2045 = vmatprep.mubr.bf16.mxu0 0
        %2046 = vmatmul.mubr.bf16.gmra.mrb[0].mxu0 %v1757
        %v2047 = vpop.f32.mrb[0].mxu0
        %v2048 = vadd.f32 %v1803, %v2047
        %v2049 = vpop.f32.mrb[0].mxu0
        %v2050 = vadd.f32 %v1807, %v2049
        %v2051 = vpop.f32.mrb[0].mxu0
        %v2052 = vpop.f32.mrb[0].mxu0
        %2053 = vdwg.mxu0
        %v2054 = vmax.f32 %v2007, 0.0
        %v2055 = vmax.f32 %v2009, 0.0
        %v2056 = vmax.f32 %v2048, 0.0
        %v2057 = vmax.f32 %v2050, 0.0
        %v2058 = vpack.c.bf16 %v2054, %v2054
        %v2059 = vpack.c.bf16 %v2055, %v2055
        %v2060 = vpack.c.bf16 %v2056, %v2056
        %v2061 = vpack.c.bf16 %v2057, %v2057
        %v2062 = vld [vmem:[%s14] sm:$0xf]
        %v2063 = vld [vmem:[%s14 + $0x4] sm:$0xf]
        %v2064 = vld [vmem:[%s14 + $0x8] sm:$0xf]
        %v2065 = vld [vmem:[%s14 + $0xc] sm:$0xf]
        %v2066 = vld [vmem:[%s14 + $0x10] sm:$0xf]
        %v2067 = vld [vmem:[%s14 + $0x14] sm:$0xf]
        %v2068 = vld [vmem:[%s14 + $0x18] sm:$0xf]
        %v2069 = vld [vmem:[%s14 + $0x1c] sm:$0xf]
        %v2070 = vld [vmem:[%s14 + $0x20] sm:$0xf]
        %v2071 = vld [vmem:[%s14 + $0x24] sm:$0xf]
        %v2072 = vld [vmem:[%s14 + $0x28] sm:$0xf]
        %v2073 = vld [vmem:[%s14 + $0x2c] sm:$0xf]
        %v2074 = vld [vmem:[%s14 + $0x30] sm:$0xf]
        %v2075 = vld [vmem:[%s14 + $0x34] sm:$0xf]
        %v2076 = vld [vmem:[%s14 + $0x38] sm:$0xf]
        %v2077 = vld [vmem:[%s14 + $0x3c] sm:$0xf]
        %v2078 = vld [vmem:[%s14 + $0x40] sm:$0xf]
        %v2079 = vld [vmem:[%s14 + $0x44] sm:$0xf]
        %v2080 = vld [vmem:[%s14 + $0x48] sm:$0xf]
        %v2081 = vld [vmem:[%s14 + $0x4c] sm:$0xf]
        %v2082 = vld [vmem:[%s14 + $0x50] sm:$0xf]
        %v2083 = vld [vmem:[%s14 + $0x54] sm:$0xf]
        %v2084 = vld [vmem:[%s14 + $0x58] sm:$0xf]
        %v2085 = vld [vmem:[%s14 + $0x5c] sm:$0xf]
        %v2086 = vld [vmem:[%s14 + $0x60] sm:$0xf]
        %v2087 = vld [vmem:[%s14 + $0x64] sm:$0xf]
        %v2088 = vld [vmem:[%s14 + $0x68] sm:$0xf]
        %v2089 = vld [vmem:[%s14 + $0x6c] sm:$0xf]
        %v2090 = vld [vmem:[%s14 + $0x70] sm:$0xf]
        %v2091 = vld [vmem:[%s14 + $0x74] sm:$0xf]
        %v2092 = vld [vmem:[%s14 + $0x78] sm:$0xf]
        %v2093 = vld [vmem:[%s14 + $0x7c] sm:$0xf]
        %v2094 = vld [vmem:[%s14 + $0x80] sm:$0xf]
        %v2095 = vld [vmem:[%s14 + $0x84] sm:$0xf]
        %v2096 = vld [vmem:[%s14 + $0x88] sm:$0xf]
        %v2097 = vld [vmem:[%s14 + $0x8c] sm:$0xf]
        %v2098 = vld [vmem:[%s14 + $0x90] sm:$0xf]
        %v2099 = vld [vmem:[%s14 + $0x94] sm:$0xf]
        %v2100 = vld [vmem:[%s14 + $0x98] sm:$0xf]
        %v2101 = vld [vmem:[%s14 + $0x9c] sm:$0xf]
        %v2102 = vld [vmem:[%s14 + $0xa0] sm:$0xf]
        %v2103 = vld [vmem:[%s14 + $0xa4] sm:$0xf]
        %v2104 = vld [vmem:[%s14 + $0xa8] sm:$0xf]
        %v2105 = vld [vmem:[%s14 + $0xac] sm:$0xf]
        %v2106 = vld [vmem:[%s14 + $0xb0] sm:$0xf]
        %v2107 = vld [vmem:[%s14 + $0xb4] sm:$0xf]
        %v2108 = vld [vmem:[%s14 + $0xb8] sm:$0xf]
        %v2109 = vld [vmem:[%s14 + $0xbc] sm:$0xf]
        %v2110 = vld [vmem:[%s14 + $0xc0] sm:$0xf]
        %v2111 = vld [vmem:[%s14 + $0xc4] sm:$0xf]
        %v2112 = vld [vmem:[%s14 + $0xc8] sm:$0xf]
        %v2113 = vld [vmem:[%s14 + $0xcc] sm:$0xf]
        %v2114 = vld [vmem:[%s14 + $0xd0] sm:$0xf]
        %v2115 = vld [vmem:[%s14 + $0xd4] sm:$0xf]
        %v2116 = vld [vmem:[%s14 + $0xd8] sm:$0xf]
        %v2117 = vld [vmem:[%s14 + $0xdc] sm:$0xf]
        %v2118 = vld [vmem:[%s14 + $0xe0] sm:$0xf]
        %v2119 = vld [vmem:[%s14 + $0xe4] sm:$0xf]
        %v2120 = vld [vmem:[%s14 + $0xe8] sm:$0xf]
        %v2121 = vld [vmem:[%s14 + $0xec] sm:$0xf]
        %v2122 = vld [vmem:[%s14 + $0xf0] sm:$0xf]
        %v2123 = vld [vmem:[%s14 + $0xf4] sm:$0xf]
        %v2124 = vld [vmem:[%s14 + $0xf8] sm:$0xf]
        %v2125 = vld [vmem:[%s14 + $0xfc] sm:$0xf]
        %v2126 = vld [vmem:[%s15] sm:$0x1]
        %v2128 = vlaneseq
        %v2129 = vshrl.u32 %v2128, 7
        %v2130 = vsub.s32 0, %v2129
        %v2131 = vrot.slane %v2126, %v2130
        %v2197 = vunpack.c.l.b16 %v2062
        %v2198 = vunpack.c.l.b16 %v2063
        %v2199 = vunpack.c.l.b16 %v2064
        %v2200 = vunpack.c.l.b16 %v2065
        %v2201 = vunpack.c.l.b16 %v2066
        %v2202 = vunpack.c.l.b16 %v2067
        %v2203 = vunpack.c.l.b16 %v2068
        %v2204 = vunpack.c.l.b16 %v2069
        %v2205 = vunpack.c.l.b16 %v2070
        %v2206 = vunpack.c.l.b16 %v2071
        %v2207 = vunpack.c.l.b16 %v2072
        %v2208 = vunpack.c.l.b16 %v2073
        %v2209 = vunpack.c.l.b16 %v2074
        %v2210 = vunpack.c.l.b16 %v2075
        %v2211 = vunpack.c.l.b16 %v2076
        %v2212 = vunpack.c.l.b16 %v2077
        %v2213 = vunpack.c.l.b16 %v2078
        %v2214 = vunpack.c.l.b16 %v2079
        %v2215 = vunpack.c.l.b16 %v2080
        %v2216 = vunpack.c.l.b16 %v2081
        %v2217 = vunpack.c.l.b16 %v2082
        %v2218 = vunpack.c.l.b16 %v2083
        %v2219 = vunpack.c.l.b16 %v2084
        %v2220 = vunpack.c.l.b16 %v2085
        %v2221 = vunpack.c.l.b16 %v2086
        %v2222 = vunpack.c.l.b16 %v2087
        %v2223 = vunpack.c.l.b16 %v2088
        %v2224 = vunpack.c.l.b16 %v2089
        %v2225 = vunpack.c.l.b16 %v2090
        %v2226 = vunpack.c.l.b16 %v2091
        %v2227 = vunpack.c.l.b16 %v2092
        %v2228 = vunpack.c.l.b16 %v2093
        %v2229 = vunpack.c.l.b16 %v2094
        %v2230 = vunpack.c.l.b16 %v2095
        %v2231 = vunpack.c.l.b16 %v2096
        %v2232 = vunpack.c.l.b16 %v2097
        %v2233 = vunpack.c.l.b16 %v2098
        %v2234 = vunpack.c.l.b16 %v2099
        %v2235 = vunpack.c.l.b16 %v2100
        %v2236 = vunpack.c.l.b16 %v2101
        %v2237 = vunpack.c.l.b16 %v2102
        %v2238 = vunpack.c.l.b16 %v2103
        %v2239 = vunpack.c.l.b16 %v2104
        %v2240 = vunpack.c.l.b16 %v2105
        %v2241 = vunpack.c.l.b16 %v2106
        %v2242 = vunpack.c.l.b16 %v2107
        %v2243 = vunpack.c.l.b16 %v2108
        %v2244 = vunpack.c.l.b16 %v2109
        %v2245 = vunpack.c.l.b16 %v2110
        %v2246 = vunpack.c.l.b16 %v2111
        %v2247 = vunpack.c.l.b16 %v2112
        %v2248 = vunpack.c.l.b16 %v2113
        %v2249 = vunpack.c.l.b16 %v2114
        %v2250 = vunpack.c.l.b16 %v2115
        %v2251 = vunpack.c.l.b16 %v2116
        %v2252 = vunpack.c.l.b16 %v2117
        %v2253 = vunpack.c.l.b16 %v2118
        %v2254 = vunpack.c.l.b16 %v2119
        %v2255 = vunpack.c.l.b16 %v2120
        %v2256 = vunpack.c.l.b16 %v2121
        %v2257 = vunpack.c.l.b16 %v2122
        %v2258 = vunpack.c.l.b16 %v2123
        %v2259 = vunpack.c.l.b16 %v2124
        %v2260 = vunpack.c.l.b16 %v2125
        %v2261 = vpack.c.b16 %v2198, %v2197
        %v2262 = vpack.c.b16 %v2200, %v2199
        %v2263 = vpack.c.b16 %v2202, %v2201
        %v2264 = vpack.c.b16 %v2204, %v2203
        %v2265 = vpack.c.b16 %v2206, %v2205
        %v2266 = vpack.c.b16 %v2208, %v2207
        %v2267 = vpack.c.b16 %v2210, %v2209
        %v2268 = vpack.c.b16 %v2212, %v2211
        %v2269 = vpack.c.b16 %v2214, %v2213
        %v2270 = vpack.c.b16 %v2216, %v2215
        %v2271 = vpack.c.b16 %v2218, %v2217
        %v2272 = vpack.c.b16 %v2220, %v2219
        %v2273 = vpack.c.b16 %v2222, %v2221
        %v2274 = vpack.c.b16 %v2224, %v2223
        %v2275 = vpack.c.b16 %v2226, %v2225
        %v2276 = vpack.c.b16 %v2228, %v2227
        %v2277 = vpack.c.b16 %v2230, %v2229
        %v2278 = vpack.c.b16 %v2232, %v2231
        %v2279 = vpack.c.b16 %v2234, %v2233
        %v2280 = vpack.c.b16 %v2236, %v2235
        %v2281 = vpack.c.b16 %v2238, %v2237
        %v2282 = vpack.c.b16 %v2240, %v2239
        %v2283 = vpack.c.b16 %v2242, %v2241
        %v2284 = vpack.c.b16 %v2244, %v2243
        %v2285 = vpack.c.b16 %v2246, %v2245
        %v2286 = vpack.c.b16 %v2248, %v2247
        %v2287 = vpack.c.b16 %v2250, %v2249
        %v2288 = vpack.c.b16 %v2252, %v2251
        %v2289 = vpack.c.b16 %v2254, %v2253
        %v2290 = vpack.c.b16 %v2256, %v2255
        %v2291 = vpack.c.b16 %v2258, %v2257
        %v2292 = vpack.c.b16 %v2260, %v2259
        %2325 = vmatprep.subr.bf16.mxu0 0
        %2326 = vmatpush1.bf16.msra.mxu0 %v2261
        %2327 = vmatprep.subr.bf16.mxu0 0
        %2328 = vmatpush1.bf16.msra.mxu0 %v2262
        %2329 = vmatprep.subr.bf16.mxu0 0
        %2330 = vmatpush1.bf16.msra.mxu0 %v2263
        %2331 = vmatprep.subr.bf16.mxu0 0
        %2332 = vmatpush1.bf16.msra.mxu0 %v2264
        %2333 = vmatprep.subr.bf16.mxu0 0
        %2334 = vmatpush1.bf16.msra.mxu0 %v2265
        %2335 = vmatprep.subr.bf16.mxu0 0
        %2336 = vmatpush1.bf16.msra.mxu0 %v2266
        %2337 = vmatprep.subr.bf16.mxu0 0
        %2338 = vmatpush1.bf16.msra.mxu0 %v2267
        %2339 = vmatprep.subr.bf16.mxu0 0
        %2340 = vmatpush1.bf16.msra.mxu0 %v2268
        %2341 = vmatprep.subr.bf16.mxu0 0
        %2342 = vmatpush1.bf16.msra.mxu0 %v2269
        %2343 = vmatprep.subr.bf16.mxu0 0
        %2344 = vmatpush1.bf16.msra.mxu0 %v2270
        %2345 = vmatprep.subr.bf16.mxu0 0
        %2346 = vmatpush1.bf16.msra.mxu0 %v2271
        %2347 = vmatprep.subr.bf16.mxu0 0
        %2348 = vmatpush1.bf16.msra.mxu0 %v2272
        %2349 = vmatprep.subr.bf16.mxu0 0
        %2350 = vmatpush1.bf16.msra.mxu0 %v2273
        %2351 = vmatprep.subr.bf16.mxu0 0
        %2352 = vmatpush1.bf16.msra.mxu0 %v2274
        %2353 = vmatprep.subr.bf16.mxu0 0
        %2354 = vmatpush1.bf16.msra.mxu0 %v2275
        %2355 = vmatprep.subr.bf16.mxu0 0
        %2356 = vmatpush1.bf16.msra.mxu0 %v2276
        %2357 = vmatprep.mubr.bf16.mxu0 %v2059
        %2358 = vmatmul.mubr.bf16.gmra.mrb[0].mxu0 %v2058
        %v2359 = vpop.f32.mrb[0].mxu0
        %v2360 = vadd.f32 %v2131, %v2359
        %v2361 = vpop.f32.mrb[0].mxu0
        %v2362 = vpop.f32.mrb[0].mxu0
        %v2363 = vpop.f32.mrb[0].mxu0
        %2364 = vdwg.mxu0
        %2365 = vmatprep.subr.bf16.mxu0 0
        %2366 = vmatpush1.bf16.msra.mxu0 %v2277
        %2367 = vmatprep.subr.bf16.mxu0 0
        %2368 = vmatpush1.bf16.msra.mxu0 %v2278
        %2369 = vmatprep.subr.bf16.mxu0 0
        %2370 = vmatpush1.bf16.msra.mxu0 %v2279
        %2371 = vmatprep.subr.bf16.mxu0 0
        %2372 = vmatpush1.bf16.msra.mxu0 %v2280
        %2373 = vmatprep.subr.bf16.mxu0 0
        %2374 = vmatpush1.bf16.msra.mxu0 %v2281
        %2375 = vmatprep.subr.bf16.mxu0 0
        %2376 = vmatpush1.bf16.msra.mxu0 %v2282
        %2377 = vmatprep.subr.bf16.mxu0 0
        %2378 = vmatpush1.bf16.msra.mxu0 %v2283
        %2379 = vmatprep.subr.bf16.mxu0 0
        %2380 = vmatpush1.bf16.msra.mxu0 %v2284
        %2381 = vmatprep.subr.bf16.mxu0 0
        %2382 = vmatpush1.bf16.msra.mxu0 %v2285
        %2383 = vmatprep.subr.bf16.mxu0 0
        %2384 = vmatpush1.bf16.msra.mxu0 %v2286
        %2385 = vmatprep.subr.bf16.mxu0 0
        %2386 = vmatpush1.bf16.msra.mxu0 %v2287
        %2387 = vmatprep.subr.bf16.mxu0 0
        %2388 = vmatpush1.bf16.msra.mxu0 %v2288
        %2389 = vmatprep.subr.bf16.mxu0 0
        %2390 = vmatpush1.bf16.msra.mxu0 %v2289
        %2391 = vmatprep.subr.bf16.mxu0 0
        %2392 = vmatpush1.bf16.msra.mxu0 %v2290
        %2393 = vmatprep.subr.bf16.mxu0 0
        %2394 = vmatpush1.bf16.msra.mxu0 %v2291
        %2395 = vmatprep.subr.bf16.mxu0 0
        %2396 = vmatpush1.bf16.msra.mxu0 %v2292
        %2397 = vmatprep.mubr.bf16.mxu0 %v2061
        %2398 = vmatmul.mubr.bf16.gmra.mrb[0].mxu0 %v2060
        %v2399 = vpop.f32.mrb[0].mxu0
        %v2400 = vadd.f32 %v2360, %v2399
        %v2401 = vpop.f32.mrb[0].mxu0
        %v2402 = vpop.f32.mrb[0].mxu0
        %v2403 = vpop.f32.mrb[0].mxu0
        %2404 = vdwg.mxu0
        %v2405 = vadd.f32 %v1727, %v2400
        %s2406 = scalar_lea.vmem %s4, 1
        %v2407 = vld [vmem:[%s2406] sm:$0x1]
        %s2408 = scalar_lea.vmem %s5, 1
        %v2409 = vld [vmem:[%s2408] sm:$0x1]
        %v2410 = vsel %vm853, %v2405, 0.0
        %2411 = vadd.xlane.f32.xlu0 %v2410
        %v2412 = vpop.xlane.xlu0 %2411
        %v2413 = vmul.f32 %v2412, %v857
        %v2414 = vsub.f32 %v2405, %v2413
        %v2415 = vmul.f32 %v2414, %v2414
        %v2416 = vsel %vm853, %v2415, 0.0
        %2417 = vadd.xlane.f32.xlu0 %v2416
        %v2418 = vpop.xlane.xlu0 %2417
        %v2419 = vmul.f32 %v2418, %v857
        %v2420 = vadd.f32 %v2419, 1e-05
        %v2421 = vrsqrt.pop %v2420
        %v2422 = vmul.f32 %v2414, %v2421
        %v2424 = vlaneseq
        %v2425 = vshrl.u32 %v2424, 7
        %v2426 = vsub.s32 0, %v2425
        %v2427 = vrot.slane %v2407, %v2426
        %v2429 = vmul.f32 %v2422, %v2427
        %v2431 = vlaneseq
        %v2432 = vshrl.u32 %v2431, 7
        %v2433 = vsub.s32 0, %v2432
        %v2434 = vrot.slane %v2409, %v2433
        %v2436 = vadd.f32 %v2429, %v2434
        %v2437 = vpack.c.bf16 %v2436, %v2436
        %s2438 = scalar_lea.vmem %s6, 192
        %v2439 = vld [vmem:[%s2438] sm:$0xff]
        %v2440 = vld [vmem:[%s2438 + $0x8] sm:$0xf]
        %v2441 = vld [vmem:[%s2438 + $0xc] sm:$0xff]
        %v2442 = vld [vmem:[%s2438 + $0x14] sm:$0xf]
        %v2443 = vld [vmem:[%s2438 + $0x18] sm:$0xff]
        %v2444 = vld [vmem:[%s2438 + $0x20] sm:$0xf]
        %v2445 = vld [vmem:[%s2438 + $0x24] sm:$0xff]
        %v2446 = vld [vmem:[%s2438 + $0x2c] sm:$0xf]
        %v2447 = vld [vmem:[%s2438 + $0x30] sm:$0xff]
        %v2448 = vld [vmem:[%s2438 + $0x38] sm:$0xf]
        %v2449 = vld [vmem:[%s2438 + $0x3c] sm:$0xff]
        %v2450 = vld [vmem:[%s2438 + $0x44] sm:$0xf]
        %v2451 = vld [vmem:[%s2438 + $0x48] sm:$0xff]
        %v2452 = vld [vmem:[%s2438 + $0x50] sm:$0xf]
        %v2453 = vld [vmem:[%s2438 + $0x54] sm:$0xff]
        %v2454 = vld [vmem:[%s2438 + $0x5c] sm:$0xf]
        %v2455 = vld [vmem:[%s2438 + $0x60] sm:$0xff]
        %v2456 = vld [vmem:[%s2438 + $0x68] sm:$0xf]
        %v2457 = vld [vmem:[%s2438 + $0x6c] sm:$0xff]
        %v2458 = vld [vmem:[%s2438 + $0x74] sm:$0xf]
        %v2459 = vld [vmem:[%s2438 + $0x78] sm:$0xff]
        %v2460 = vld [vmem:[%s2438 + $0x80] sm:$0xf]
        %v2461 = vld [vmem:[%s2438 + $0x84] sm:$0xff]
        %v2462 = vld [vmem:[%s2438 + $0x8c] sm:$0xf]
        %v2463 = vld [vmem:[%s2438 + $0x90] sm:$0xff]
        %v2464 = vld [vmem:[%s2438 + $0x98] sm:$0xf]
        %v2465 = vld [vmem:[%s2438 + $0x9c] sm:$0xff]
        %v2466 = vld [vmem:[%s2438 + $0xa4] sm:$0xf]
        %v2467 = vld [vmem:[%s2438 + $0xa8] sm:$0xff]
        %v2468 = vld [vmem:[%s2438 + $0xb0] sm:$0xf]
        %v2469 = vld [vmem:[%s2438 + $0xb4] sm:$0xff]
        %v2470 = vld [vmem:[%s2438 + $0xbc] sm:$0xf]
        %s2471 = scalar_lea.vmem %s7, 3
        %v2472 = vld [vmem:[%s2471] sm:$0x7]
        %v2474 = vlaneseq
        %v2475 = vshrl.u32 %v2474, 7
        %v2476 = vsub.s32 0, %v2475
        %v2477 = vrot.slane %v2472, %v2476
        %v2478 = vlaneseq
        %v2479 = vshrl.u32 %v2478, 7
        %v2480 = vsub.s32 1, %v2479
        %v2481 = vrot.slane %v2472, %v2480
        %v2482 = vlaneseq
        %v2483 = vshrl.u32 %v2482, 7
        %v2484 = vsub.s32 2, %v2483
        %v2485 = vrot.slane %v2472, %v2484
        %v2521 = vunpack.c.l.b16 %v2439
        %v2522 = vunpack.c.h.b16 %v2439
        %v2523 = vunpack.c.l.b16 %v2440
        %v2524 = vunpack.c.l.b16 %v2441
        %v2525 = vunpack.c.h.b16 %v2441
        %v2526 = vunpack.c.l.b16 %v2442
        %v2527 = vunpack.c.l.b16 %v2443
        %v2528 = vunpack.c.h.b16 %v2443
        %v2529 = vunpack.c.l.b16 %v2444
        %v2530 = vunpack.c.l.b16 %v2445
        %v2531 = vunpack.c.h.b16 %v2445
        %v2532 = vunpack.c.l.b16 %v2446
        %v2533 = vunpack.c.l.b16 %v2447
        %v2534 = vunpack.c.h.b16 %v2447
        %v2535 = vunpack.c.l.b16 %v2448
        %v2536 = vunpack.c.l.b16 %v2449
        %v2537 = vunpack.c.h.b16 %v2449
        %v2538 = vunpack.c.l.b16 %v2450
        %v2539 = vunpack.c.l.b16 %v2451
        %v2540 = vunpack.c.h.b16 %v2451
        %v2541 = vunpack.c.l.b16 %v2452
        %v2542 = vunpack.c.l.b16 %v2453
        %v2543 = vunpack.c.h.b16 %v2453
        %v2544 = vunpack.c.l.b16 %v2454
        %v2545 = vunpack.c.l.b16 %v2455
        %v2546 = vunpack.c.h.b16 %v2455
        %v2547 = vunpack.c.l.b16 %v2456
        %v2548 = vunpack.c.l.b16 %v2457
        %v2549 = vunpack.c.h.b16 %v2457
        %v2550 = vunpack.c.l.b16 %v2458
        %v2551 = vunpack.c.l.b16 %v2459
        %v2552 = vunpack.c.h.b16 %v2459
        %v2553 = vunpack.c.l.b16 %v2460
        %v2554 = vunpack.c.l.b16 %v2461
        %v2555 = vunpack.c.h.b16 %v2461
        %v2556 = vunpack.c.l.b16 %v2462
        %v2557 = vunpack.c.l.b16 %v2463
        %v2558 = vunpack.c.h.b16 %v2463
        %v2559 = vunpack.c.l.b16 %v2464
        %v2560 = vunpack.c.l.b16 %v2465
        %v2561 = vunpack.c.h.b16 %v2465
        %v2562 = vunpack.c.l.b16 %v2466
        %v2563 = vunpack.c.l.b16 %v2467
        %v2564 = vunpack.c.h.b16 %v2467
        %v2565 = vunpack.c.l.b16 %v2468
        %v2566 = vunpack.c.l.b16 %v2469
        %v2567 = vunpack.c.h.b16 %v2469
        %v2568 = vunpack.c.l.b16 %v2470
        %v2569 = vpack.c.b16 %v2524, %v2521
        %v2570 = vpack.c.b16 %v2525, %v2522
        %v2571 = vpack.c.b16 %v2526, %v2523
        %v2572 = vpack.c.b16 %v2530, %v2527
        %v2573 = vpack.c.b16 %v2531, %v2528
        %v2574 = vpack.c.b16 %v2532, %v2529
        %v2575 = vpack.c.b16 %v2536, %v2533
        %v2576 = vpack.c.b16 %v2537, %v2534
        %v2577 = vpack.c.b16 %v2538, %v2535
        %v2578 = vpack.c.b16 %v2542, %v2539
        %v2579 = vpack.c.b16 %v2543, %v2540
        %v2580 = vpack.c.b16 %v2544, %v2541
        %v2581 = vpack.c.b16 %v2548, %v2545
        %v2582 = vpack.c.b16 %v2549, %v2546
        %v2583 = vpack.c.b16 %v2550, %v2547
        %v2584 = vpack.c.b16 %v2554, %v2551
        %v2585 = vpack.c.b16 %v2555, %v2552
        %v2586 = vpack.c.b16 %v2556, %v2553
        %v2587 = vpack.c.b16 %v2560, %v2557
        %v2588 = vpack.c.b16 %v2561, %v2558
        %v2589 = vpack.c.b16 %v2562, %v2559
        %v2590 = vpack.c.b16 %v2566, %v2563
        %v2591 = vpack.c.b16 %v2567, %v2564
        %v2592 = vpack.c.b16 %v2568, %v2565
        %2617 = vmatprep.subr.bf16.mxu0 %v2570
        %2618 = vmatpush1.bf16.msra.mxu0 %v2569
        %2619 = vmatprep.subr.bf16.mxu0 %v2573
        %2620 = vmatpush1.bf16.msra.mxu0 %v2572
        %2621 = vmatprep.subr.bf16.mxu0 %v2576
        %2622 = vmatpush1.bf16.msra.mxu0 %v2575
        %2623 = vmatprep.subr.bf16.mxu0 %v2579
        %2624 = vmatpush1.bf16.msra.mxu0 %v2578
        %2625 = vmatprep.subr.bf16.mxu0 %v2582
        %2626 = vmatpush1.bf16.msra.mxu0 %v2581
        %2627 = vmatprep.subr.bf16.mxu0 %v2585
        %2628 = vmatpush1.bf16.msra.mxu0 %v2584
        %2629 = vmatprep.subr.bf16.mxu0 %v2588
        %2630 = vmatpush1.bf16.msra.mxu0 %v2587
        %2631 = vmatprep.subr.bf16.mxu0 %v2591
        %2632 = vmatpush1.bf16.msra.mxu0 %v2590
        %2633 = vmatprep.subr.bf16.mxu0 0
        %2634 = vmatpush1.bf16.msra.mxu0 0
        %2635 = vmatprep.subr.bf16.mxu0 0
        %2636 = vmatpush1.bf16.msra.mxu0 0
        %2637 = vmatprep.subr.bf16.mxu0 0
        %2638 = vmatpush1.bf16.msra.mxu0 0
        %2639 = vmatprep.subr.bf16.mxu0 0
        %2640 = vmatpush1.bf16.msra.mxu0 0
        %2641 = vmatprep.subr.bf16.mxu0 0
        %2642 = vmatpush1.bf16.msra.mxu0 0
        %2643 = vmatprep.subr.bf16.mxu0 0
        %2644 = vmatpush1.bf16.msra.mxu0 0
        %2645 = vmatprep.subr.bf16.mxu0 0
        %2646 = vmatpush1.bf16.msra.mxu0 0
        %2647 = vmatprep.subr.bf16.mxu0 0
        %2648 = vmatpush1.bf16.msra.mxu0 0
        %2649 = vmatprep.mubr.bf16.mxu0 0
        %2650 = vmatmul.mubr.bf16.gmra.mrb[0].mxu0 %v2437
        %v2651 = vpop.f32.mrb[0].mxu0
        %v2652 = vadd.f32 %v2477, %v2651
        %v2653 = vpop.f32.mrb[0].mxu0
        %v2654 = vadd.f32 %v2481, %v2653
        %v2655 = vpop.f32.mrb[0].mxu0
        %v2656 = vpop.f32.mrb[0].mxu0
        %2657 = vdwg.mxu0
        %2658 = vmatprep.subr.bf16.mxu0 0
        %2659 = vmatpush1.bf16.msra.mxu0 %v2571
        %2660 = vmatprep.subr.bf16.mxu0 0
        %2661 = vmatpush1.bf16.msra.mxu0 %v2574
        %2662 = vmatprep.subr.bf16.mxu0 0
        %2663 = vmatpush1.bf16.msra.mxu0 %v2577
        %2664 = vmatprep.subr.bf16.mxu0 0
        %2665 = vmatpush1.bf16.msra.mxu0 %v2580
        %2666 = vmatprep.subr.bf16.mxu0 0
        %2667 = vmatpush1.bf16.msra.mxu0 %v2583
        %2668 = vmatprep.subr.bf16.mxu0 0
        %2669 = vmatpush1.bf16.msra.mxu0 %v2586
        %2670 = vmatprep.subr.bf16.mxu0 0
        %2671 = vmatpush1.bf16.msra.mxu0 %v2589
        %2672 = vmatprep.subr.bf16.mxu0 0
        %2673 = vmatpush1.bf16.msra.mxu0 %v2592
        %2674 = vmatprep.subr.bf16.mxu0 0
        %2675 = vmatpush1.bf16.msra.mxu0 0
        %2676 = vmatprep.subr.bf16.mxu0 0
        %2677 = vmatpush1.bf16.msra.mxu0 0
        %2678 = vmatprep.subr.bf16.mxu0 0
        %2679 = vmatpush1.bf16.msra.mxu0 0
        %2680 = vmatprep.subr.bf16.mxu0 0
        %2681 = vmatpush1.bf16.msra.mxu0 0
        %2682 = vmatprep.subr.bf16.mxu0 0
        %2683 = vmatpush1.bf16.msra.mxu0 0
        %2684 = vmatprep.subr.bf16.mxu0 0
        %2685 = vmatpush1.bf16.msra.mxu0 0
        %2686 = vmatprep.subr.bf16.mxu0 0
        %2687 = vmatpush1.bf16.msra.mxu0 0
        %2688 = vmatprep.subr.bf16.mxu0 0
        %2689 = vmatpush1.bf16.msra.mxu0 0
        %2690 = vmatprep.mubr.bf16.mxu0 0
        %2691 = vmatmul.mubr.bf16.gmra.mrb[0].mxu0 %v2437
        %v2692 = vpop.f32.mrb[0].mxu0
        %v2693 = vadd.f32 %v2485, %v2692
        %v2694 = vpop.f32.mrb[0].mxu0
        %v2695 = vpop.f32.mrb[0].mxu0
        %v2696 = vpop.f32.mrb[0].mxu0
        %2697 = vdwg.mxu0
        %v2698 = vadd.f32 %v2652, %v844
        %v2699 = vadd.f32 %v2654, %v844
        %v2700 = vpack.c.bf16 %v2698, %v2698
        %v2701 = vpack.c.bf16 %v2699, %v2699
        %v2702 = vpack.c.bf16 %v2693, %v2693
        %v2704 = vsel %vm1146, %v2700, 0
        %v2707 = vsel %vm1146, %v2701, 0
        %2709 = vmatprep.subr.bf16.mxu0 0
        %2710 = vmatpush1.bf16.xpose.msra.mxu0 %v2707
        %2711 = vmatprep.subr.bf16.mxu0 0
        %2712 = vmatpush1.bf16.xpose.msra.mxu0 0
        %2713 = vmatprep.subr.bf16.mxu0 0
        %2714 = vmatpush1.bf16.xpose.msra.mxu0 0
        %2715 = vmatprep.subr.bf16.mxu0 0
        %2716 = vmatpush1.bf16.xpose.msra.mxu0 0
        %2717 = vmatprep.subr.bf16.mxu0 0
        %2718 = vmatpush1.bf16.xpose.msra.mxu0 0
        %2719 = vmatprep.subr.bf16.mxu0 0
        %2720 = vmatpush1.bf16.xpose.msra.mxu0 0
        %2721 = vmatprep.subr.bf16.mxu0 0
        %2722 = vmatpush1.bf16.xpose.msra.mxu0 0
        %2723 = vmatprep.subr.bf16.mxu0 0
        %2724 = vmatpush1.bf16.xpose.msra.mxu0 0
        %2725 = vmatprep.subr.bf16.mxu0 0
        %2726 = vmatpush1.bf16.xpose.msra.mxu0 0
        %2727 = vmatprep.subr.bf16.mxu0 0
        %2728 = vmatpush1.bf16.xpose.msra.mxu0 0
        %2729 = vmatprep.subr.bf16.mxu0 0
        %2730 = vmatpush1.bf16.xpose.msra.mxu0 0
        %2731 = vmatprep.subr.bf16.mxu0 0
        %2732 = vmatpush1.bf16.xpose.msra.mxu0 0
        %2733 = vmatprep.subr.bf16.mxu0 0
        %2734 = vmatpush1.bf16.xpose.msra.mxu0 0
        %2735 = vmatprep.subr.bf16.mxu0 0
        %2736 = vmatpush1.bf16.xpose.msra.mxu0 0
        %2737 = vmatprep.subr.bf16.mxu0 0
        %2738 = vmatpush1.bf16.xpose.msra.mxu0 0
        %2739 = vmatprep.subr.bf16.mxu0 0
        %2740 = vmatpush1.bf16.xpose.msra.mxu0 0
        %2741 = vmatprep.mubr.bf16.mxu0 0
        %2742 = vmatmul.mubr.bf16.gmra.mrb[0].mxu0 %v2704
        %v2743 = vpop.f32.mrb[0].mxu0
        %v2744 = vadd.f32 0.0, %v2743
        %v2745 = vpop.f32.mrb[0].mxu0
        %v2746 = vpop.f32.mrb[0].mxu0
        %v2747 = vpop.f32.mrb[0].mxu0
        %2748 = vdwg.mxu0
        %v2749 = vmul.f32 %v2744, 0.17677669
        %v2750 = vadd.f32 %v2749, %v850
        %v2751 = vsel %vm1195, %v2750, -inf
        %2752 = vmax.xlane.f32.xlu0 %v2751
        %v2753 = vpop.xlane.xlu0 %2752
        %v2754 = vsub.f32 %v2750, %v2753
        %v2755 = vmul.f32 %v2754, 1.442695
        %v2756 = vpow.pop %v2755
        %v2757 = vsel %vm1195, %v2756, 0.0
        %2758 = vadd.xlane.f32.xlu0 %v2757
        %v2759 = vpop.xlane.xlu0 %2758
        %v2760 = vrcp.pop %v2759
        %v2761 = vmul.f32 %v2756, %v2760
        %v2762 = vpack.c.bf16 %v2761, %v2761
        %v2764 = vsel %vm1208, %v2762, 0
        %v2767 = vand.u32 %v2702, %v1215
        %2769 = vmatprep.subr.bf16.mxu0 0
        %2770 = vmatpush1.bf16.msra.mxu0 %v2767
        %2771 = vmatprep.subr.bf16.mxu0 0
        %2772 = vmatpush1.bf16.msra.mxu0 0
        %2773 = vmatprep.subr.bf16.mxu0 0
        %2774 = vmatpush1.bf16.msra.mxu0 0
        %2775 = vmatprep.subr.bf16.mxu0 0
        %2776 = vmatpush1.bf16.msra.mxu0 0
        %2777 = vmatprep.subr.bf16.mxu0 0
        %2778 = vmatpush1.bf16.msra.mxu0 0
        %2779 = vmatprep.subr.bf16.mxu0 0
        %2780 = vmatpush1.bf16.msra.mxu0 0
        %2781 = vmatprep.subr.bf16.mxu0 0
        %2782 = vmatpush1.bf16.msra.mxu0 0
        %2783 = vmatprep.subr.bf16.mxu0 0
        %2784 = vmatpush1.bf16.msra.mxu0 0
        %2785 = vmatprep.subr.bf16.mxu0 0
        %2786 = vmatpush1.bf16.msra.mxu0 0
        %2787 = vmatprep.subr.bf16.mxu0 0
        %2788 = vmatpush1.bf16.msra.mxu0 0
        %2789 = vmatprep.subr.bf16.mxu0 0
        %2790 = vmatpush1.bf16.msra.mxu0 0
        %2791 = vmatprep.subr.bf16.mxu0 0
        %2792 = vmatpush1.bf16.msra.mxu0 0
        %2793 = vmatprep.subr.bf16.mxu0 0
        %2794 = vmatpush1.bf16.msra.mxu0 0
        %2795 = vmatprep.subr.bf16.mxu0 0
        %2796 = vmatpush1.bf16.msra.mxu0 0
        %2797 = vmatprep.subr.bf16.mxu0 0
        %2798 = vmatpush1.bf16.msra.mxu0 0
        %2799 = vmatprep.subr.bf16.mxu0 0
        %2800 = vmatpush1.bf16.msra.mxu0 0
        %2801 = vmatprep.mubr.bf16.mxu0 0
        %2802 = vmatmul.mubr.bf16.gmra.mrb[0].mxu0 %v2764
        %v2803 = vpop.f32.mrb[0].mxu0
        %v2804 = vadd.f32 0.0, %v2803
        %v2805 = vpop.f32.mrb[0].mxu0
        %v2806 = vpop.f32.mrb[0].mxu0
        %v2807 = vpop.f32.mrb[0].mxu0
        %2808 = vdwg.mxu0
        %2810 = vrot.lane.b32.xlu0 %v2700, 96
        %v2811 = vpop.permute.xlu0 %2810
        %2813 = vrot.lane.b32.xlu0 %v2701, 96
        %v2814 = vpop.permute.xlu0 %2813
        %v2816 = vsel %vm1146, %v2811, 0
        %v2819 = vsel %vm1146, %v2814, 0
        %2821 = vmatprep.subr.bf16.mxu0 0
        %2822 = vmatpush1.bf16.xpose.msra.mxu0 %v2819
        %2823 = vmatprep.subr.bf16.mxu0 0
        %2824 = vmatpush1.bf16.xpose.msra.mxu0 0
        %2825 = vmatprep.subr.bf16.mxu0 0
        %2826 = vmatpush1.bf16.xpose.msra.mxu0 0
        %2827 = vmatprep.subr.bf16.mxu0 0
        %2828 = vmatpush1.bf16.xpose.msra.mxu0 0
        %2829 = vmatprep.subr.bf16.mxu0 0
        %2830 = vmatpush1.bf16.xpose.msra.mxu0 0
        %2831 = vmatprep.subr.bf16.mxu0 0
        %2832 = vmatpush1.bf16.xpose.msra.mxu0 0
        %2833 = vmatprep.subr.bf16.mxu0 0
        %2834 = vmatpush1.bf16.xpose.msra.mxu0 0
        %2835 = vmatprep.subr.bf16.mxu0 0
        %2836 = vmatpush1.bf16.xpose.msra.mxu0 0
        %2837 = vmatprep.subr.bf16.mxu0 0
        %2838 = vmatpush1.bf16.xpose.msra.mxu0 0
        %2839 = vmatprep.subr.bf16.mxu0 0
        %2840 = vmatpush1.bf16.xpose.msra.mxu0 0
        %2841 = vmatprep.subr.bf16.mxu0 0
        %2842 = vmatpush1.bf16.xpose.msra.mxu0 0
        %2843 = vmatprep.subr.bf16.mxu0 0
        %2844 = vmatpush1.bf16.xpose.msra.mxu0 0
        %2845 = vmatprep.subr.bf16.mxu0 0
        %2846 = vmatpush1.bf16.xpose.msra.mxu0 0
        %2847 = vmatprep.subr.bf16.mxu0 0
        %2848 = vmatpush1.bf16.xpose.msra.mxu0 0
        %2849 = vmatprep.subr.bf16.mxu0 0
        %2850 = vmatpush1.bf16.xpose.msra.mxu0 0
        %2851 = vmatprep.subr.bf16.mxu0 0
        %2852 = vmatpush1.bf16.xpose.msra.mxu0 0
        %2853 = vmatprep.mubr.bf16.mxu0 0
        %2854 = vmatmul.mubr.bf16.gmra.mrb[0].mxu0 %v2816
        %v2855 = vpop.f32.mrb[0].mxu0
        %v2856 = vadd.f32 0.0, %v2855
        %v2857 = vpop.f32.mrb[0].mxu0
        %v2858 = vpop.f32.mrb[0].mxu0
        %v2859 = vpop.f32.mrb[0].mxu0
        %2860 = vdwg.mxu0
        %v2861 = vmul.f32 %v2856, 0.17677669
        %v2862 = vadd.f32 %v2861, %v850
        %v2863 = vsel %vm1195, %v2862, -inf
        %2864 = vmax.xlane.f32.xlu0 %v2863
        %v2865 = vpop.xlane.xlu0 %2864
        %v2866 = vsub.f32 %v2862, %v2865
        %v2867 = vmul.f32 %v2866, 1.442695
        %v2868 = vpow.pop %v2867
        %v2869 = vsel %vm1195, %v2868, 0.0
        %2870 = vadd.xlane.f32.xlu0 %v2869
        %v2871 = vpop.xlane.xlu0 %2870
        %v2872 = vrcp.pop %v2871
        %v2873 = vmul.f32 %v2868, %v2872
        %v2874 = vpack.c.bf16 %v2873, %v2873
        %2876 = vrot.lane.b32.xlu0 %v2702, 96
        %v2877 = vpop.permute.xlu0 %2876
        %v2879 = vsel %vm1208, %v2874, 0
        %v2882 = vand.u32 %v2877, %v1215
        %2884 = vmatprep.subr.bf16.mxu0 0
        %2885 = vmatpush1.bf16.msra.mxu0 %v2882
        %2886 = vmatprep.subr.bf16.mxu0 0
        %2887 = vmatpush1.bf16.msra.mxu0 0
        %2888 = vmatprep.subr.bf16.mxu0 0
        %2889 = vmatpush1.bf16.msra.mxu0 0
        %2890 = vmatprep.subr.bf16.mxu0 0
        %2891 = vmatpush1.bf16.msra.mxu0 0
        %2892 = vmatprep.subr.bf16.mxu0 0
        %2893 = vmatpush1.bf16.msra.mxu0 0
        %2894 = vmatprep.subr.bf16.mxu0 0
        %2895 = vmatpush1.bf16.msra.mxu0 0
        %2896 = vmatprep.subr.bf16.mxu0 0
        %2897 = vmatpush1.bf16.msra.mxu0 0
        %2898 = vmatprep.subr.bf16.mxu0 0
        %2899 = vmatpush1.bf16.msra.mxu0 0
        %2900 = vmatprep.subr.bf16.mxu0 0
        %2901 = vmatpush1.bf16.msra.mxu0 0
        %2902 = vmatprep.subr.bf16.mxu0 0
        %2903 = vmatpush1.bf16.msra.mxu0 0
        %2904 = vmatprep.subr.bf16.mxu0 0
        %2905 = vmatpush1.bf16.msra.mxu0 0
        %2906 = vmatprep.subr.bf16.mxu0 0
        %2907 = vmatpush1.bf16.msra.mxu0 0
        %2908 = vmatprep.subr.bf16.mxu0 0
        %2909 = vmatpush1.bf16.msra.mxu0 0
        %2910 = vmatprep.subr.bf16.mxu0 0
        %2911 = vmatpush1.bf16.msra.mxu0 0
        %2912 = vmatprep.subr.bf16.mxu0 0
        %2913 = vmatpush1.bf16.msra.mxu0 0
        %2914 = vmatprep.subr.bf16.mxu0 0
        %2915 = vmatpush1.bf16.msra.mxu0 0
        %2916 = vmatprep.mubr.bf16.mxu0 0
        %2917 = vmatmul.mubr.bf16.gmra.mrb[0].mxu0 %v2879
        %v2918 = vpop.f32.mrb[0].mxu0
        %v2919 = vadd.f32 0.0, %v2918
        %v2920 = vpop.f32.mrb[0].mxu0
        %v2921 = vpop.f32.mrb[0].mxu0
        %v2922 = vpop.f32.mrb[0].mxu0
        %2923 = vdwg.mxu0
        %2924 = vrot.lane.b32.xlu0 %v2700, 64
        %v2925 = vpop.permute.xlu0 %2924
        %2926 = vrot.lane.b32.xlu0 %v2701, 64
        %v2927 = vpop.permute.xlu0 %2926
        %v2929 = vsel %vm1146, %v2925, 0
        %v2932 = vsel %vm1146, %v2927, 0
        %2934 = vmatprep.subr.bf16.mxu0 0
        %2935 = vmatpush1.bf16.xpose.msra.mxu0 %v2932
        %2936 = vmatprep.subr.bf16.mxu0 0
        %2937 = vmatpush1.bf16.xpose.msra.mxu0 0
        %2938 = vmatprep.subr.bf16.mxu0 0
        %2939 = vmatpush1.bf16.xpose.msra.mxu0 0
        %2940 = vmatprep.subr.bf16.mxu0 0
        %2941 = vmatpush1.bf16.xpose.msra.mxu0 0
        %2942 = vmatprep.subr.bf16.mxu0 0
        %2943 = vmatpush1.bf16.xpose.msra.mxu0 0
        %2944 = vmatprep.subr.bf16.mxu0 0
        %2945 = vmatpush1.bf16.xpose.msra.mxu0 0
        %2946 = vmatprep.subr.bf16.mxu0 0
        %2947 = vmatpush1.bf16.xpose.msra.mxu0 0
        %2948 = vmatprep.subr.bf16.mxu0 0
        %2949 = vmatpush1.bf16.xpose.msra.mxu0 0
        %2950 = vmatprep.subr.bf16.mxu0 0
        %2951 = vmatpush1.bf16.xpose.msra.mxu0 0
        %2952 = vmatprep.subr.bf16.mxu0 0
        %2953 = vmatpush1.bf16.xpose.msra.mxu0 0
        %2954 = vmatprep.subr.bf16.mxu0 0
        %2955 = vmatpush1.bf16.xpose.msra.mxu0 0
        %2956 = vmatprep.subr.bf16.mxu0 0
        %2957 = vmatpush1.bf16.xpose.msra.mxu0 0
        %2958 = vmatprep.subr.bf16.mxu0 0
        %2959 = vmatpush1.bf16.xpose.msra.mxu0 0
        %2960 = vmatprep.subr.bf16.mxu0 0
        %2961 = vmatpush1.bf16.xpose.msra.mxu0 0
        %2962 = vmatprep.subr.bf16.mxu0 0
        %2963 = vmatpush1.bf16.xpose.msra.mxu0 0
        %2964 = vmatprep.subr.bf16.mxu0 0
        %2965 = vmatpush1.bf16.xpose.msra.mxu0 0
        %2966 = vmatprep.mubr.bf16.mxu0 0
        %2967 = vmatmul.mubr.bf16.gmra.mrb[0].mxu0 %v2929
        %v2968 = vpop.f32.mrb[0].mxu0
        %v2969 = vadd.f32 0.0, %v2968
        %v2970 = vpop.f32.mrb[0].mxu0
        %v2971 = vpop.f32.mrb[0].mxu0
        %v2972 = vpop.f32.mrb[0].mxu0
        %2973 = vdwg.mxu0
        %v2974 = vmul.f32 %v2969, 0.17677669
        %v2975 = vadd.f32 %v2974, %v850
        %v2976 = vsel %vm1195, %v2975, -inf
        %2977 = vmax.xlane.f32.xlu0 %v2976
        %v2978 = vpop.xlane.xlu0 %2977
        %v2979 = vsub.f32 %v2975, %v2978
        %v2980 = vmul.f32 %v2979, 1.442695
        %v2981 = vpow.pop %v2980
        %v2982 = vsel %vm1195, %v2981, 0.0
        %2983 = vadd.xlane.f32.xlu0 %v2982
        %v2984 = vpop.xlane.xlu0 %2983
        %v2985 = vrcp.pop %v2984
        %v2986 = vmul.f32 %v2981, %v2985
        %v2987 = vpack.c.bf16 %v2986, %v2986
        %2988 = vrot.lane.b32.xlu0 %v2702, 64
        %v2989 = vpop.permute.xlu0 %2988
        %v2991 = vsel %vm1208, %v2987, 0
        %v2994 = vand.u32 %v2989, %v1215
        %2996 = vmatprep.subr.bf16.mxu0 0
        %2997 = vmatpush1.bf16.msra.mxu0 %v2994
        %2998 = vmatprep.subr.bf16.mxu0 0
        %2999 = vmatpush1.bf16.msra.mxu0 0
        %3000 = vmatprep.subr.bf16.mxu0 0
        %3001 = vmatpush1.bf16.msra.mxu0 0
        %3002 = vmatprep.subr.bf16.mxu0 0
        %3003 = vmatpush1.bf16.msra.mxu0 0
        %3004 = vmatprep.subr.bf16.mxu0 0
        %3005 = vmatpush1.bf16.msra.mxu0 0
        %3006 = vmatprep.subr.bf16.mxu0 0
        %3007 = vmatpush1.bf16.msra.mxu0 0
        %3008 = vmatprep.subr.bf16.mxu0 0
        %3009 = vmatpush1.bf16.msra.mxu0 0
        %3010 = vmatprep.subr.bf16.mxu0 0
        %3011 = vmatpush1.bf16.msra.mxu0 0
        %3012 = vmatprep.subr.bf16.mxu0 0
        %3013 = vmatpush1.bf16.msra.mxu0 0
        %3014 = vmatprep.subr.bf16.mxu0 0
        %3015 = vmatpush1.bf16.msra.mxu0 0
        %3016 = vmatprep.subr.bf16.mxu0 0
        %3017 = vmatpush1.bf16.msra.mxu0 0
        %3018 = vmatprep.subr.bf16.mxu0 0
        %3019 = vmatpush1.bf16.msra.mxu0 0
        %3020 = vmatprep.subr.bf16.mxu0 0
        %3021 = vmatpush1.bf16.msra.mxu0 0
        %3022 = vmatprep.subr.bf16.mxu0 0
        %3023 = vmatpush1.bf16.msra.mxu0 0
        %3024 = vmatprep.subr.bf16.mxu0 0
        %3025 = vmatpush1.bf16.msra.mxu0 0
        %3026 = vmatprep.subr.bf16.mxu0 0
        %3027 = vmatpush1.bf16.msra.mxu0 0
        %3028 = vmatprep.mubr.bf16.mxu0 0
        %3029 = vmatmul.mubr.bf16.gmra.mrb[0].mxu0 %v2991
        %v3030 = vpop.f32.mrb[0].mxu0
        %v3031 = vadd.f32 0.0, %v3030
        %v3032 = vpop.f32.mrb[0].mxu0
        %v3033 = vpop.f32.mrb[0].mxu0
        %v3034 = vpop.f32.mrb[0].mxu0
        %3035 = vdwg.mxu0
        %3036 = vrot.lane.b32.xlu0 %v2700, 32
        %v3037 = vpop.permute.xlu0 %3036
        %3038 = vrot.lane.b32.xlu0 %v2701, 32
        %v3039 = vpop.permute.xlu0 %3038
        %v3041 = vsel %vm1146, %v3037, 0
        %v3044 = vsel %vm1146, %v3039, 0
        %3046 = vmatprep.subr.bf16.mxu0 0
        %3047 = vmatpush1.bf16.xpose.msra.mxu0 %v3044
        %3048 = vmatprep.subr.bf16.mxu0 0
        %3049 = vmatpush1.bf16.xpose.msra.mxu0 0
        %3050 = vmatprep.subr.bf16.mxu0 0
        %3051 = vmatpush1.bf16.xpose.msra.mxu0 0
        %3052 = vmatprep.subr.bf16.mxu0 0
        %3053 = vmatpush1.bf16.xpose.msra.mxu0 0
        %3054 = vmatprep.subr.bf16.mxu0 0
        %3055 = vmatpush1.bf16.xpose.msra.mxu0 0
        %3056 = vmatprep.subr.bf16.mxu0 0
        %3057 = vmatpush1.bf16.xpose.msra.mxu0 0
        %3058 = vmatprep.subr.bf16.mxu0 0
        %3059 = vmatpush1.bf16.xpose.msra.mxu0 0
        %3060 = vmatprep.subr.bf16.mxu0 0
        %3061 = vmatpush1.bf16.xpose.msra.mxu0 0
        %3062 = vmatprep.subr.bf16.mxu0 0
        %3063 = vmatpush1.bf16.xpose.msra.mxu0 0
        %3064 = vmatprep.subr.bf16.mxu0 0
        %3065 = vmatpush1.bf16.xpose.msra.mxu0 0
        %3066 = vmatprep.subr.bf16.mxu0 0
        %3067 = vmatpush1.bf16.xpose.msra.mxu0 0
        %3068 = vmatprep.subr.bf16.mxu0 0
        %3069 = vmatpush1.bf16.xpose.msra.mxu0 0
        %3070 = vmatprep.subr.bf16.mxu0 0
        %3071 = vmatpush1.bf16.xpose.msra.mxu0 0
        %3072 = vmatprep.subr.bf16.mxu0 0
        %3073 = vmatpush1.bf16.xpose.msra.mxu0 0
        %3074 = vmatprep.subr.bf16.mxu0 0
        %3075 = vmatpush1.bf16.xpose.msra.mxu0 0
        %3076 = vmatprep.subr.bf16.mxu0 0
        %3077 = vmatpush1.bf16.xpose.msra.mxu0 0
        %3078 = vmatprep.mubr.bf16.mxu0 0
        %3079 = vmatmul.mubr.bf16.gmra.mrb[0].mxu0 %v3041
        %v3080 = vpop.f32.mrb[0].mxu0
        %v3081 = vadd.f32 0.0, %v3080
        %v3082 = vpop.f32.mrb[0].mxu0
        %v3083 = vpop.f32.mrb[0].mxu0
        %v3084 = vpop.f32.mrb[0].mxu0
        %3085 = vdwg.mxu0
        %v3086 = vmul.f32 %v3081, 0.17677669
        %v3087 = vadd.f32 %v3086, %v850
        %v3088 = vsel %vm1195, %v3087, -inf
        %3089 = vmax.xlane.f32.xlu0 %v3088
        %v3090 = vpop.xlane.xlu0 %3089
        %v3091 = vsub.f32 %v3087, %v3090
        %v3092 = vmul.f32 %v3091, 1.442695
        %v3093 = vpow.pop %v3092
        %v3094 = vsel %vm1195, %v3093, 0.0
        %3095 = vadd.xlane.f32.xlu0 %v3094
        %v3096 = vpop.xlane.xlu0 %3095
        %v3097 = vrcp.pop %v3096
        %v3098 = vmul.f32 %v3093, %v3097
        %v3099 = vpack.c.bf16 %v3098, %v3098
        %3100 = vrot.lane.b32.xlu0 %v2702, 32
        %v3101 = vpop.permute.xlu0 %3100
        %v3103 = vsel %vm1208, %v3099, 0
        %v3106 = vand.u32 %v3101, %v1215
        %3108 = vmatprep.subr.bf16.mxu0 0
        %3109 = vmatpush1.bf16.msra.mxu0 %v3106
        %3110 = vmatprep.subr.bf16.mxu0 0
        %3111 = vmatpush1.bf16.msra.mxu0 0
        %3112 = vmatprep.subr.bf16.mxu0 0
        %3113 = vmatpush1.bf16.msra.mxu0 0
        %3114 = vmatprep.subr.bf16.mxu0 0
        %3115 = vmatpush1.bf16.msra.mxu0 0
        %3116 = vmatprep.subr.bf16.mxu0 0
        %3117 = vmatpush1.bf16.msra.mxu0 0
        %3118 = vmatprep.subr.bf16.mxu0 0
        %3119 = vmatpush1.bf16.msra.mxu0 0
        %3120 = vmatprep.subr.bf16.mxu0 0
        %3121 = vmatpush1.bf16.msra.mxu0 0
        %3122 = vmatprep.subr.bf16.mxu0 0
        %3123 = vmatpush1.bf16.msra.mxu0 0
        %3124 = vmatprep.subr.bf16.mxu0 0
        %3125 = vmatpush1.bf16.msra.mxu0 0
        %3126 = vmatprep.subr.bf16.mxu0 0
        %3127 = vmatpush1.bf16.msra.mxu0 0
        %3128 = vmatprep.subr.bf16.mxu0 0
        %3129 = vmatpush1.bf16.msra.mxu0 0
        %3130 = vmatprep.subr.bf16.mxu0 0
        %3131 = vmatpush1.bf16.msra.mxu0 0
        %3132 = vmatprep.subr.bf16.mxu0 0
        %3133 = vmatpush1.bf16.msra.mxu0 0
        %3134 = vmatprep.subr.bf16.mxu0 0
        %3135 = vmatpush1.bf16.msra.mxu0 0
        %3136 = vmatprep.subr.bf16.mxu0 0
        %3137 = vmatpush1.bf16.msra.mxu0 0
        %3138 = vmatprep.subr.bf16.mxu0 0
        %3139 = vmatpush1.bf16.msra.mxu0 0
        %3140 = vmatprep.mubr.bf16.mxu0 0
        %3141 = vmatmul.mubr.bf16.gmra.mrb[0].mxu0 %v3103
        %v3142 = vpop.f32.mrb[0].mxu0
        %v3143 = vadd.f32 0.0, %v3142
        %v3144 = vpop.f32.mrb[0].mxu0
        %v3145 = vpop.f32.mrb[0].mxu0
        %v3146 = vpop.f32.mrb[0].mxu0
        %3147 = vdwg.mxu0
        %3149 = vrot.lane.b32.xlu0 %v2919, 32
        %v3150 = vpop.permute.xlu0 %3149
        %3153 = vrot.lane.b32.xlu0 %v3031, 64
        %v3154 = vpop.permute.xlu0 %3153
        %3157 = vrot.lane.b32.xlu0 %v3143, 96
        %v3158 = vpop.permute.xlu0 %3157
        %v3160 = vsel %vm1146, %v2804, %v3150
        %v3161 = vsel %vm1611, %v3160, %v3154
        %v3162 = vsel %vm1613, %v3161, %v3158
        %v3163 = vpack.c.bf16 %v3162, %v3162
        %s3164 = scalar_lea.vmem [#allocation2], 64
        %v3165 = vld [vmem:[%s3164] sm:$0xf]
        %v3166 = vld [vmem:[%s3164 + $0x4] sm:$0xf]
        %v3167 = vld [vmem:[%s3164 + $0x8] sm:$0xf]
        %v3168 = vld [vmem:[%s3164 + $0xc] sm:$0xf]
        %v3169 = vld [vmem:[%s3164 + $0x10] sm:$0xf]
        %v3170 = vld [vmem:[%s3164 + $0x14] sm:$0xf]
        %v3171 = vld [vmem:[%s3164 + $0x18] sm:$0xf]
        %v3172 = vld [vmem:[%s3164 + $0x1c] sm:$0xf]
        %v3173 = vld [vmem:[%s3164 + $0x20] sm:$0xf]
        %v3174 = vld [vmem:[%s3164 + $0x24] sm:$0xf]
        %v3175 = vld [vmem:[%s3164 + $0x28] sm:$0xf]
        %v3176 = vld [vmem:[%s3164 + $0x2c] sm:$0xf]
        %v3177 = vld [vmem:[%s3164 + $0x30] sm:$0xf]
        %v3178 = vld [vmem:[%s3164 + $0x34] sm:$0xf]
        %v3179 = vld [vmem:[%s3164 + $0x38] sm:$0xf]
        %v3180 = vld [vmem:[%s3164 + $0x3c] sm:$0xf]
        %s3181 = scalar_lea.vmem %s9, 1
        %v3182 = vld [vmem:[%s3181] sm:$0x1]
        %v3184 = vlaneseq
        %v3185 = vshrl.u32 %v3184, 7
        %v3186 = vsub.s32 0, %v3185
        %v3187 = vrot.slane %v3182, %v3186
        %v3205 = vunpack.c.l.b16 %v3165
        %v3206 = vunpack.c.l.b16 %v3166
        %v3207 = vunpack.c.l.b16 %v3167
        %v3208 = vunpack.c.l.b16 %v3168
        %v3209 = vunpack.c.l.b16 %v3169
        %v3210 = vunpack.c.l.b16 %v3170
        %v3211 = vunpack.c.l.b16 %v3171
        %v3212 = vunpack.c.l.b16 %v3172
        %v3213 = vunpack.c.l.b16 %v3173
        %v3214 = vunpack.c.l.b16 %v3174
        %v3215 = vunpack.c.l.b16 %v3175
        %v3216 = vunpack.c.l.b16 %v3176
        %v3217 = vunpack.c.l.b16 %v3177
        %v3218 = vunpack.c.l.b16 %v3178
        %v3219 = vunpack.c.l.b16 %v3179
        %v3220 = vunpack.c.l.b16 %v3180
        %v3221 = vpack.c.b16 %v3206, %v3205
        %v3222 = vpack.c.b16 %v3208, %v3207
        %v3223 = vpack.c.b16 %v3210, %v3209
        %v3224 = vpack.c.b16 %v3212, %v3211
        %v3225 = vpack.c.b16 %v3214, %v3213
        %v3226 = vpack.c.b16 %v3216, %v3215
        %v3227 = vpack.c.b16 %v3218, %v3217
        %v3228 = vpack.c.b16 %v3220, %v3219
        %3237 = vmatprep.subr.bf16.mxu0 0
        %3238 = vmatpush1.bf16.msra.mxu0 %v3221
        %3239 = vmatprep.subr.bf16.mxu0 0
        %3240 = vmatpush1.bf16.msra.mxu0 %v3222
        %3241 = vmatprep.subr.bf16.mxu0 0
        %3242 = vmatpush1.bf16.msra.mxu0 %v3223
        %3243 = vmatprep.subr.bf16.mxu0 0
        %3244 = vmatpush1.bf16.msra.mxu0 %v3224
        %3245 = vmatprep.subr.bf16.mxu0 0
        %3246 = vmatpush1.bf16.msra.mxu0 %v3225
        %3247 = vmatprep.subr.bf16.mxu0 0
        %3248 = vmatpush1.bf16.msra.mxu0 %v3226
        %3249 = vmatprep.subr.bf16.mxu0 0
        %3250 = vmatpush1.bf16.msra.mxu0 %v3227
        %3251 = vmatprep.subr.bf16.mxu0 0
        %3252 = vmatpush1.bf16.msra.mxu0 %v3228
        %3253 = vmatprep.subr.bf16.mxu0 0
        %3254 = vmatpush1.bf16.msra.mxu0 0
        %3255 = vmatprep.subr.bf16.mxu0 0
        %3256 = vmatpush1.bf16.msra.mxu0 0
        %3257 = vmatprep.subr.bf16.mxu0 0
        %3258 = vmatpush1.bf16.msra.mxu0 0
        %3259 = vmatprep.subr.bf16.mxu0 0
        %3260 = vmatpush1.bf16.msra.mxu0 0
        %3261 = vmatprep.subr.bf16.mxu0 0
        %3262 = vmatpush1.bf16.msra.mxu0 0
        %3263 = vmatprep.subr.bf16.mxu0 0
        %3264 = vmatpush1.bf16.msra.mxu0 0
        %3265 = vmatprep.subr.bf16.mxu0 0
        %3266 = vmatpush1.bf16.msra.mxu0 0
        %3267 = vmatprep.subr.bf16.mxu0 0
        %3268 = vmatpush1.bf16.msra.mxu0 0
        %3269 = vmatprep.mubr.bf16.mxu0 0
        %3270 = vmatmul.mubr.bf16.gmra.mrb[0].mxu0 %v3163
        %v3271 = vpop.f32.mrb[0].mxu0
        %v3272 = vadd.f32 %v3187, %v3271
        %v3273 = vpop.f32.mrb[0].mxu0
        %v3274 = vpop.f32.mrb[0].mxu0
        %v3275 = vpop.f32.mrb[0].mxu0
        %3276 = vdwg.mxu0
        %v3277 = vadd.f32 %v2405, %v3272
        %s3278 = scalar_lea.vmem %s10, 1
        %v3279 = vld [vmem:[%s3278] sm:$0x1]
        %s3280 = scalar_lea.vmem %s11, 1
        %v3281 = vld [vmem:[%s3280] sm:$0x1]
        %v3282 = vsel %vm853, %v3277, 0.0
        %3283 = vadd.xlane.f32.xlu0 %v3282
        %v3284 = vpop.xlane.xlu0 %3283
        %v3285 = vmul.f32 %v3284, %v857
        %v3286 = vsub.f32 %v3277, %v3285
        %v3287 = vmul.f32 %v3286, %v3286
        %v3288 = vsel %vm853, %v3287, 0.0
        %3289 = vadd.xlane.f32.xlu0 %v3288
        %v3290 = vpop.xlane.xlu0 %3289
        %v3291 = vmul.f32 %v3290, %v857
        %v3292 = vadd.f32 %v3291, 1e-05
        %v3293 = vrsqrt.pop %v3292
        %v3294 = vmul.f32 %v3286, %v3293
        %v3296 = vlaneseq
        %v3297 = vshrl.u32 %v3296, 7
        %v3298 = vsub.s32 0, %v3297
        %v3299 = vrot.slane %v3279, %v3298
        %v3301 = vmul.f32 %v3294, %v3299
        %v3303 = vlaneseq
        %v3304 = vshrl.u32 %v3303, 7
        %v3305 = vsub.s32 0, %v3304
        %v3306 = vrot.slane %v3281, %v3305
        %v3308 = vadd.f32 %v3301, %v3306
        %v3309 = vpack.c.bf16 %v3308, %v3308
        %s3310 = scalar_lea.vmem %s12, 256
        %v3311 = vld [vmem:[%s3310] sm:$0xff]
        %v3312 = vld [vmem:[%s3310 + $0x8] sm:$0xff]
        %v3313 = vld [vmem:[%s3310 + $0x10] sm:$0xff]
        %v3314 = vld [vmem:[%s3310 + $0x18] sm:$0xff]
        %v3315 = vld [vmem:[%s3310 + $0x20] sm:$0xff]
        %v3316 = vld [vmem:[%s3310 + $0x28] sm:$0xff]
        %v3317 = vld [vmem:[%s3310 + $0x30] sm:$0xff]
        %v3318 = vld [vmem:[%s3310 + $0x38] sm:$0xff]
        %v3319 = vld [vmem:[%s3310 + $0x40] sm:$0xff]
        %v3320 = vld [vmem:[%s3310 + $0x48] sm:$0xff]
        %v3321 = vld [vmem:[%s3310 + $0x50] sm:$0xff]
        %v3322 = vld [vmem:[%s3310 + $0x58] sm:$0xff]
        %v3323 = vld [vmem:[%s3310 + $0x60] sm:$0xff]
        %v3324 = vld [vmem:[%s3310 + $0x68] sm:$0xff]
        %v3325 = vld [vmem:[%s3310 + $0x70] sm:$0xff]
        %v3326 = vld [vmem:[%s3310 + $0x78] sm:$0xff]
        %v3327 = vld [vmem:[%s3310 + $0x80] sm:$0xff]
        %v3328 = vld [vmem:[%s3310 + $0x88] sm:$0xff]
        %v3329 = vld [vmem:[%s3310 + $0x90] sm:$0xff]
        %v3330 = vld [vmem:[%s3310 + $0x98] sm:$0xff]
        %v3331 = vld [vmem:[%s3310 + $0xa0] sm:$0xff]
        %v3332 = vld [vmem:[%s3310 + $0xa8] sm:$0xff]
        %v3333 = vld [vmem:[%s3310 + $0xb0] sm:$0xff]
        %v3334 = vld [vmem:[%s3310 + $0xb8] sm:$0xff]
        %v3335 = vld [vmem:[%s3310 + $0xc0] sm:$0xff]
        %v3336 = vld [vmem:[%s3310 + $0xc8] sm:$0xff]
        %v3337 = vld [vmem:[%s3310 + $0xd0] sm:$0xff]
        %v3338 = vld [vmem:[%s3310 + $0xd8] sm:$0xff]
        %v3339 = vld [vmem:[%s3310 + $0xe0] sm:$0xff]
        %v3340 = vld [vmem:[%s3310 + $0xe8] sm:$0xff]
        %v3341 = vld [vmem:[%s3310 + $0xf0] sm:$0xff]
        %v3342 = vld [vmem:[%s3310 + $0xf8] sm:$0xff]
        %s3343 = scalar_lea.vmem %s13, 4
        %v3344 = vld [vmem:[%s3343] sm:$0xf]
        %v3346 = vlaneseq
        %v3347 = vshrl.u32 %v3346, 7
        %v3348 = vsub.s32 0, %v3347
        %v3349 = vrot.slane %v3344, %v3348
        %v3350 = vlaneseq
        %v3351 = vshrl.u32 %v3350, 7
        %v3352 = vsub.s32 1, %v3351
        %v3353 = vrot.slane %v3344, %v3352
        %v3354 = vlaneseq
        %v3355 = vshrl.u32 %v3354, 7
        %v3356 = vsub.s32 2, %v3355
        %v3357 = vrot.slane %v3344, %v3356
        %v3358 = vlaneseq
        %v3359 = vshrl.u32 %v3358, 7
        %v3360 = vsub.s32 3, %v3359
        %v3361 = vrot.slane %v3344, %v3360
        %v3398 = vunpack.c.l.b16 %v3311
        %v3399 = vunpack.c.h.b16 %v3311
        %v3400 = vunpack.c.l.b16 %v3312
        %v3401 = vunpack.c.h.b16 %v3312
        %v3402 = vunpack.c.l.b16 %v3313
        %v3403 = vunpack.c.h.b16 %v3313
        %v3404 = vunpack.c.l.b16 %v3314
        %v3405 = vunpack.c.h.b16 %v3314
        %v3406 = vunpack.c.l.b16 %v3315
        %v3407 = vunpack.c.h.b16 %v3315
        %v3408 = vunpack.c.l.b16 %v3316
        %v3409 = vunpack.c.h.b16 %v3316
        %v3410 = vunpack.c.l.b16 %v3317
        %v3411 = vunpack.c.h.b16 %v3317
        %v3412 = vunpack.c.l.b16 %v3318
        %v3413 = vunpack.c.h.b16 %v3318
        %v3414 = vunpack.c.l.b16 %v3319
        %v3415 = vunpack.c.h.b16 %v3319
        %v3416 = vunpack.c.l.b16 %v3320
        %v3417 = vunpack.c.h.b16 %v3320
        %v3418 = vunpack.c.l.b16 %v3321
        %v3419 = vunpack.c.h.b16 %v3321
        %v3420 = vunpack.c.l.b16 %v3322
        %v3421 = vunpack.c.h.b16 %v3322
        %v3422 = vunpack.c.l.b16 %v3323
        %v3423 = vunpack.c.h.b16 %v3323
        %v3424 = vunpack.c.l.b16 %v3324
        %v3425 = vunpack.c.h.b16 %v3324
        %v3426 = vunpack.c.l.b16 %v3325
        %v3427 = vunpack.c.h.b16 %v3325
        %v3428 = vunpack.c.l.b16 %v3326
        %v3429 = vunpack.c.h.b16 %v3326
        %v3430 = vunpack.c.l.b16 %v3327
        %v3431 = vunpack.c.h.b16 %v3327
        %v3432 = vunpack.c.l.b16 %v3328
        %v3433 = vunpack.c.h.b16 %v3328
        %v3434 = vunpack.c.l.b16 %v3329
        %v3435 = vunpack.c.h.b16 %v3329
        %v3436 = vunpack.c.l.b16 %v3330
        %v3437 = vunpack.c.h.b16 %v3330
        %v3438 = vunpack.c.l.b16 %v3331
        %v3439 = vunpack.c.h.b16 %v3331
        %v3440 = vunpack.c.l.b16 %v3332
        %v3441 = vunpack.c.h.b16 %v3332
        %v3442 = vunpack.c.l.b16 %v3333
        %v3443 = vunpack.c.h.b16 %v3333
        %v3444 = vunpack.c.l.b16 %v3334
        %v3445 = vunpack.c.h.b16 %v3334
        %v3446 = vunpack.c.l.b16 %v3335
        %v3447 = vunpack.c.h.b16 %v3335
        %v3448 = vunpack.c.l.b16 %v3336
        %v3449 = vunpack.c.h.b16 %v3336
        %v3450 = vunpack.c.l.b16 %v3337
        %v3451 = vunpack.c.h.b16 %v3337
        %v3452 = vunpack.c.l.b16 %v3338
        %v3453 = vunpack.c.h.b16 %v3338
        %v3454 = vunpack.c.l.b16 %v3339
        %v3455 = vunpack.c.h.b16 %v3339
        %v3456 = vunpack.c.l.b16 %v3340
        %v3457 = vunpack.c.h.b16 %v3340
        %v3458 = vunpack.c.l.b16 %v3341
        %v3459 = vunpack.c.h.b16 %v3341
        %v3460 = vunpack.c.l.b16 %v3342
        %v3461 = vunpack.c.h.b16 %v3342
        %v3462 = vpack.c.b16 %v3402, %v3398
        %v3463 = vpack.c.b16 %v3403, %v3399
        %v3464 = vpack.c.b16 %v3404, %v3400
        %v3465 = vpack.c.b16 %v3405, %v3401
        %v3466 = vpack.c.b16 %v3410, %v3406
        %v3467 = vpack.c.b16 %v3411, %v3407
        %v3468 = vpack.c.b16 %v3412, %v3408
        %v3469 = vpack.c.b16 %v3413, %v3409
        %v3470 = vpack.c.b16 %v3418, %v3414
        %v3471 = vpack.c.b16 %v3419, %v3415
        %v3472 = vpack.c.b16 %v3420, %v3416
        %v3473 = vpack.c.b16 %v3421, %v3417
        %v3474 = vpack.c.b16 %v3426, %v3422
        %v3475 = vpack.c.b16 %v3427, %v3423
        %v3476 = vpack.c.b16 %v3428, %v3424
        %v3477 = vpack.c.b16 %v3429, %v3425
        %v3478 = vpack.c.b16 %v3434, %v3430
        %v3479 = vpack.c.b16 %v3435, %v3431
        %v3480 = vpack.c.b16 %v3436, %v3432
        %v3481 = vpack.c.b16 %v3437, %v3433
        %v3482 = vpack.c.b16 %v3442, %v3438
        %v3483 = vpack.c.b16 %v3443, %v3439
        %v3484 = vpack.c.b16 %v3444, %v3440
        %v3485 = vpack.c.b16 %v3445, %v3441
        %v3486 = vpack.c.b16 %v3450, %v3446
        %v3487 = vpack.c.b16 %v3451, %v3447
        %v3488 = vpack.c.b16 %v3452, %v3448
        %v3489 = vpack.c.b16 %v3453, %v3449
        %v3490 = vpack.c.b16 %v3458, %v3454
        %v3491 = vpack.c.b16 %v3459, %v3455
        %v3492 = vpack.c.b16 %v3460, %v3456
        %v3493 = vpack.c.b16 %v3461, %v3457
        %3526 = vmatprep.subr.bf16.mxu0 %v3463
        %3527 = vmatpush1.bf16.msra.mxu0 %v3462
        %3528 = vmatprep.subr.bf16.mxu0 %v3467
        %3529 = vmatpush1.bf16.msra.mxu0 %v3466
        %3530 = vmatprep.subr.bf16.mxu0 %v3471
        %3531 = vmatpush1.bf16.msra.mxu0 %v3470
        %3532 = vmatprep.subr.bf16.mxu0 %v3475
        %3533 = vmatpush1.bf16.msra.mxu0 %v3474
        %3534 = vmatprep.subr.bf16.mxu0 %v3479
        %3535 = vmatpush1.bf16.msra.mxu0 %v3478
        %3536 = vmatprep.subr.bf16.mxu0 %v3483
        %3537 = vmatpush1.bf16.msra.mxu0 %v3482
        %3538 = vmatprep.subr.bf16.mxu0 %v3487
        %3539 = vmatpush1.bf16.msra.mxu0 %v3486
        %3540 = vmatprep.subr.bf16.mxu0 %v3491
        %3541 = vmatpush1.bf16.msra.mxu0 %v3490
        %3542 = vmatprep.subr.bf16.mxu0 0
        %3543 = vmatpush1.bf16.msra.mxu0 0
        %3544 = vmatprep.subr.bf16.mxu0 0
        %3545 = vmatpush1.bf16.msra.mxu0 0
        %3546 = vmatprep.subr.bf16.mxu0 0
        %3547 = vmatpush1.bf16.msra.mxu0 0
        %3548 = vmatprep.subr.bf16.mxu0 0
        %3549 = vmatpush1.bf16.msra.mxu0 0
        %3550 = vmatprep.subr.bf16.mxu0 0
        %3551 = vmatpush1.bf16.msra.mxu0 0
        %3552 = vmatprep.subr.bf16.mxu0 0
        %3553 = vmatpush1.bf16.msra.mxu0 0
        %3554 = vmatprep.subr.bf16.mxu0 0
        %3555 = vmatpush1.bf16.msra.mxu0 0
        %3556 = vmatprep.subr.bf16.mxu0 0
        %3557 = vmatpush1.bf16.msra.mxu0 0
        %3558 = vmatprep.mubr.bf16.mxu0 0
        %3559 = vmatmul.mubr.bf16.gmra.mrb[0].mxu0 %v3309
        %v3560 = vpop.f32.mrb[0].mxu0
        %v3561 = vadd.f32 %v3349, %v3560
        %v3562 = vpop.f32.mrb[0].mxu0
        %v3563 = vadd.f32 %v3353, %v3562
        %v3564 = vpop.f32.mrb[0].mxu0
        %v3565 = vpop.f32.mrb[0].mxu0
        %3566 = vdwg.mxu0
        %3567 = vmatprep.subr.bf16.mxu0 %v3465
        %3568 = vmatpush1.bf16.msra.mxu0 %v3464
        %3569 = vmatprep.subr.bf16.mxu0 %v3469
        %3570 = vmatpush1.bf16.msra.mxu0 %v3468
        %3571 = vmatprep.subr.bf16.mxu0 %v3473
        %3572 = vmatpush1.bf16.msra.mxu0 %v3472
        %3573 = vmatprep.subr.bf16.mxu0 %v3477
        %3574 = vmatpush1.bf16.msra.mxu0 %v3476
        %3575 = vmatprep.subr.bf16.mxu0 %v3481
        %3576 = vmatpush1.bf16.msra.mxu0 %v3480
        %3577 = vmatprep.subr.bf16.mxu0 %v3485
        %3578 = vmatpush1.bf16.msra.mxu0 %v3484
        %3579 = vmatprep.subr.bf16.mxu0 %v3489
        %3580 = vmatpush1.bf16.msra.mxu0 %v3488
        %3581 = vmatprep.subr.bf16.mxu0 %v3493
        %3582 = vmatpush1.bf16.msra.mxu0 %v3492
        %3583 = vmatprep.subr.bf16.mxu0 0
        %3584 = vmatpush1.bf16.msra.mxu0 0
        %3585 = vmatprep.subr.bf16.mxu0 0
        %3586 = vmatpush1.bf16.msra.mxu0 0
        %3587 = vmatprep.subr.bf16.mxu0 0
        %3588 = vmatpush1.bf16.msra.mxu0 0
        %3589 = vmatprep.subr.bf16.mxu0 0
        %3590 = vmatpush1.bf16.msra.mxu0 0
        %3591 = vmatprep.subr.bf16.mxu0 0
        %3592 = vmatpush1.bf16.msra.mxu0 0
        %3593 = vmatprep.subr.bf16.mxu0 0
        %3594 = vmatpush1.bf16.msra.mxu0 0
        %3595 = vmatprep.subr.bf16.mxu0 0
        %3596 = vmatpush1.bf16.msra.mxu0 0
        %3597 = vmatprep.subr.bf16.mxu0 0
        %3598 = vmatpush1.bf16.msra.mxu0 0
        %3599 = vmatprep.mubr.bf16.mxu0 0
        %3600 = vmatmul.mubr.bf16.gmra.mrb[0].mxu0 %v3309
        %v3601 = vpop.f32.mrb[0].mxu0
        %v3602 = vadd.f32 %v3357, %v3601
        %v3603 = vpop.f32.mrb[0].mxu0
        %v3604 = vadd.f32 %v3361, %v3603
        %v3605 = vpop.f32.mrb[0].mxu0
        %v3606 = vpop.f32.mrb[0].mxu0
        %3607 = vdwg.mxu0
        %v3608 = vmax.f32 %v3561, 0.0
        %v3609 = vmax.f32 %v3563, 0.0
        %v3610 = vmax.f32 %v3602, 0.0
        %v3611 = vmax.f32 %v3604, 0.0
        %v3612 = vpack.c.bf16 %v3608, %v3608
        %v3613 = vpack.c.bf16 %v3609, %v3609
        %v3614 = vpack.c.bf16 %v3610, %v3610
        %v3615 = vpack.c.bf16 %v3611, %v3611
        %s3616 = scalar_lea.vmem %s14, 256
        %v3617 = vld [vmem:[%s3616] sm:$0xf]
        %v3618 = vld [vmem:[%s3616 + $0x4] sm:$0xf]
        %v3619 = vld [vmem:[%s3616 + $0x8] sm:$0xf]
        %v3620 = vld [vmem:[%s3616 + $0xc] sm:$0xf]
        %v3621 = vld [vmem:[%s3616 + $0x10] sm:$0xf]
        %v3622 = vld [vmem:[%s3616 + $0x14] sm:$0xf]
        %v3623 = vld [vmem:[%s3616 + $0x18] sm:$0xf]
        %v3624 = vld [vmem:[%s3616 + $0x1c] sm:$0xf]
        %v3625 = vld [vmem:[%s3616 + $0x20] sm:$0xf]
        %v3626 = vld [vmem:[%s3616 + $0x24] sm:$0xf]
        %v3627 = vld [vmem:[%s3616 + $0x28] sm:$0xf]
        %v3628 = vld [vmem:[%s3616 + $0x2c] sm:$0xf]
        %v3629 = vld [vmem:[%s3616 + $0x30] sm:$0xf]
        %v3630 = vld [vmem:[%s3616 + $0x34] sm:$0xf]
        %v3631 = vld [vmem:[%s3616 + $0x38] sm:$0xf]
        %v3632 = vld [vmem:[%s3616 + $0x3c] sm:$0xf]
        %v3633 = vld [vmem:[%s3616 + $0x40] sm:$0xf]
        %v3634 = vld [vmem:[%s3616 + $0x44] sm:$0xf]
        %v3635 = vld [vmem:[%s3616 + $0x48] sm:$0xf]
        %v3636 = vld [vmem:[%s3616 + $0x4c] sm:$0xf]
        %v3637 = vld [vmem:[%s3616 + $0x50] sm:$0xf]
        %v3638 = vld [vmem:[%s3616 + $0x54] sm:$0xf]
        %v3639 = vld [vmem:[%s3616 + $0x58] sm:$0xf]
        %v3640 = vld [vmem:[%s3616 + $0x5c] sm:$0xf]
        %v3641 = vld [vmem:[%s3616 + $0x60] sm:$0xf]
        %v3642 = vld [vmem:[%s3616 + $0x64] sm:$0xf]
        %v3643 = vld [vmem:[%s3616 + $0x68] sm:$0xf]
        %v3644 = vld [vmem:[%s3616 + $0x6c] sm:$0xf]
        %v3645 = vld [vmem:[%s3616 + $0x70] sm:$0xf]
        %v3646 = vld [vmem:[%s3616 + $0x74] sm:$0xf]
        %v3647 = vld [vmem:[%s3616 + $0x78] sm:$0xf]
        %v3648 = vld [vmem:[%s3616 + $0x7c] sm:$0xf]
        %v3649 = vld [vmem:[%s3616 + $0x80] sm:$0xf]
        %v3650 = vld [vmem:[%s3616 + $0x84] sm:$0xf]
        %v3651 = vld [vmem:[%s3616 + $0x88] sm:$0xf]
        %v3652 = vld [vmem:[%s3616 + $0x8c] sm:$0xf]
        %v3653 = vld [vmem:[%s3616 + $0x90] sm:$0xf]
        %v3654 = vld [vmem:[%s3616 + $0x94] sm:$0xf]
        %v3655 = vld [vmem:[%s3616 + $0x98] sm:$0xf]
        %v3656 = vld [vmem:[%s3616 + $0x9c] sm:$0xf]
        %v3657 = vld [vmem:[%s3616 + $0xa0] sm:$0xf]
        %v3658 = vld [vmem:[%s3616 + $0xa4] sm:$0xf]
        %v3659 = vld [vmem:[%s3616 + $0xa8] sm:$0xf]
        %v3660 = vld [vmem:[%s3616 + $0xac] sm:$0xf]
        %v3661 = vld [vmem:[%s3616 + $0xb0] sm:$0xf]
        %v3662 = vld [vmem:[%s3616 + $0xb4] sm:$0xf]
        %v3663 = vld [vmem:[%s3616 + $0xb8] sm:$0xf]
        %v3664 = vld [vmem:[%s3616 + $0xbc] sm:$0xf]
        %v3665 = vld [vmem:[%s3616 + $0xc0] sm:$0xf]
        %v3666 = vld [vmem:[%s3616 + $0xc4] sm:$0xf]
        %v3667 = vld [vmem:[%s3616 + $0xc8] sm:$0xf]
        %v3668 = vld [vmem:[%s3616 + $0xcc] sm:$0xf]
        %v3669 = vld [vmem:[%s3616 + $0xd0] sm:$0xf]
        %v3670 = vld [vmem:[%s3616 + $0xd4] sm:$0xf]
        %v3671 = vld [vmem:[%s3616 + $0xd8] sm:$0xf]
        %v3672 = vld [vmem:[%s3616 + $0xdc] sm:$0xf]
        %v3673 = vld [vmem:[%s3616 + $0xe0] sm:$0xf]
        %v3674 = vld [vmem:[%s3616 + $0xe4] sm:$0xf]
        %v3675 = vld [vmem:[%s3616 + $0xe8] sm:$0xf]
        %v3676 = vld [vmem:[%s3616 + $0xec] sm:$0xf]
        %v3677 = vld [vmem:[%s3616 + $0xf0] sm:$0xf]
        %v3678 = vld [vmem:[%s3616 + $0xf4] sm:$0xf]
        %v3679 = vld [vmem:[%s3616 + $0xf8] sm:$0xf]
        %v3680 = vld [vmem:[%s3616 + $0xfc] sm:$0xf]
        %s3681 = scalar_lea.vmem %s15, 1
        %v3682 = vld [vmem:[%s3681] sm:$0x1]
        %v3684 = vlaneseq
        %v3685 = vshrl.u32 %v3684, 7
        %v3686 = vsub.s32 0, %v3685
        %v3687 = vrot.slane %v3682, %v3686
        %v3753 = vunpack.c.l.b16 %v3617
        %v3754 = vunpack.c.l.b16 %v3618
        %v3755 = vunpack.c.l.b16 %v3619
        %v3756 = vunpack.c.l.b16 %v3620
        %v3757 = vunpack.c.l.b16 %v3621
        %v3758 = vunpack.c.l.b16 %v3622
        %v3759 = vunpack.c.l.b16 %v3623
        %v3760 = vunpack.c.l.b16 %v3624
        %v3761 = vunpack.c.l.b16 %v3625
        %v3762 = vunpack.c.l.b16 %v3626
        %v3763 = vunpack.c.l.b16 %v3627
        %v3764 = vunpack.c.l.b16 %v3628
        %v3765 = vunpack.c.l.b16 %v3629
        %v3766 = vunpack.c.l.b16 %v3630
        %v3767 = vunpack.c.l.b16 %v3631
        %v3768 = vunpack.c.l.b16 %v3632
        %v3769 = vunpack.c.l.b16 %v3633
        %v3770 = vunpack.c.l.b16 %v3634
        %v3771 = vunpack.c.l.b16 %v3635
        %v3772 = vunpack.c.l.b16 %v3636
        %v3773 = vunpack.c.l.b16 %v3637
        %v3774 = vunpack.c.l.b16 %v3638
        %v3775 = vunpack.c.l.b16 %v3639
        %v3776 = vunpack.c.l.b16 %v3640
        %v3777 = vunpack.c.l.b16 %v3641
        %v3778 = vunpack.c.l.b16 %v3642
        %v3779 = vunpack.c.l.b16 %v3643
        %v3780 = vunpack.c.l.b16 %v3644
        %v3781 = vunpack.c.l.b16 %v3645
        %v3782 = vunpack.c.l.b16 %v3646
        %v3783 = vunpack.c.l.b16 %v3647
        %v3784 = vunpack.c.l.b16 %v3648
        %v3785 = vunpack.c.l.b16 %v3649
        %v3786 = vunpack.c.l.b16 %v3650
        %v3787 = vunpack.c.l.b16 %v3651
        %v3788 = vunpack.c.l.b16 %v3652
        %v3789 = vunpack.c.l.b16 %v3653
        %v3790 = vunpack.c.l.b16 %v3654
        %v3791 = vunpack.c.l.b16 %v3655
        %v3792 = vunpack.c.l.b16 %v3656
        %v3793 = vunpack.c.l.b16 %v3657
        %v3794 = vunpack.c.l.b16 %v3658
        %v3795 = vunpack.c.l.b16 %v3659
        %v3796 = vunpack.c.l.b16 %v3660
        %v3797 = vunpack.c.l.b16 %v3661
        %v3798 = vunpack.c.l.b16 %v3662
        %v3799 = vunpack.c.l.b16 %v3663
        %v3800 = vunpack.c.l.b16 %v3664
        %v3801 = vunpack.c.l.b16 %v3665
        %v3802 = vunpack.c.l.b16 %v3666
        %v3803 = vunpack.c.l.b16 %v3667
        %v3804 = vunpack.c.l.b16 %v3668
        %v3805 = vunpack.c.l.b16 %v3669
        %v3806 = vunpack.c.l.b16 %v3670
        %v3807 = vunpack.c.l.b16 %v3671
        %v3808 = vunpack.c.l.b16 %v3672
        %v3809 = vunpack.c.l.b16 %v3673
        %v3810 = vunpack.c.l.b16 %v3674
        %v3811 = vunpack.c.l.b16 %v3675
        %v3812 = vunpack.c.l.b16 %v3676
        %v3813 = vunpack.c.l.b16 %v3677
        %v3814 = vunpack.c.l.b16 %v3678
        %v3815 = vunpack.c.l.b16 %v3679
        %v3816 = vunpack.c.l.b16 %v3680
        %v3817 = vpack.c.b16 %v3754, %v3753
        %v3818 = vpack.c.b16 %v3756, %v3755
        %v3819 = vpack.c.b16 %v3758, %v3757
        %v3820 = vpack.c.b16 %v3760, %v3759
        %v3821 = vpack.c.b16 %v3762, %v3761
        %v3822 = vpack.c.b16 %v3764, %v3763
        %v3823 = vpack.c.b16 %v3766, %v3765
        %v3824 = vpack.c.b16 %v3768, %v3767
        %v3825 = vpack.c.b16 %v3770, %v3769
        %v3826 = vpack.c.b16 %v3772, %v3771
        %v3827 = vpack.c.b16 %v3774, %v3773
        %v3828 = vpack.c.b16 %v3776, %v3775
        %v3829 = vpack.c.b16 %v3778, %v3777
        %v3830 = vpack.c.b16 %v3780, %v3779
        %v3831 = vpack.c.b16 %v3782, %v3781
        %v3832 = vpack.c.b16 %v3784, %v3783
        %v3833 = vpack.c.b16 %v3786, %v3785
        %v3834 = vpack.c.b16 %v3788, %v3787
        %v3835 = vpack.c.b16 %v3790, %v3789
        %v3836 = vpack.c.b16 %v3792, %v3791
        %v3837 = vpack.c.b16 %v3794, %v3793
        %v3838 = vpack.c.b16 %v3796, %v3795
        %v3839 = vpack.c.b16 %v3798, %v3797
        %v3840 = vpack.c.b16 %v3800, %v3799
        %v3841 = vpack.c.b16 %v3802, %v3801
        %v3842 = vpack.c.b16 %v3804, %v3803
        %v3843 = vpack.c.b16 %v3806, %v3805
        %v3844 = vpack.c.b16 %v3808, %v3807
        %v3845 = vpack.c.b16 %v3810, %v3809
        %v3846 = vpack.c.b16 %v3812, %v3811
        %v3847 = vpack.c.b16 %v3814, %v3813
        %v3848 = vpack.c.b16 %v3816, %v3815
        %3881 = vmatprep.subr.bf16.mxu0 0
        %3882 = vmatpush1.bf16.msra.mxu0 %v3817
        %3883 = vmatprep.subr.bf16.mxu0 0
        %3884 = vmatpush1.bf16.msra.mxu0 %v3818
        %3885 = vmatprep.subr.bf16.mxu0 0
        %3886 = vmatpush1.bf16.msra.mxu0 %v3819
        %3887 = vmatprep.subr.bf16.mxu0 0
        %3888 = vmatpush1.bf16.msra.mxu0 %v3820
        %3889 = vmatprep.subr.bf16.mxu0 0
        %3890 = vmatpush1.bf16.msra.mxu0 %v3821
        %3891 = vmatprep.subr.bf16.mxu0 0
        %3892 = vmatpush1.bf16.msra.mxu0 %v3822
        %3893 = vmatprep.subr.bf16.mxu0 0
        %3894 = vmatpush1.bf16.msra.mxu0 %v3823
        %3895 = vmatprep.subr.bf16.mxu0 0
        %3896 = vmatpush1.bf16.msra.mxu0 %v3824
        %3897 = vmatprep.subr.bf16.mxu0 0
        %3898 = vmatpush1.bf16.msra.mxu0 %v3825
        %3899 = vmatprep.subr.bf16.mxu0 0
        %3900 = vmatpush1.bf16.msra.mxu0 %v3826
        %3901 = vmatprep.subr.bf16.mxu0 0
        %3902 = vmatpush1.bf16.msra.mxu0 %v3827
        %3903 = vmatprep.subr.bf16.mxu0 0
        %3904 = vmatpush1.bf16.msra.mxu0 %v3828
        %3905 = vmatprep.subr.bf16.mxu0 0
        %3906 = vmatpush1.bf16.msra.mxu0 %v3829
        %3907 = vmatprep.subr.bf16.mxu0 0
        %3908 = vmatpush1.bf16.msra.mxu0 %v3830
        %3909 = vmatprep.subr.bf16.mxu0 0
        %3910 = vmatpush1.bf16.msra.mxu0 %v3831
        %3911 = vmatprep.subr.bf16.mxu0 0
        %3912 = vmatpush1.bf16.msra.mxu0 %v3832
        %3913 = vmatprep.mubr.bf16.mxu0 %v3613
        %3914 = vmatmul.mubr.bf16.gmra.mrb[0].mxu0 %v3612
        %v3915 = vpop.f32.mrb[0].mxu0
        %v3916 = vadd.f32 %v3687, %v3915
        %v3917 = vpop.f32.mrb[0].mxu0
        %v3918 = vpop.f32.mrb[0].mxu0
        %v3919 = vpop.f32.mrb[0].mxu0
        %3920 = vdwg.mxu0
        %3921 = vmatprep.subr.bf16.mxu0 0
        %3922 = vmatpush1.bf16.msra.mxu0 %v3833
        %3923 = vmatprep.subr.bf16.mxu0 0
        %3924 = vmatpush1.bf16.msra.mxu0 %v3834
        %3925 = vmatprep.subr.bf16.mxu0 0
        %3926 = vmatpush1.bf16.msra.mxu0 %v3835
        %3927 = vmatprep.subr.bf16.mxu0 0
        %3928 = vmatpush1.bf16.msra.mxu0 %v3836
        %3929 = vmatprep.subr.bf16.mxu0 0
        %3930 = vmatpush1.bf16.msra.mxu0 %v3837
        %3931 = vmatprep.subr.bf16.mxu0 0
        %3932 = vmatpush1.bf16.msra.mxu0 %v3838
        %3933 = vmatprep.subr.bf16.mxu0 0
        %3934 = vmatpush1.bf16.msra.mxu0 %v3839
        %3935 = vmatprep.subr.bf16.mxu0 0
        %3936 = vmatpush1.bf16.msra.mxu0 %v3840
        %3937 = vmatprep.subr.bf16.mxu0 0
        %3938 = vmatpush1.bf16.msra.mxu0 %v3841
        %3939 = vmatprep.subr.bf16.mxu0 0
        %3940 = vmatpush1.bf16.msra.mxu0 %v3842
        %3941 = vmatprep.subr.bf16.mxu0 0
        %3942 = vmatpush1.bf16.msra.mxu0 %v3843
        %3943 = vmatprep.subr.bf16.mxu0 0
        %3944 = vmatpush1.bf16.msra.mxu0 %v3844
        %3945 = vmatprep.subr.bf16.mxu0 0
        %3946 = vmatpush1.bf16.msra.mxu0 %v3845
        %3947 = vmatprep.subr.bf16.mxu0 0
        %3948 = vmatpush1.bf16.msra.mxu0 %v3846
        %3949 = vmatprep.subr.bf16.mxu0 0
        %3950 = vmatpush1.bf16.msra.mxu0 %v3847
        %3951 = vmatprep.subr.bf16.mxu0 0
        %3952 = vmatpush1.bf16.msra.mxu0 %v3848
        %3953 = vmatprep.mubr.bf16.mxu0 %v3615
        %3954 = vmatmul.mubr.bf16.gmra.mrb[0].mxu0 %v3614
        %v3955 = vpop.f32.mrb[0].mxu0
        %v3956 = vadd.f32 %v3916, %v3955
        %v3957 = vpop.f32.mrb[0].mxu0
        %v3958 = vpop.f32.mrb[0].mxu0
        %v3959 = vpop.f32.mrb[0].mxu0
        %3960 = vdwg.mxu0
        %v3961 = vadd.f32 %v3277, %v3956
        %v3962 = vld [vmem:[%s16] sm:$0x1]
        %v3963 = vld [vmem:[%s17] sm:$0x1]
        %v3964 = vsel %vm842, %v3961, 0.0
        %3965 = vadd.xlane.f32.xlu0 %v3964
        %v3966 = vpop.xlane.xlu0 %3965
        %v3967 = vmul.f32 %v3966, %v857
        %v3968 = vsub.f32 %v3961, %v3967
        %v3969 = vmul.f32 %v3968, %v3968
        %v3970 = vsel %vm842, %v3969, 0.0
        %3971 = vadd.xlane.f32.xlu0 %v3970
        %v3972 = vpop.xlane.xlu0 %3971
        %v3973 = vmul.f32 %v3972, %v857
        %v3974 = vadd.f32 %v3973, 1e-05
        %v3975 = vrsqrt.pop %v3974
        %v3976 = vmul.f32 %v3968, %v3975
        %v3977 = vmul.f32 %v3976, %v3962
        %v3978 = vadd.f32 %v3977, %v3963
        %v3979 = vpack.c.bf16 %v3978, %v3978
        %v3980 = vld [vmem:[#allocation5] sm:$0xf]
        %v3981 = vld [vmem:[#allocation5 + $0x4] sm:$0xf]
        %v3982 = vld [vmem:[#allocation5 + $0x8] sm:$0xf]
        %v3983 = vld [vmem:[#allocation5 + $0xc] sm:$0xf]
        %v3984 = vld [vmem:[#allocation5 + $0x10] sm:$0xf]
        %v3985 = vld [vmem:[#allocation5 + $0x14] sm:$0xf]
        %v3986 = vld [vmem:[#allocation5 + $0x18] sm:$0xf]
        %v3987 = vld [vmem:[#allocation5 + $0x1c] sm:$0xf]
        %v3988 = vld [vmem:[#allocation5 + $0x20] sm:$0xf]
        %v3989 = vld [vmem:[#allocation5 + $0x24] sm:$0xf]
        %v3990 = vld [vmem:[#allocation5 + $0x28] sm:$0xf]
        %v3991 = vld [vmem:[#allocation5 + $0x2c] sm:$0xf]
        %v3992 = vld [vmem:[#allocation5 + $0x30] sm:$0xf]
        %v3993 = vld [vmem:[#allocation5 + $0x34] sm:$0xf]
        %v3994 = vld [vmem:[#allocation5 + $0x38] sm:$0xf]
        %v3995 = vld [vmem:[#allocation5 + $0x3c] sm:$0xf]
        %v3996 = vld [vmem:[%s19] sm:$0x1]
        %v4013 = vunpack.c.l.b16 %v3980
        %v4014 = vunpack.c.l.b16 %v3981
        %v4015 = vunpack.c.l.b16 %v3982
        %v4016 = vunpack.c.l.b16 %v3983
        %v4017 = vunpack.c.l.b16 %v3984
        %v4018 = vunpack.c.l.b16 %v3985
        %v4019 = vunpack.c.l.b16 %v3986
        %v4020 = vunpack.c.l.b16 %v3987
        %v4021 = vunpack.c.l.b16 %v3988
        %v4022 = vunpack.c.l.b16 %v3989
        %v4023 = vunpack.c.l.b16 %v3990
        %v4024 = vunpack.c.l.b16 %v3991
        %v4025 = vunpack.c.l.b16 %v3992
        %v4026 = vunpack.c.l.b16 %v3993
        %v4027 = vunpack.c.l.b16 %v3994
        %v4028 = vunpack.c.l.b16 %v3995
        %v4029 = vpack.c.b16 %v4014, %v4013
        %v4030 = vpack.c.b16 %v4016, %v4015
        %v4031 = vpack.c.b16 %v4018, %v4017
        %v4032 = vpack.c.b16 %v4020, %v4019
        %v4033 = vpack.c.b16 %v4022, %v4021
        %v4034 = vpack.c.b16 %v4024, %v4023
        %v4035 = vpack.c.b16 %v4026, %v4025
        %v4036 = vpack.c.b16 %v4028, %v4027
        %4045 = vmatprep.subr.bf16.mxu0 0
        %4046 = vmatpush1.bf16.msra.mxu0 %v4029
        %4047 = vmatprep.subr.bf16.mxu0 0
        %4048 = vmatpush1.bf16.msra.mxu0 %v4030
        %4049 = vmatprep.subr.bf16.mxu0 0
        %4050 = vmatpush1.bf16.msra.mxu0 %v4031
        %4051 = vmatprep.subr.bf16.mxu0 0
        %4052 = vmatpush1.bf16.msra.mxu0 %v4032
        %4053 = vmatprep.subr.bf16.mxu0 0
        %4054 = vmatpush1.bf16.msra.mxu0 %v4033
        %4055 = vmatprep.subr.bf16.mxu0 0
        %4056 = vmatpush1.bf16.msra.mxu0 %v4034
        %4057 = vmatprep.subr.bf16.mxu0 0
        %4058 = vmatpush1.bf16.msra.mxu0 %v4035
        %4059 = vmatprep.subr.bf16.mxu0 0
        %4060 = vmatpush1.bf16.msra.mxu0 %v4036
        %4061 = vmatprep.subr.bf16.mxu0 0
        %4062 = vmatpush1.bf16.msra.mxu0 0
        %4063 = vmatprep.subr.bf16.mxu0 0
        %4064 = vmatpush1.bf16.msra.mxu0 0
        %4065 = vmatprep.subr.bf16.mxu0 0
        %4066 = vmatpush1.bf16.msra.mxu0 0
        %4067 = vmatprep.subr.bf16.mxu0 0
        %4068 = vmatpush1.bf16.msra.mxu0 0
        %4069 = vmatprep.subr.bf16.mxu0 0
        %4070 = vmatpush1.bf16.msra.mxu0 0
        %4071 = vmatprep.subr.bf16.mxu0 0
        %4072 = vmatpush1.bf16.msra.mxu0 0
        %4073 = vmatprep.subr.bf16.mxu0 0
        %4074 = vmatpush1.bf16.msra.mxu0 0
        %4075 = vmatprep.subr.bf16.mxu0 0
        %4076 = vmatpush1.bf16.msra.mxu0 0
        %4077 = vmatprep.mubr.bf16.mxu0 0
        %4078 = vmatmul.mubr.bf16.gmra.mrb[0].mxu0 %v3979
        %v4079 = vpop.f32.mrb[0].mxu0
        %v4080 = vadd.f32 %v3996, %v4079
        %v4081 = vpop.f32.mrb[0].mxu0
        %v4082 = vpop.f32.mrb[0].mxu0
        %v4083 = vpop.f32.mrb[0].mxu0
        %4084 = vdwg.mxu0
        %4085 = vst [vmem:[%s651] sm:$0x1] %v4080
        %s4086 = sand.u32 %s469, 1
        %s4087 = scalar_lea.sflag [#allocation4], %s4086
        %s4088 = sand.u32 %s469, 1
        %s4089 = scalar_lea.vmem [#allocation7], %s4088
        // Predicated region
        $region109: #{vit_forward.1} parent=99 // pred_check
          %p4090 = pneg %p479
        $region110: #{vit_forward.1} parent=99 // pred_check_branch
          %4092 = sbr.rel (%p4090) target = $region112
        $region111: #{vit_forward.1} parent=99 // pred_region
          %s4094 = ssub.s32 16, 16
          %4095 = vsyncadd %s4087, %s4094
          %s4096 = smul.addr %s36, 16
          %s4097 = scalar_lea.hbm %s20, %s4096
          %s4099 = sshll.u32 %s4089, 4
          %s4100 = int_to_ptr.vmem [resolvable:$true] %s4099
          %4102 = dma.vmem_to_hbm [thread:$0]  %s4100, 16, %s4097, %s4087
        $region112: #{vit_forward.1} parent=99 // pred_fallthru
          _
      $region100: #{vit_forward.1} parent=5 // pred_fallthru
        _
      %p4103 = scmp.le.s32.totalorder 2, %s31
      // Predicated region
      $region113: #{vit_forward.1} parent=5 // pred_check
        %p4104 = pneg %p4103
      $region114: #{vit_forward.1} parent=5 // pred_check_branch
        %4106 = sbr.rel (%p4104) target = $region116
      $region115: #{vit_forward.1} parent=5 // pred_region
        %s4107 = ssub.s32 %s31, 2
        // Predicated region
        $region117: #{vit_forward.1} parent=115 // pred_check
          %p4108 = pneg %p485
        $region118: #{vit_forward.1} parent=115 // pred_check_branch
          %4110 = sbr.rel (%p4108) target = $region120
        $region119: #{vit_forward.1} parent=115 // pred_region
          %s4111 = sand.u32 %s470, 1
          %s4112 = scalar_lea.sflag [#allocation4], %s4111
          %s4113 = sand.u32 %s470, 1
          %s4114 = scalar_lea.vmem [#allocation7], %s4113
          %4115 = dma.done %s4112, 16
        $region120: #{vit_forward.1} parent=115 // pred_fallthru
          _
      $region116: #{vit_forward.1} parent=5 // pred_fallthru
        _
    $region6: #{vit_forward.1} parent=1 // loop_footer
      %s35 = sadd.s32 1, %s31
    $region7: #{vit_forward.1} parent=1 // loop_footer_branch
      %30 = sbr.rel target = $region3
    $region8: #{vit_forward.1} parent=1 // loop_exit
      _
    %4116 = vsyncpa [#allocation3], 1
    %s4117 = scalar_lea.sflag [#allocation3], 1
    %4118 = vsyncpa %s4117, 1
    %4119 = vsyncpa [#allocation6], 1
    %4120 = vsyncpa [#allocation4], 1
    %s4121 = scalar_lea.sflag [#allocation4], 1
    %4122 = vsyncpa %s4121, 1

</llo_original>
